<compile_context>
chip_gen: v5e
topology: v5e:2x2
jax: 0.10.0
libtpu: 0.0.40
codegen_flags: <defaults>
</compile_context>

<pallas_src>
import jax
import jax.numpy as jnp
from jax.experimental import pallas as pl
from jax.experimental.pallas import tpu as pltpu

GAMMA = 10.0
EPS = 1e-8


def _softplus(x):
    # numerically stable softplus = log(1 + exp(x))
    return jnp.log1p(jnp.exp(-jnp.abs(x))) + jnp.maximum(x, 0.0)


def _round_up(n, m):
    return ((n + m - 1) // m) * m


def _pad2(x, shape):
    return jnp.pad(x, [(0, t - s) for s, t in zip(x.shape, shape)])


def _make_kernel(d_model, tile_p, mxu_dtype):
    inv_sqrt_d = float(d_model) ** -0.5

    def kernel(r_ref, ii_ref, jj_ref, centers_ref, vecs_ref,
               w_in_ref, w1_ref, w2_ref, w3_ref, w4_ref, x_ref,
               out_ref, x_in_ref):
        p_tile = pl.program_id(0)
        n_tiles = pl.num_programs(0)

        # packed per-feature vectors (static ref-view slices, zero cost)
        s1 = vecs_ref[0:1, :]
        s2 = vecs_ref[1:2, :]
        s3 = vecs_ref[2:3, :]
        b4 = vecs_ref[3:4, :]

        @pl.when(p_tile == 0)
        def _init():
            # in_atom_wise: X_in = X @ W_in, computed once, kept in VMEM scratch.
            x_in_ref[...] = jnp.dot(x_ref[...].astype(mxu_dtype),
                                    w_in_ref[...].astype(mxu_dtype),
                                    preferred_element_type=jnp.float32)
            out_ref[...] = jnp.zeros_like(out_ref)

        def rmsnorm_act(h, scale):
            # RMSNorm exactly as the PyTorch module: x / (||x||/sqrt(D) + eps) * scale
            norm = jnp.sqrt(jnp.sum(h * h, axis=-1, keepdims=True))
            rms = norm * inv_sqrt_d
            inv = pl.reciprocal(rms + EPS, approx=False)  # approx=True -> EUP slot, tiny drift
            return _softplus(scale * (h * inv))

        # ---- slice this tile's pairs out of the resident full arrays ----------
        p0 = pl.multiple_of(p_tile * tile_p, tile_p)
        r = r_ref[pl.ds(p0, tile_p), :]              # (TP, 1)
        idx_j = jj_ref[pl.ds(p0, tile_p), :]         # (TP, 1)  sublane-major
        idx_i = ii_ref[:, pl.ds(p0, tile_p)]         # (1, TP)  lane-major

        # ---- radial basis functions -------------------------------- (TP, Kp)
        diff = r - centers_ref[...]
        rbf = jnp.exp(-GAMMA * diff * diff)

        # ---- filter-generating MLP (Linear -> RMSNorm -> softplus) x2  (TP, Dp)
        h1 = jnp.dot(rbf.astype(mxu_dtype), w1_ref[...].astype(mxu_dtype),
                     preferred_element_type=jnp.float32)
        a1 = rmsnorm_act(h1, s1)
        h2 = jnp.dot(a1.astype(mxu_dtype), w2_ref[...].astype(mxu_dtype),
                     preferred_element_type=jnp.float32)
        wij = rmsnorm_act(h2, s2)

        n_atoms = x_ref.shape[0]

        # ---- gather X_in[idx_j] via one-hot matmul (lhs contraction on last dim)
        iota_cols = jax.lax.broadcasted_iota(jnp.int32, (tile_p, n_atoms), 1)
        onehot_j = (idx_j == iota_cols).astype(mxu_dtype)           # (TP, A)
        x_j = jnp.dot(onehot_j, x_in_ref[...].astype(mxu_dtype),
                      preferred_element_type=jnp.float32)           # (TP, Dp)
        x_ij = x_j * wij

        # ---- scatter_add over idx_i: PRE-TRANSPOSED one-hot -> plain MXU dot
        iota_rows = jax.lax.broadcasted_iota(jnp.int32, (n_atoms, tile_p), 0)
        onehot_iT = (idx_i == iota_rows).astype(mxu_dtype)          # (A, TP)
        out_ref[...] += jnp.dot(onehot_iT, x_ij.astype(mxu_dtype),
                                preferred_element_type=jnp.float32)  # (A, Dp)

        # ---- out_atom_wise MLP + residual on the last pair tile ----------------
        @pl.when(p_tile == n_tiles - 1)
        def _finalize():
            xc = out_ref[...]
            h3 = jnp.dot(xc.astype(mxu_dtype), w3_ref[...].astype(mxu_dtype),
                         preferred_element_type=jnp.float32)
            a3 = rmsnorm_act(h3, s3)
            v = jnp.dot(a3.astype(mxu_dtype), w4_ref[...].astype(mxu_dtype),
                        preferred_element_type=jnp.float32) + b4
            out_ref[...] = x_ref[...] + v

    return kernel


def schnet_interaction_reg(X, R_distances, idx_i, idx_j, params, *,
                           tile_p=256, use_bf16_mxu=False):
    """X: (A, D) f32, R_distances: (P,) f32, idx_i/idx_j: (P,) int32.

    params = (w_in, centers, w1, s1, w2, s2, w3, s3, w4, b4)
    """
    w_in, centers, w1, s1, w2, s2, w3, s3, w4, b4 = params

    A, D = X.shape
    P = R_distances.shape[0]
    n_rbf = centers.shape[-1]
    f32 = jnp.float32

    # Clamp the pair tile: no bigger than the (128-rounded) pair count, never
    # below 128, always lane-aligned for in-kernel pl.ds slicing.
    tile_p = max(128, min(tile_p, _round_up(P, 128)))
    assert tile_p % 128 == 0, "tile_p must be a multiple of 128"

    # ---- lane-dense padding of the feature / rbf dims (math stays exact) -------
    Dp = _round_up(D, 128)
    Kp = _round_up(n_rbf, 128)
    Pp = _round_up(P, tile_p)
    n_tiles = Pp // tile_p

    X_p = _pad2(X.astype(f32), (A, Dp))
    w_in_p = _pad2(w_in.astype(f32), (Dp, Dp))
    centers_p = _pad2(centers.reshape(1, n_rbf).astype(f32), (1, Kp))
    w1_p = _pad2(w1.astype(f32), (Kp, Dp))
    w2_p = _pad2(w2.astype(f32), (Dp, Dp))
    w3_p = _pad2(w3.astype(f32), (Dp, Dp))
    w4_p = _pad2(w4.astype(f32), (Dp, Dp))

    # RMSNorm scales + out bias packed into one (4, Dp) constants block.
    vecs = jnp.zeros((4, Dp), f32)
    vecs = vecs.at[0, :D].set(s1.astype(f32))
    vecs = vecs.at[1, :D].set(s2.astype(f32))
    vecs = vecs.at[2, :D].set(s3.astype(f32))
    vecs = vecs.at[3, :D].set(b4.astype(f32))

    # Pad the pair axis; padded indices point to atom `A` (out of range) so their
    # one-hot rows are all-zero and they contribute nothing to gather or scatter.
    r_p = jnp.pad(R_distances.astype(f32), (0, Pp - P)).reshape(Pp, 1)
    ii_p = jnp.pad(idx_i.astype(jnp.int32), (0, Pp - P),
                   constant_values=A).reshape(1, Pp)
    jj_p = jnp.pad(idx_j.astype(jnp.int32), (0, Pp - P),
                   constant_values=A).reshape(Pp, 1)

    mxu_dtype = jnp.bfloat16 if use_bf16_mxu else jnp.float32
    kernel = _make_kernel(D, tile_p, mxu_dtype)

    def const(shape):
        # full-array, constant-index block: DMA'd once, resident across the grid
        return pl.BlockSpec(shape, lambda p: (0, 0))

    out_p = pl.pallas_call(
        kernel,
        out_shape=jax.ShapeDtypeStruct((A, Dp), jnp.float32),
        grid_spec=pltpu.PrefetchScalarGridSpec(
            num_scalar_prefetch=0,
            grid=(n_tiles,),
            in_specs=[
                const((Pp, 1)),      # R distances (full array, sliced in-kernel)
                const((1, Pp)),      # idx_i (lane-major for the transposed scatter)
                const((Pp, 1)),      # idx_j
                const((1, Kp)),      # rbf centers
                const((4, Dp)),      # packed [s1, s2, s3, b4]
                const((Dp, Dp)),     # W_in   (in_atom_wise)
                const((Kp, Dp)),     # W1     (filter MLP)
                const((Dp, Dp)),     # W2
                const((Dp, Dp)),     # W3     (out_atom_wise)
                const((Dp, Dp)),     # W4
                const((A, Dp)),      # X (original embeddings, for residual + X_in)
            ],
            out_specs=const((A, Dp)),                           # resident accumulator
            scratch_shapes=[pltpu.VMEM((A, Dp), jnp.float32)],  # X_in
        ),
        compiler_params=pltpu.CompilerParams(
            dimension_semantics=("arbitrary",)),                # reduction over pair tiles
    )(r_p, ii_p, jj_p, centers_p, vecs, w_in_p, w1_p, w2_p, w3_p, w4_p, X_p)

    return out_p[:, :D]


def reference(X, R, idx_i, idx_j, params):
    w_in, centers, w1, s1, w2, s2, w3, s3, w4, b4 = params
    D = X.shape[1]

    def blk(h, s):
        norm = jnp.sqrt(jnp.sum(h * h, axis=-1, keepdims=True))
        rms = norm / jnp.sqrt(float(D))
        return jax.nn.softplus(s * (h / (rms + EPS)))

    X_in = X @ w_in
    rbf = jnp.exp(-GAMMA * (R[:, None] - centers.reshape(1, -1)) ** 2)
    wij = blk(blk(rbf @ w1, s1) @ w2, s2)
    x_ij = X_in[idx_j] * wij
    xc = jax.ops.segment_sum(x_ij, idx_i, num_segments=X.shape[0])
    v = blk(xc @ w3, s3) @ w4 + b4
    return X + v


if __name__ == "__main__":
    n_atoms, emb_dim = 8, 32          # atom_embeddings_dim
    n_pairs, n_rbf = 200, 16          # ragged pair count (padded inside)
    rbf_min, rbf_max = 0.0, 5.0

    key = jax.random.PRNGKey(0)
    kx, kr, ki, kj, kin, kw1, kw2, kw3, kw4, kb4 = jax.random.split(key, 10)

    X = jax.random.normal(kx, (n_atoms, emb_dim), jnp.float32)
    R_distances = jax.random.uniform(kr, (n_pairs,), jnp.float32,
                                     minval=rbf_min, maxval=rbf_max)
    idx_i = jax.random.randint(ki, (n_pairs,), 0, n_atoms, jnp.int32)
    idx_j = jax.random.randint(kj, (n_pairs,), 0, n_atoms, jnp.int32)

    # deterministic synthetic parameters (shapes from the module's __init__)
    centers = jnp.linspace(rbf_min, rbf_max, n_rbf, dtype=jnp.float32)
    w_in = jax.random.normal(kin, (emb_dim, emb_dim), jnp.float32) * 0.1  # in_atom_wise
    w1 = jax.random.normal(kw1, (n_rbf, emb_dim), jnp.float32) * 0.1      # Linear(n_rbf, D, bias=False)
    s1 = jnp.ones((emb_dim,), jnp.float32)                                # RMSNorm(D).scale
    w2 = jax.random.normal(kw2, (emb_dim, emb_dim), jnp.float32) * 0.1    # Linear(D, D, bias=False)
    s2 = jnp.ones((emb_dim,), jnp.float32)
    w3 = jax.random.normal(kw3, (emb_dim, emb_dim), jnp.float32) * 0.1    # out_atom_wise Linear (no bias)
    s3 = jnp.ones((emb_dim,), jnp.float32)
    w4 = jax.random.normal(kw4, (emb_dim, emb_dim), jnp.float32) * 0.1    # out_atom_wise Linear (bias)
    b4 = jax.random.normal(kb4, (emb_dim,), jnp.float32) * 0.1
    params = (w_in, centers, w1, s1, w2, s2, w3, s3, w4, b4)

    out = schnet_interaction_reg(X, R_distances, idx_i, idx_j, params)
    out = jax.block_until_ready(out)

    ref = reference(X, R_distances, idx_i, idx_j, params)
    assert out.shape == (n_atoms, emb_dim)
    err = jnp.max(jnp.abs(out - ref))
    assert jnp.allclose(out, ref, atol=1e-3, rtol=1e-3), f"max abs err {err}"

    print("KERNEL_OK")
</pallas_src>

<mosaic_0001>
module attributes {stable_mosaic.version = 11 : i64} {
  func.func @kernel(%arg0: i32, %arg1: memref<256x1xf32, #tpu.memory_space<vmem>>, %arg2: memref<1x256xi32, #tpu.memory_space<vmem>>, %arg3: memref<256x1xi32, #tpu.memory_space<vmem>>, %arg4: memref<1x128xf32, #tpu.memory_space<vmem>>, %arg5: memref<4x128xf32, #tpu.memory_space<vmem>>, %arg6: memref<128x128xf32, #tpu.memory_space<vmem>>, %arg7: memref<128x128xf32, #tpu.memory_space<vmem>>, %arg8: memref<128x128xf32, #tpu.memory_space<vmem>>, %arg9: memref<128x128xf32, #tpu.memory_space<vmem>>, %arg10: memref<128x128xf32, #tpu.memory_space<vmem>>, %arg11: memref<8x128xf32, #tpu.memory_space<vmem>>, %arg12: memref<8x128xf32, #tpu.memory_space<vmem>>, %arg13: memref<8x128xf32, #tpu.memory_space<vmem>>) attributes {dimension_semantics = [#tpu.dimension_semantics<arbitrary>], iteration_bounds = array<i64: 1>, scalar_prefetch = 0 : i64, scratch_operands = 1 : i64, tpu.core_type = #tpu.core_type<tc>, window_params = [{pipeline_mode = #tpu.pipeline_mode<synchronous>, transform_indices = @transform_0, window_bounds = array<i64: 256, 1>}, {pipeline_mode = #tpu.pipeline_mode<synchronous>, transform_indices = @transform_1, window_bounds = array<i64: 1, 256>}, {pipeline_mode = #tpu.pipeline_mode<synchronous>, transform_indices = @transform_2, window_bounds = array<i64: 256, 1>}, {pipeline_mode = #tpu.pipeline_mode<synchronous>, transform_indices = @transform_3, window_bounds = array<i64: 1, 128>}, {pipeline_mode = #tpu.pipeline_mode<synchronous>, transform_indices = @transform_4, window_bounds = array<i64: 4, 128>}, {pipeline_mode = #tpu.pipeline_mode<synchronous>, transform_indices = @transform_5, window_bounds = array<i64: 128, 128>}, {pipeline_mode = #tpu.pipeline_mode<synchronous>, transform_indices = @transform_6, window_bounds = array<i64: 128, 128>}, {pipeline_mode = #tpu.pipeline_mode<synchronous>, transform_indices = @transform_7, window_bounds = array<i64: 128, 128>}, {pipeline_mode = #tpu.pipeline_mode<synchronous>, transform_indices = @transform_8, window_bounds = array<i64: 128, 128>}, {pipeline_mode = #tpu.pipeline_mode<synchronous>, transform_indices = @transform_9, window_bounds = array<i64: 128, 128>}, {pipeline_mode = #tpu.pipeline_mode<synchronous>, transform_indices = @transform_10, window_bounds = array<i64: 8, 128>}, {pipeline_mode = #tpu.pipeline_mode<synchronous>, transform_indices = @transform_11, window_bounds = array<i64: 8, 128>}]} {
    %c0 = arith.constant 0 : index
    %c0_0 = arith.constant 0 : index
    %0 = vector.load %arg5[%c0, %c0_0] : memref<4x128xf32, #tpu.memory_space<vmem>>, vector<1x128xf32>
    %c1 = arith.constant 1 : index
    %c0_1 = arith.constant 0 : index
    %1 = vector.load %arg5[%c1, %c0_1] : memref<4x128xf32, #tpu.memory_space<vmem>>, vector<1x128xf32>
    %c2 = arith.constant 2 : index
    %c0_2 = arith.constant 0 : index
    %2 = vector.load %arg5[%c2, %c0_2] : memref<4x128xf32, #tpu.memory_space<vmem>>, vector<1x128xf32>
    %c3 = arith.constant 3 : index
    %c0_3 = arith.constant 0 : index
    %3 = vector.load %arg5[%c3, %c0_3] : memref<4x128xf32, #tpu.memory_space<vmem>>, vector<1x128xf32>
    %c0_i32 = arith.constant 0 : i32
    %4 = arith.cmpi eq, %arg0, %c0_i32 : i32
    %5 = arith.extui %4 : i1 to i32
    %c0_i32_4 = arith.constant 0 : i32
    %6 = arith.cmpi ne, %5, %c0_i32_4 : i32
    scf.if %6 {
      %c0_36 = arith.constant 0 : index
      %c0_37 = arith.constant 0 : index
      %89 = vector.load %arg11[%c0_36, %c0_37] : memref<8x128xf32, #tpu.memory_space<vmem>>, vector<8x128xf32>
      %c0_38 = arith.constant 0 : index
      %c0_39 = arith.constant 0 : index
      %90 = vector.load %arg6[%c0_38, %c0_39] : memref<128x128xf32, #tpu.memory_space<vmem>>, vector<128x128xf32>
      %cst_40 = arith.constant dense<0.000000e+00> : vector<8x128xf32>
      %91 = tpu.matmul %89, %90, %cst_40 {dimension_numbers = #tpu.dot_dimension_numbers<[1], [0], [0], [1], [0, 0, 1, 1], [], []>} : vector<8x128xf32>, vector<128x128xf32>, vector<8x128xf32> -> vector<8x128xf32>
      %c0_41 = arith.constant 0 : index
      %c0_42 = arith.constant 0 : index
      %92 = vector.load %arg13[%c0_41, %c0_42] : memref<8x128xf32, #tpu.memory_space<vmem>>, vector<8x128xf32>
      tpu.vector_store %arg13[%c0_41, %c0_42], %91 {strides = array<i32>} : memref<8x128xf32, #tpu.memory_space<vmem>>, vector<8x128xf32>,
      %cst_43 = arith.constant 0.000000e+00 : f32
      %93 = vector.broadcast %cst_43 : f32 to vector<8x128xf32>
      %c0_44 = arith.constant 0 : index
      %c0_45 = arith.constant 0 : index
      %94 = vector.load %arg12[%c0_44, %c0_45] : memref<8x128xf32, #tpu.memory_space<vmem>>, vector<8x128xf32>
      tpu.vector_store %arg12[%c0_44, %c0_45], %93 {strides = array<i32>} : memref<8x128xf32, #tpu.memory_space<vmem>>, vector<8x128xf32>,
    } else {
    }
    %c256_i32 = arith.constant 256 : i32
    %7 = arith.muli %arg0, %c256_i32 : i32
    %8 = tpu.assume_multiple %7, 256 : i32
    %9 = arith.index_cast %8 : i32 to index
    %c0_5 = arith.constant 0 : index
    %10 = vector.load %arg1[%9, %c0_5] : memref<256x1xf32, #tpu.memory_space<vmem>>, vector<256x1xf32>
    %11 = arith.index_cast %8 : i32 to index
    %c0_6 = arith.constant 0 : index
    %12 = vector.load %arg3[%11, %c0_6] : memref<256x1xi32, #tpu.memory_space<vmem>>, vector<256x1xi32>
    %c0_7 = arith.constant 0 : index
    %13 = arith.index_cast %8 : i32 to index
    %14 = vector.load %arg2[%c0_7, %13] : memref<1x256xi32, #tpu.memory_space<vmem>>, vector<1x256xi32>
    %c0_8 = arith.constant 0 : index
    %c0_9 = arith.constant 0 : index
    %15 = vector.load %arg4[%c0_8, %c0_9] : memref<1x128xf32, #tpu.memory_space<vmem>>, vector<1x128xf32>
    %16 = vector.broadcast %10 : vector<256x1xf32> to vector<256x128xf32>
    %17 = vector.broadcast %15 : vector<1x128xf32> to vector<256x128xf32>
    %18 = arith.subf %16, %17 : vector<256x128xf32>
    %cst = arith.constant -1.000000e+01 : f32
    %19 = vector.broadcast %cst : f32 to vector<256x128xf32>
    %20 = arith.mulf %19, %18 : vector<256x128xf32>
    %21 = arith.mulf %20, %18 : vector<256x128xf32>
    %22 = math.exp %21 : vector<256x128xf32>
    %c0_10 = arith.constant 0 : index
    %c0_11 = arith.constant 0 : index
    %23 = vector.load %arg7[%c0_10, %c0_11] : memref<128x128xf32, #tpu.memory_space<vmem>>, vector<128x128xf32>
    %cst_12 = arith.constant dense<0.000000e+00> : vector<256x128xf32>
    %24 = tpu.matmul %22, %23, %cst_12 {dimension_numbers = #tpu.dot_dimension_numbers<[1], [0], [0], [1], [0, 0, 1, 1], [], []>} : vector<256x128xf32>, vector<128x128xf32>, vector<256x128xf32> -> vector<256x128xf32>
    %25 = arith.mulf %24, %24 : vector<256x128xf32>
    %cst_13 = arith.constant dense<0.000000e+00> : vector<256xf32>
    %26 = vector.multi_reduction <add>, %25, %cst_13 [1] : vector<256x128xf32> to vector<256xf32>
    %27 = vector.shape_cast %26 : vector<256xf32> to vector<256x1xf32>
    %28 = math.sqrt %27 : vector<256x1xf32>
    %cst_14 = arith.constant 0.176776692 : f32
    %29 = vector.broadcast %cst_14 : f32 to vector<256x1xf32>
    %30 = arith.mulf %28, %29 : vector<256x1xf32>
    %cst_15 = arith.constant 9.99999993E-9 : f32
    %31 = vector.broadcast %cst_15 : f32 to vector<256x1xf32>
    %32 = arith.addf %30, %31 : vector<256x1xf32>
    %33 = tpu.reciprocal %32 : vector<256x1xf32> -> vector<256x1xf32>
    %34 = vector.broadcast %33 : vector<256x1xf32> to vector<256x128xf32>
    %35 = arith.mulf %24, %34 : vector<256x128xf32>
    %36 = vector.broadcast %0 : vector<1x128xf32> to vector<256x128xf32>
    %37 = arith.mulf %36, %35 : vector<256x128xf32>
    %38 = math.absf %37 : vector<256x128xf32>
    %cst_16 = arith.constant 0.000000e+00 : f32
    %39 = vector.broadcast %cst_16 : f32 to vector<256x128xf32>
    %40 = arith.subf %39, %38 : vector<256x128xf32>
    %41 = math.exp %40 : vector<256x128xf32>
    %42 = math.log1p %41 : vector<256x128xf32>
    %cst_17 = arith.constant 0.000000e+00 : f32
    %43 = vector.broadcast %cst_17 : f32 to vector<256x128xf32>
    %44 = arith.maximumf %37, %43 : vector<256x128xf32>
    %45 = arith.addf %42, %44 : vector<256x128xf32>
    %c0_18 = arith.constant 0 : index
    %c0_19 = arith.constant 0 : index
    %46 = vector.load %arg8[%c0_18, %c0_19] : memref<128x128xf32, #tpu.memory_space<vmem>>, vector<128x128xf32>
    %cst_20 = arith.constant dense<0.000000e+00> : vector<256x128xf32>
    %47 = tpu.matmul %45, %46, %cst_20 {dimension_numbers = #tpu.dot_dimension_numbers<[1], [0], [0], [1], [0, 0, 1, 1], [], []>} : vector<256x128xf32>, vector<128x128xf32>, vector<256x128xf32> -> vector<256x128xf32>
    %48 = arith.mulf %47, %47 : vector<256x128xf32>
    %cst_21 = arith.constant dense<0.000000e+00> : vector<256xf32>
    %49 = vector.multi_reduction <add>, %48, %cst_21 [1] : vector<256x128xf32> to vector<256xf32>
    %50 = vector.shape_cast %49 : vector<256xf32> to vector<256x1xf32>
    %51 = math.sqrt %50 : vector<256x1xf32>
    %cst_22 = arith.constant 0.176776692 : f32
    %52 = vector.broadcast %cst_22 : f32 to vector<256x1xf32>
    %53 = arith.mulf %51, %52 : vector<256x1xf32>
    %cst_23 = arith.constant 9.99999993E-9 : f32
    %54 = vector.broadcast %cst_23 : f32 to vector<256x1xf32>
    %55 = arith.addf %53, %54 : vector<256x1xf32>
    %56 = tpu.reciprocal %55 : vector<256x1xf32> -> vector<256x1xf32>
    %57 = vector.broadcast %56 : vector<256x1xf32> to vector<256x128xf32>
    %58 = arith.mulf %47, %57 : vector<256x128xf32>
    %59 = vector.broadcast %1 : vector<1x128xf32> to vector<256x128xf32>
    %60 = arith.mulf %59, %58 : vector<256x128xf32>
    %61 = math.absf %60 : vector<256x128xf32>
    %cst_24 = arith.constant 0.000000e+00 : f32
    %62 = vector.broadcast %cst_24 : f32 to vector<256x128xf32>
    %63 = arith.subf %62, %61 : vector<256x128xf32>
    %64 = math.exp %63 : vector<256x128xf32>
    %65 = math.log1p %64 : vector<256x128xf32>
    %cst_25 = arith.constant 0.000000e+00 : f32
    %66 = vector.broadcast %cst_25 : f32 to vector<256x128xf32>
    %67 = arith.maximumf %60, %66 : vector<256x128xf32>
    %68 = arith.addf %65, %67 : vector<256x128xf32>
    %69 = tpu.iota {dimensions = array<i32: 1>} : vector<256x8xi32>
    %70 = vector.broadcast %12 : vector<256x1xi32> to vector<256x8xi32>
    %71 = arith.cmpi eq, %70, %69 : vector<256x8xi32>
    %72 = arith.extui %71 : vector<256x8xi1> to vector<256x8xi32>
    %73 = arith.sitofp %72 : vector<256x8xi32> to vector<256x8xf32>
    %c0_26 = arith.constant 0 : index
    %c0_27 = arith.constant 0 : index
    %74 = vector.load %arg13[%c0_26, %c0_27] : memref<8x128xf32, #tpu.memory_space<vmem>>, vector<8x128xf32>
    %cst_28 = arith.constant dense<0.000000e+00> : vector<256x128xf32>
    %75 = tpu.matmul %73, %74, %cst_28 {dimension_numbers = #tpu.dot_dimension_numbers<[1], [0], [0], [1], [0, 0, 1, 1], [], []>} : vector<256x8xf32>, vector<8x128xf32>, vector<256x128xf32> -> vector<256x128xf32>
    %76 = arith.mulf %75, %68 : vector<256x128xf32>
    %77 = tpu.iota {dimensions = array<i32: 0>} : vector<8x256xi32>
    %78 = vector.broadcast %14 : vector<1x256xi32> to vector<8x256xi32>
    %79 = arith.cmpi eq, %78, %77 : vector<8x256xi32>
    %80 = arith.extui %79 : vector<8x256xi1> to vector<8x256xi32>
    %81 = arith.sitofp %80 : vector<8x256xi32> to vector<8x256xf32>
    %c0_29 = arith.constant 0 : index
    %c0_30 = arith.constant 0 : index
    %82 = vector.load %arg12[%c0_29, %c0_30] : memref<8x128xf32, #tpu.memory_space<vmem>>, vector<8x128xf32>
    %cst_31 = arith.constant dense<0.000000e+00> : vector<8x128xf32>
    %83 = tpu.matmul %81, %76, %cst_31 {dimension_numbers = #tpu.dot_dimension_numbers<[1], [0], [0], [1], [0, 0, 1, 1], [], []>} : vector<8x256xf32>, vector<256x128xf32>, vector<8x128xf32> -> vector<8x128xf32>
    %84 = arith.addf %82, %83 : vector<8x128xf32>
    %c0_32 = arith.constant 0 : index
    %c0_33 = arith.constant 0 : index
    %85 = vector.load %arg12[%c0_32, %c0_33] : memref<8x128xf32, #tpu.memory_space<vmem>>, vector<8x128xf32>
    tpu.vector_store %arg12[%c0_32, %c0_33], %84 {strides = array<i32>} : memref<8x128xf32, #tpu.memory_space<vmem>>, vector<8x128xf32>,
    %c0_i32_34 = arith.constant 0 : i32
    %86 = arith.cmpi eq, %arg0, %c0_i32_34 : i32
    %87 = arith.extui %86 : i1 to i32
    %c0_i32_35 = arith.constant 0 : i32
    %88 = arith.cmpi ne, %87, %c0_i32_35 : i32
    scf.if %88 {
      %c0_36 = arith.constant 0 : index
      %c0_37 = arith.constant 0 : index
      %89 = vector.load %arg12[%c0_36, %c0_37] : memref<8x128xf32, #tpu.memory_space<vmem>>, vector<8x128xf32>
      %c0_38 = arith.constant 0 : index
      %c0_39 = arith.constant 0 : index
      %90 = vector.load %arg9[%c0_38, %c0_39] : memref<128x128xf32, #tpu.memory_space<vmem>>, vector<128x128xf32>
      %cst_40 = arith.constant dense<0.000000e+00> : vector<8x128xf32>
      %91 = tpu.matmul %89, %90, %cst_40 {dimension_numbers = #tpu.dot_dimension_numbers<[1], [0], [0], [1], [0, 0, 1, 1], [], []>} : vector<8x128xf32>, vector<128x128xf32>, vector<8x128xf32> -> vector<8x128xf32>
      %92 = arith.mulf %91, %91 : vector<8x128xf32>
      %cst_41 = arith.constant dense<0.000000e+00> : vector<8xf32>
      %93 = vector.multi_reduction <add>, %92, %cst_41 [1] : vector<8x128xf32> to vector<8xf32>
      %94 = vector.shape_cast %93 : vector<8xf32> to vector<8x1xf32>
      %95 = math.sqrt %94 : vector<8x1xf32>
      %cst_42 = arith.constant 0.176776692 : f32
      %96 = vector.broadcast %cst_42 : f32 to vector<8x1xf32>
      %97 = arith.mulf %95, %96 : vector<8x1xf32>
      %cst_43 = arith.constant 9.99999993E-9 : f32
      %98 = vector.broadcast %cst_43 : f32 to vector<8x1xf32>
      %99 = arith.addf %97, %98 : vector<8x1xf32>
      %100 = tpu.reciprocal %99 : vector<8x1xf32> -> vector<8x1xf32>
      %101 = vector.broadcast %100 : vector<8x1xf32> to vector<8x128xf32>
      %102 = arith.mulf %91, %101 : vector<8x128xf32>
      %103 = vector.broadcast %2 : vector<1x128xf32> to vector<8x128xf32>
      %104 = arith.mulf %103, %102 : vector<8x128xf32>
      %105 = math.absf %104 : vector<8x128xf32>
      %cst_44 = arith.constant 0.000000e+00 : f32
      %106 = vector.broadcast %cst_44 : f32 to vector<8x128xf32>
      %107 = arith.subf %106, %105 : vector<8x128xf32>
      %108 = math.exp %107 : vector<8x128xf32>
      %109 = math.log1p %108 : vector<8x128xf32>
      %cst_45 = arith.constant 0.000000e+00 : f32
      %110 = vector.broadcast %cst_45 : f32 to vector<8x128xf32>
      %111 = arith.maximumf %104, %110 : vector<8x128xf32>
      %112 = arith.addf %109, %111 : vector<8x128xf32>
      %c0_46 = arith.constant 0 : index
      %c0_47 = arith.constant 0 : index
      %113 = vector.load %arg10[%c0_46, %c0_47] : memref<128x128xf32, #tpu.memory_space<vmem>>, vector<128x128xf32>
      %cst_48 = arith.constant dense<0.000000e+00> : vector<8x128xf32>
      %114 = tpu.matmul %112, %113, %cst_48 {dimension_numbers = #tpu.dot_dimension_numbers<[1], [0], [0], [1], [0, 0, 1, 1], [], []>} : vector<8x128xf32>, vector<128x128xf32>, vector<8x128xf32> -> vector<8x128xf32>
      %115 = vector.broadcast %3 : vector<1x128xf32> to vector<8x128xf32>
      %116 = arith.addf %114, %115 : vector<8x128xf32>
      %c0_49 = arith.constant 0 : index
      %c0_50 = arith.constant 0 : index
      %117 = vector.load %arg11[%c0_49, %c0_50] : memref<8x128xf32, #tpu.memory_space<vmem>>, vector<8x128xf32>
      %118 = arith.addf %117, %116 : vector<8x128xf32>
      %c0_51 = arith.constant 0 : index
      %c0_52 = arith.constant 0 : index
      %119 = vector.load %arg12[%c0_51, %c0_52] : memref<8x128xf32, #tpu.memory_space<vmem>>, vector<8x128xf32>
      tpu.vector_store %arg12[%c0_51, %c0_52], %118 {strides = array<i32>} : memref<8x128xf32, #tpu.memory_space<vmem>>, vector<8x128xf32>,
    } else {
    }
    return
  }
  func.func @transform_0(%arg0: i32) -> (i32, i32) {
    %c0_i32 = arith.constant 0 : i32
    %c0_i32_0 = arith.constant 0 : i32
    %c0_i32_1 = arith.constant 0 : i32
    return %c0_i32, %c0_i32_0 : i32, i32
  }
  func.func @transform_1(%arg0: i32) -> (i32, i32) {
    %c0_i32 = arith.constant 0 : i32
    %c0_i32_0 = arith.constant 0 : i32
    %c0_i32_1 = arith.constant 0 : i32
    return %c0_i32, %c0_i32_0 : i32, i32
  }
  func.func @transform_2(%arg0: i32) -> (i32, i32) {
    %c0_i32 = arith.constant 0 : i32
    %c0_i32_0 = arith.constant 0 : i32
    %c0_i32_1 = arith.constant 0 : i32
    return %c0_i32, %c0_i32_0 : i32, i32
  }
  func.func @transform_3(%arg0: i32) -> (i32, i32) {
    %c0_i32 = arith.constant 0 : i32
    %c0_i32_0 = arith.constant 0 : i32
    %c0_i32_1 = arith.constant 0 : i32
    return %c0_i32, %c0_i32_0 : i32, i32
  }
  func.func @transform_4(%arg0: i32) -> (i32, i32) {
    %c0_i32 = arith.constant 0 : i32
    %c0_i32_0 = arith.constant 0 : i32
    %c0_i32_1 = arith.constant 0 : i32
    return %c0_i32, %c0_i32_0 : i32, i32
  }
  func.func @transform_5(%arg0: i32) -> (i32, i32) {
    %c0_i32 = arith.constant 0 : i32
    %c0_i32_0 = arith.constant 0 : i32
    %c0_i32_1 = arith.constant 0 : i32
    return %c0_i32, %c0_i32_0 : i32, i32
  }
  func.func @transform_6(%arg0: i32) -> (i32, i32) {
    %c0_i32 = arith.constant 0 : i32
    %c0_i32_0 = arith.constant 0 : i32
    %c0_i32_1 = arith.constant 0 : i32
    return %c0_i32, %c0_i32_0 : i32, i32
  }
  func.func @transform_7(%arg0: i32) -> (i32, i32) {
    %c0_i32 = arith.constant 0 : i32
    %c0_i32_0 = arith.constant 0 : i32
    %c0_i32_1 = arith.constant 0 : i32
    return %c0_i32, %c0_i32_0 : i32, i32
  }
  func.func @transform_8(%arg0: i32) -> (i32, i32) {
    %c0_i32 = arith.constant 0 : i32
    %c0_i32_0 = arith.constant 0 : i32
    %c0_i32_1 = arith.constant 0 : i32
    return %c0_i32, %c0_i32_0 : i32, i32
  }
  func.func @transform_9(%arg0: i32) -> (i32, i32) {
    %c0_i32 = arith.constant 0 : i32
    %c0_i32_0 = arith.constant 0 : i32
    %c0_i32_1 = arith.constant 0 : i32
    return %c0_i32, %c0_i32_0 : i32, i32
  }
  func.func @transform_10(%arg0: i32) -> (i32, i32) {
    %c0_i32 = arith.constant 0 : i32
    %c0_i32_0 = arith.constant 0 : i32
    %c0_i32_1 = arith.constant 0 : i32
    return %c0_i32, %c0_i32_0 : i32, i32
  }
  func.func @transform_11(%arg0: i32) -> (i32, i32) {
    %c0_i32 = arith.constant 0 : i32
    %c0_i32_0 = arith.constant 0 : i32
    %c0_i32_1 = arith.constant 0 : i32
    return %c0_i32, %c0_i32_0 : i32, i32
  }
}

</mosaic_0001>

<llo_original>
// kernel: tpu_custom_call.1
$region0: #{tpu_custom_call.1}
  #allocation0 [shape = 'u32[]', space=smem, size = 0x4, offset = 0x4, fixed_abs, tag = 'smem constant byte address 0x4 - core index']
  #allocation1 [shape = 'u32[72,128]{1,0:T(1,128)}', space=vmem, size = 0x9000, scoped, tag = 'internal scratch']
  #allocation2 [shape = 'f32[8,128]{1,0:T(8,128)}', space=vmem, size = 0x1000, scoped, tag = 'scratch operand']
  %s0 = inlined_call_operand.vmem [shape: f32[256,1], index: 0, kind: input, shape index: {}]
  %s1 = inlined_call_operand.vmem [shape: s32[1,256], index: 1, kind: input, shape index: {}]
  %s2 = inlined_call_operand.vmem [shape: s32[256,1], index: 2, kind: input, shape index: {}]
  %s3 = inlined_call_operand.hbm [shape: f32[1,128], index: 3, kind: input, shape index: {}]
  %s4 = inlined_call_operand.hbm [shape: f32[4,128], index: 4, kind: input, shape index: {}]
  %s5 = inlined_call_operand.vmem [shape: f32[128,128], index: 5, kind: input, shape index: {}]
  %s6 = inlined_call_operand.vmem [shape: f32[128,128], index: 6, kind: input, shape index: {}]
  %s7 = inlined_call_operand.vmem [shape: f32[128,128], index: 7, kind: input, shape index: {}]
  %s8 = inlined_call_operand.vmem [shape: f32[128,128], index: 8, kind: input, shape index: {}]
  %s9 = inlined_call_operand.hbm [shape: f32[128,128], index: 9, kind: input, shape index: {}]
  %s10 = inlined_call_operand.hbm [shape: f32[8,128], index: 10, kind: input, shape index: {}]
  %s11 = inlined_call_operand.hbm [shape: f32[8,128], index: 11, kind: output, shape index: {}]
  %s12 = sld [smem:[#allocation0]]
  $region78: #{tpu_custom_call.1} parent=0
    _
  %s14 = ssub.s32 1, %s12
  %s15 = scalar_select 0, %s14, %s12
  $region1: #{tpu_custom_call.1} parent=0
    #allocation3 [shape = 'u8[512]{0}', space=vmem, size = 0x400, scoped, tag = 'input window, operand 3, single buffered']
    #allocation4 [shape = 's32[1]{0}', space=sflag, size = 0x4, scoped, tag = 'scoped memory for tpu_custom_call.1']
    #allocation5 [shape = 's32[1]{0}', space=sflag, size = 0x4, scoped, tag = 'scoped memory for tpu_custom_call.1']
    #allocation6 [shape = 'u8[2048]{0}', space=vmem, size = 0x800, scoped, tag = 'input window, operand 4, single buffered']
    #allocation7 [shape = 's32[1]{0}', space=sflag, size = 0x4, scoped, tag = 'scoped memory for tpu_custom_call.1']
    #allocation8 [shape = 'u8[65536]{0}', space=vmem, size = 0x10000, scoped, tag = 'input window, operand 9, single buffered']
    #allocation9 [shape = 'u8[4096]{0}', space=vmem, size = 0x1000, scoped, tag = 'input window, operand 10, single buffered']
    #allocation10 [shape = 's32[1]{0}', space=sflag, size = 0x4, scoped, tag = 'scoped memory for tpu_custom_call.1']
    #allocation11 [shape = 'u8[4096]{0}', space=vmem, size = 0x1000, scoped, tag = 'output window, operand 0, single buffered']
    %16 = vsyncpa [#allocation4], 0
    %17 = vsyncpa [#allocation7], 0
    %18 = vsyncpa [#allocation10], 0
    %19 = vsyncpa [#allocation5], 0
    // Predicated region
    $region2: #{tpu_custom_call.1} parent=1 // pred_check
      _
    $region3: #{tpu_custom_call.1} parent=1 // pred_check_branch
      %21 = sbr.rel (0) target = $region5
    $region4: #{tpu_custom_call.1} parent=1 // pred_region
      _
    $region5: #{tpu_custom_call.1} parent=1 // pred_fallthru
      _
    // Predicated region
    $region6: #{tpu_custom_call.1} parent=1 // pred_check
      _
    $region7: #{tpu_custom_call.1} parent=1 // pred_check_branch
      %23 = sbr.rel (0) target = $region9
    $region8: #{tpu_custom_call.1} parent=1 // pred_region
      _
    $region9: #{tpu_custom_call.1} parent=1 // pred_fallthru
      _
    // Predicated region
    $region10: #{tpu_custom_call.1} parent=1 // pred_check
      _
    $region11: #{tpu_custom_call.1} parent=1 // pred_check_branch
      %25 = sbr.rel (0) target = $region13
    $region12: #{tpu_custom_call.1} parent=1 // pred_region
      _
    $region13: #{tpu_custom_call.1} parent=1 // pred_fallthru
      _
    // Predicated region
    $region14: #{tpu_custom_call.1} parent=1 // pred_check
      _
    $region15: #{tpu_custom_call.1} parent=1 // pred_check_branch
      %27 = sbr.rel (0) target = $region17
    $region16: #{tpu_custom_call.1} parent=1 // pred_region
      %29 = vsyncadd [#allocation4], 0
      %s31 = sshll.u32 %s3, 4
      %s32 = int_to_ptr.hbm [resolvable:$true] %s31
      %s33 = sshll.u32 [#allocation3], 4
      %s34 = int_to_ptr.vmem [resolvable:$true] %s33
      %36 = dma.hbm_to_vmem [thread:$0]  %s32, 16, %s34, [#allocation4]
    $region17: #{tpu_custom_call.1} parent=1 // pred_fallthru
      _
    // Predicated region
    $region18: #{tpu_custom_call.1} parent=1 // pred_check
      _
    $region19: #{tpu_custom_call.1} parent=1 // pred_check_branch
      %38 = sbr.rel (0) target = $region21
    $region20: #{tpu_custom_call.1} parent=1 // pred_region
      %40 = vsyncadd [#allocation7], 0
      %s42 = sshll.u32 %s4, 4
      %s43 = int_to_ptr.hbm [resolvable:$true] %s42
      %s44 = sshll.u32 [#allocation6], 4
      %s45 = int_to_ptr.vmem [resolvable:$true] %s44
      %47 = dma.hbm_to_vmem [thread:$0]  %s43, 64, %s45, [#allocation7]
    $region21: #{tpu_custom_call.1} parent=1 // pred_fallthru
      _
    // Predicated region
    $region22: #{tpu_custom_call.1} parent=1 // pred_check
      _
    $region23: #{tpu_custom_call.1} parent=1 // pred_check_branch
      %49 = sbr.rel (0) target = $region25
    $region24: #{tpu_custom_call.1} parent=1 // pred_region
      _
    $region25: #{tpu_custom_call.1} parent=1 // pred_fallthru
      _
    // Predicated region
    $region26: #{tpu_custom_call.1} parent=1 // pred_check
      _
    $region27: #{tpu_custom_call.1} parent=1 // pred_check_branch
      %51 = sbr.rel (0) target = $region29
    $region28: #{tpu_custom_call.1} parent=1 // pred_region
      _
    $region29: #{tpu_custom_call.1} parent=1 // pred_fallthru
      _
    // Predicated region
    $region30: #{tpu_custom_call.1} parent=1 // pred_check
      _
    $region31: #{tpu_custom_call.1} parent=1 // pred_check_branch
      %53 = sbr.rel (0) target = $region33
    $region32: #{tpu_custom_call.1} parent=1 // pred_region
      _
    $region33: #{tpu_custom_call.1} parent=1 // pred_fallthru
      _
    // Predicated region
    $region34: #{tpu_custom_call.1} parent=1 // pred_check
      _
    $region35: #{tpu_custom_call.1} parent=1 // pred_check_branch
      %55 = sbr.rel (0) target = $region37
    $region36: #{tpu_custom_call.1} parent=1 // pred_region
      _
    $region37: #{tpu_custom_call.1} parent=1 // pred_fallthru
      _
    // Predicated region
    $region38: #{tpu_custom_call.1} parent=1 // pred_check
      _
    $region39: #{tpu_custom_call.1} parent=1 // pred_check_branch
      %57 = sbr.rel (0) target = $region41
    $region40: #{tpu_custom_call.1} parent=1 // pred_region
      %59 = vsyncadd [#allocation7], 0
      %s60 = sshll.u32 %s9, 4
      %s61 = int_to_ptr.hbm [resolvable:$true] %s60
      %s62 = sshll.u32 [#allocation8], 4
      %s63 = int_to_ptr.vmem [resolvable:$true] %s62
      %68 = dma.hbm_to_vmem [thread:$0]  %s61, 2048, %s63, [#allocation7], 128, 128, 8
    $region41: #{tpu_custom_call.1} parent=1 // pred_fallthru
      _
    // Predicated region
    $region42: #{tpu_custom_call.1} parent=1 // pred_check
      _
    $region43: #{tpu_custom_call.1} parent=1 // pred_check_branch
      %70 = sbr.rel (0) target = $region45
    $region44: #{tpu_custom_call.1} parent=1 // pred_region
      %72 = vsyncadd [#allocation10], 0
      %s74 = sshll.u32 %s10, 4
      %s75 = int_to_ptr.hbm [resolvable:$true] %s74
      %s76 = sshll.u32 [#allocation9], 4
      %s77 = int_to_ptr.vmem [resolvable:$true] %s76
      %79 = dma.hbm_to_vmem [thread:$0]  %s75, 128, %s77, [#allocation10]
    $region45: #{tpu_custom_call.1} parent=1 // pred_fallthru
      _
    // Predicated region
    $region46: #{tpu_custom_call.1} parent=1 // pred_check
      _
    $region47: #{tpu_custom_call.1} parent=1 // pred_check_branch
      %81 = sbr.rel (0) target = $region49
    $region48: #{tpu_custom_call.1} parent=1 // pred_region
      %83 = dma.done [#allocation4], 16
    $region49: #{tpu_custom_call.1} parent=1 // pred_fallthru
      _
    // Predicated region
    $region50: #{tpu_custom_call.1} parent=1 // pred_check
      _
    $region51: #{tpu_custom_call.1} parent=1 // pred_check_branch
      %85 = sbr.rel (0) target = $region53
    $region52: #{tpu_custom_call.1} parent=1 // pred_region
      %87 = dma.done [#allocation7], 64
    $region53: #{tpu_custom_call.1} parent=1 // pred_fallthru
      _
    // Predicated region
    $region54: #{tpu_custom_call.1} parent=1 // pred_check
      _
    $region55: #{tpu_custom_call.1} parent=1 // pred_check_branch
      %89 = sbr.rel (0) target = $region57
    $region56: #{tpu_custom_call.1} parent=1 // pred_region
      %91 = dma.done [#allocation7], 2048
    $region57: #{tpu_custom_call.1} parent=1 // pred_fallthru
      _
    // Predicated region
    $region58: #{tpu_custom_call.1} parent=1 // pred_check
      _
    $region59: #{tpu_custom_call.1} parent=1 // pred_check_branch
      %93 = sbr.rel (0) target = $region61
    $region60: #{tpu_custom_call.1} parent=1 // pred_region
      %95 = dma.done [#allocation10], 128
    $region61: #{tpu_custom_call.1} parent=1 // pred_fallthru
      _
    %v96 = vld [vmem:[#allocation6] sm:$0x1]
    %v97 = vld [vmem:[#allocation6 + $0x1] sm:$0x1]
    %v98 = vld [vmem:[#allocation6 + $0x2] sm:$0x1]
    %v99 = vld [vmem:[#allocation6 + $0x3] sm:$0x1]
    %p100 = scmp.eq.s32.totalorder 0, 0
    // Predicated region
    $region62: #{tpu_custom_call.1} parent=1 // pred_check
      %p101 = pneg %p100
    $region63: #{tpu_custom_call.1} parent=1 // pred_check_branch
      %103 = sbr.rel (%p101) target = $region65
    $region64: #{tpu_custom_call.1} parent=1 // pred_region
      %v104 = vld [vmem:[#allocation9] sm:$0xff]
      %v105 = vld [vmem:[%s5] sm:$0xff]
      %v106 = vld [vmem:[%s5 + $0x8] sm:$0xff]
      %v107 = vld [vmem:[%s5 + $0x10] sm:$0xff]
      %v108 = vld [vmem:[%s5 + $0x18] sm:$0xff]
      %v109 = vld [vmem:[%s5 + $0x20] sm:$0xff]
      %v110 = vld [vmem:[%s5 + $0x28] sm:$0xff]
      %v111 = vld [vmem:[%s5 + $0x30] sm:$0xff]
      %v112 = vld [vmem:[%s5 + $0x38] sm:$0xff]
      %v113 = vld [vmem:[%s5 + $0x40] sm:$0xff]
      %v114 = vld [vmem:[%s5 + $0x48] sm:$0xff]
      %v115 = vld [vmem:[%s5 + $0x50] sm:$0xff]
      %v116 = vld [vmem:[%s5 + $0x58] sm:$0xff]
      %v117 = vld [vmem:[%s5 + $0x60] sm:$0xff]
      %v118 = vld [vmem:[%s5 + $0x68] sm:$0xff]
      %v119 = vld [vmem:[%s5 + $0x70] sm:$0xff]
      %v120 = vld [vmem:[%s5 + $0x78] sm:$0xff]
      %121 = vmatpush.msra.mxu0 %v120
      %122 = vmatpush.msra.mxu0 %v119
      %123 = vmatpush.msra.mxu0 %v118
      %124 = vmatpush.msra.mxu0 %v117
      %125 = vmatpush.msra.mxu0 %v116
      %126 = vmatpush.msra.mxu0 %v115
      %127 = vmatpush.msra.mxu0 %v114
      %128 = vmatpush.msra.mxu0 %v113
      %129 = vmatpush.msra.mxu0 %v112
      %130 = vmatpush.msra.mxu0 %v111
      %131 = vmatpush.msra.mxu0 %v110
      %132 = vmatpush.msra.mxu0 %v109
      %133 = vmatpush.msra.mxu0 %v108
      %134 = vmatpush.msra.mxu0 %v107
      %135 = vmatpush.msra.mxu0 %v106
      %136 = vmatpush.msra.mxu0 %v105
      %137 = vmatmul.f32.gmra.mxu0 %v104
      %v138 = vpop.f32.mrf.mxu0
      %v139 = vadd.f32 0.0, %v138
      %140 = vdwg.mxu0
      %141 = vst [vmem:[#allocation2] sm:$0xff] %v139
      %142 = vst [vmem:[#allocation11] sm:$0xff] 0.0
    $region65: #{tpu_custom_call.1} parent=1 // pred_fallthru
      _
    %s143 = smul.u32 0, 256
    %s144 = scalar_lea.vmem %s0, %s143
    %v145 = vld [vmem:[%s144] sm:$0xff]
    %v146 = vld [vmem:[%s144 + $0x8] sm:$0xff]
    %v147 = vld [vmem:[%s144 + $0x10] sm:$0xff]
    %v148 = vld [vmem:[%s144 + $0x18] sm:$0xff]
    %v149 = vld [vmem:[%s144 + $0x20] sm:$0xff]
    %v150 = vld [vmem:[%s144 + $0x28] sm:$0xff]
    %v151 = vld [vmem:[%s144 + $0x30] sm:$0xff]
    %v152 = vld [vmem:[%s144 + $0x38] sm:$0xff]
    %v153 = vld [vmem:[%s144 + $0x40] sm:$0xff]
    %v154 = vld [vmem:[%s144 + $0x48] sm:$0xff]
    %v155 = vld [vmem:[%s144 + $0x50] sm:$0xff]
    %v156 = vld [vmem:[%s144 + $0x58] sm:$0xff]
    %v157 = vld [vmem:[%s144 + $0x60] sm:$0xff]
    %v158 = vld [vmem:[%s144 + $0x68] sm:$0xff]
    %v159 = vld [vmem:[%s144 + $0x70] sm:$0xff]
    %v160 = vld [vmem:[%s144 + $0x78] sm:$0xff]
    %v161 = vld [vmem:[%s144 + $0x80] sm:$0xff]
    %v162 = vld [vmem:[%s144 + $0x88] sm:$0xff]
    %v163 = vld [vmem:[%s144 + $0x90] sm:$0xff]
    %v164 = vld [vmem:[%s144 + $0x98] sm:$0xff]
    %v165 = vld [vmem:[%s144 + $0xa0] sm:$0xff]
    %v166 = vld [vmem:[%s144 + $0xa8] sm:$0xff]
    %v167 = vld [vmem:[%s144 + $0xb0] sm:$0xff]
    %v168 = vld [vmem:[%s144 + $0xb8] sm:$0xff]
    %v169 = vld [vmem:[%s144 + $0xc0] sm:$0xff]
    %v170 = vld [vmem:[%s144 + $0xc8] sm:$0xff]
    %v171 = vld [vmem:[%s144 + $0xd0] sm:$0xff]
    %v172 = vld [vmem:[%s144 + $0xd8] sm:$0xff]
    %v173 = vld [vmem:[%s144 + $0xe0] sm:$0xff]
    %v174 = vld [vmem:[%s144 + $0xe8] sm:$0xff]
    %v175 = vld [vmem:[%s144 + $0xf0] sm:$0xff]
    %v176 = vld [vmem:[%s144 + $0xf8] sm:$0xff]
    %s177 = scalar_lea.vmem %s2, %s143
    %v178 = vld [vmem:[%s177] sm:$0xff]
    %v179 = vld [vmem:[%s177 + $0x8] sm:$0xff]
    %v180 = vld [vmem:[%s177 + $0x10] sm:$0xff]
    %v181 = vld [vmem:[%s177 + $0x18] sm:$0xff]
    %v182 = vld [vmem:[%s177 + $0x20] sm:$0xff]
    %v183 = vld [vmem:[%s177 + $0x28] sm:$0xff]
    %v184 = vld [vmem:[%s177 + $0x30] sm:$0xff]
    %v185 = vld [vmem:[%s177 + $0x38] sm:$0xff]
    %v186 = vld [vmem:[%s177 + $0x40] sm:$0xff]
    %v187 = vld [vmem:[%s177 + $0x48] sm:$0xff]
    %v188 = vld [vmem:[%s177 + $0x50] sm:$0xff]
    %v189 = vld [vmem:[%s177 + $0x58] sm:$0xff]
    %v190 = vld [vmem:[%s177 + $0x60] sm:$0xff]
    %v191 = vld [vmem:[%s177 + $0x68] sm:$0xff]
    %v192 = vld [vmem:[%s177 + $0x70] sm:$0xff]
    %v193 = vld [vmem:[%s177 + $0x78] sm:$0xff]
    %v194 = vld [vmem:[%s177 + $0x80] sm:$0xff]
    %v195 = vld [vmem:[%s177 + $0x88] sm:$0xff]
    %v196 = vld [vmem:[%s177 + $0x90] sm:$0xff]
    %v197 = vld [vmem:[%s177 + $0x98] sm:$0xff]
    %v198 = vld [vmem:[%s177 + $0xa0] sm:$0xff]
    %v199 = vld [vmem:[%s177 + $0xa8] sm:$0xff]
    %v200 = vld [vmem:[%s177 + $0xb0] sm:$0xff]
    %v201 = vld [vmem:[%s177 + $0xb8] sm:$0xff]
    %v202 = vld [vmem:[%s177 + $0xc0] sm:$0xff]
    %v203 = vld [vmem:[%s177 + $0xc8] sm:$0xff]
    %v204 = vld [vmem:[%s177 + $0xd0] sm:$0xff]
    %v205 = vld [vmem:[%s177 + $0xd8] sm:$0xff]
    %v206 = vld [vmem:[%s177 + $0xe0] sm:$0xff]
    %v207 = vld [vmem:[%s177 + $0xe8] sm:$0xff]
    %v208 = vld [vmem:[%s177 + $0xf0] sm:$0xff]
    %v209 = vld [vmem:[%s177 + $0xf8] sm:$0xff]
    %s210 = sshra.s32 %s143, 7
    %s211 = sand.u32 %s143, 127
    %s212 = scalar_lea.vmem %s1, %s210
    %v213 = vld [vmem:[%s212] sm:$0x3]
    %v214 = vld [vmem:[#allocation3] sm:$0x1]
    %216 = vset.pattern.permute.xlu0 0
    %217 = vperm.xlu0 %216, %v145
    %v218 = vpop.permute.xlu0 %217
    %221 = vset.pattern.permute.xlu0 0
    %222 = vperm.xlu0 %221, %v146
    %v223 = vpop.permute.xlu0 %222
    %226 = vset.pattern.permute.xlu0 0
    %227 = vperm.xlu0 %226, %v147
    %v228 = vpop.permute.xlu0 %227
    %231 = vset.pattern.permute.xlu0 0
    %232 = vperm.xlu0 %231, %v148
    %v233 = vpop.permute.xlu0 %232
    %236 = vset.pattern.permute.xlu0 0
    %237 = vperm.xlu0 %236, %v149
    %v238 = vpop.permute.xlu0 %237
    %241 = vset.pattern.permute.xlu0 0
    %242 = vperm.xlu0 %241, %v150
    %v243 = vpop.permute.xlu0 %242
    %246 = vset.pattern.permute.xlu0 0
    %247 = vperm.xlu0 %246, %v151
    %v248 = vpop.permute.xlu0 %247
    %251 = vset.pattern.permute.xlu0 0
    %252 = vperm.xlu0 %251, %v152
    %v253 = vpop.permute.xlu0 %252
    %256 = vset.pattern.permute.xlu0 0
    %257 = vperm.xlu0 %256, %v153
    %v258 = vpop.permute.xlu0 %257
    %261 = vset.pattern.permute.xlu0 0
    %262 = vperm.xlu0 %261, %v154
    %v263 = vpop.permute.xlu0 %262
    %266 = vset.pattern.permute.xlu0 0
    %267 = vperm.xlu0 %266, %v155
    %v268 = vpop.permute.xlu0 %267
    %271 = vset.pattern.permute.xlu0 0
    %272 = vperm.xlu0 %271, %v156
    %v273 = vpop.permute.xlu0 %272
    %276 = vset.pattern.permute.xlu0 0
    %277 = vperm.xlu0 %276, %v157
    %v278 = vpop.permute.xlu0 %277
    %281 = vset.pattern.permute.xlu0 0
    %282 = vperm.xlu0 %281, %v158
    %v283 = vpop.permute.xlu0 %282
    %286 = vset.pattern.permute.xlu0 0
    %287 = vperm.xlu0 %286, %v159
    %v288 = vpop.permute.xlu0 %287
    %291 = vset.pattern.permute.xlu0 0
    %292 = vperm.xlu0 %291, %v160
    %v293 = vpop.permute.xlu0 %292
    %296 = vset.pattern.permute.xlu0 0
    %297 = vperm.xlu0 %296, %v161
    %v298 = vpop.permute.xlu0 %297
    %301 = vset.pattern.permute.xlu0 0
    %302 = vperm.xlu0 %301, %v162
    %v303 = vpop.permute.xlu0 %302
    %306 = vset.pattern.permute.xlu0 0
    %307 = vperm.xlu0 %306, %v163
    %v308 = vpop.permute.xlu0 %307
    %311 = vset.pattern.permute.xlu0 0
    %312 = vperm.xlu0 %311, %v164
    %v313 = vpop.permute.xlu0 %312
    %316 = vset.pattern.permute.xlu0 0
    %317 = vperm.xlu0 %316, %v165
    %v318 = vpop.permute.xlu0 %317
    %321 = vset.pattern.permute.xlu0 0
    %322 = vperm.xlu0 %321, %v166
    %v323 = vpop.permute.xlu0 %322
    %326 = vset.pattern.permute.xlu0 0
    %327 = vperm.xlu0 %326, %v167
    %v328 = vpop.permute.xlu0 %327
    %331 = vset.pattern.permute.xlu0 0
    %332 = vperm.xlu0 %331, %v168
    %v333 = vpop.permute.xlu0 %332
    %336 = vset.pattern.permute.xlu0 0
    %337 = vperm.xlu0 %336, %v169
    %v338 = vpop.permute.xlu0 %337
    %341 = vset.pattern.permute.xlu0 0
    %342 = vperm.xlu0 %341, %v170
    %v343 = vpop.permute.xlu0 %342
    %346 = vset.pattern.permute.xlu0 0
    %347 = vperm.xlu0 %346, %v171
    %v348 = vpop.permute.xlu0 %347
    %351 = vset.pattern.permute.xlu0 0
    %352 = vperm.xlu0 %351, %v172
    %v353 = vpop.permute.xlu0 %352
    %356 = vset.pattern.permute.xlu0 0
    %357 = vperm.xlu0 %356, %v173
    %v358 = vpop.permute.xlu0 %357
    %361 = vset.pattern.permute.xlu0 0
    %362 = vperm.xlu0 %361, %v174
    %v363 = vpop.permute.xlu0 %362
    %366 = vset.pattern.permute.xlu0 0
    %367 = vperm.xlu0 %366, %v175
    %v368 = vpop.permute.xlu0 %367
    %371 = vset.pattern.permute.xlu0 0
    %372 = vperm.xlu0 %371, %v176
    %v373 = vpop.permute.xlu0 %372
    %v376 = vperm.slane %v214, 0
    %v378 = vsub.f32 %v218, %v376
    %v379 = vsub.f32 %v223, %v376
    %v380 = vsub.f32 %v228, %v376
    %v381 = vsub.f32 %v233, %v376
    %v382 = vsub.f32 %v238, %v376
    %v383 = vsub.f32 %v243, %v376
    %v384 = vsub.f32 %v248, %v376
    %v385 = vsub.f32 %v253, %v376
    %v386 = vsub.f32 %v258, %v376
    %v387 = vsub.f32 %v263, %v376
    %v388 = vsub.f32 %v268, %v376
    %v389 = vsub.f32 %v273, %v376
    %v390 = vsub.f32 %v278, %v376
    %v391 = vsub.f32 %v283, %v376
    %v392 = vsub.f32 %v288, %v376
    %v393 = vsub.f32 %v293, %v376
    %v394 = vsub.f32 %v298, %v376
    %v395 = vsub.f32 %v303, %v376
    %v396 = vsub.f32 %v308, %v376
    %v397 = vsub.f32 %v313, %v376
    %v398 = vsub.f32 %v318, %v376
    %v399 = vsub.f32 %v323, %v376
    %v400 = vsub.f32 %v328, %v376
    %v401 = vsub.f32 %v333, %v376
    %v402 = vsub.f32 %v338, %v376
    %v403 = vsub.f32 %v343, %v376
    %v404 = vsub.f32 %v348, %v376
    %v405 = vsub.f32 %v353, %v376
    %v406 = vsub.f32 %v358, %v376
    %v407 = vsub.f32 %v363, %v376
    %v408 = vsub.f32 %v368, %v376
    %v409 = vsub.f32 %v373, %v376
    %v410 = vmul.f32 %v378, -10.0
    %v411 = vmul.f32 %v379, -10.0
    %v412 = vmul.f32 %v380, -10.0
    %v413 = vmul.f32 %v381, -10.0
    %v414 = vmul.f32 %v382, -10.0
    %v415 = vmul.f32 %v383, -10.0
    %v416 = vmul.f32 %v384, -10.0
    %v417 = vmul.f32 %v385, -10.0
    %v418 = vmul.f32 %v386, -10.0
    %v419 = vmul.f32 %v387, -10.0
    %v420 = vmul.f32 %v388, -10.0
    %v421 = vmul.f32 %v389, -10.0
    %v422 = vmul.f32 %v390, -10.0
    %v423 = vmul.f32 %v391, -10.0
    %v424 = vmul.f32 %v392, -10.0
    %v425 = vmul.f32 %v393, -10.0
    %v426 = vmul.f32 %v394, -10.0
    %v427 = vmul.f32 %v395, -10.0
    %v428 = vmul.f32 %v396, -10.0
    %v429 = vmul.f32 %v397, -10.0
    %v430 = vmul.f32 %v398, -10.0
    %v431 = vmul.f32 %v399, -10.0
    %v432 = vmul.f32 %v400, -10.0
    %v433 = vmul.f32 %v401, -10.0
    %v434 = vmul.f32 %v402, -10.0
    %v435 = vmul.f32 %v403, -10.0
    %v436 = vmul.f32 %v404, -10.0
    %v437 = vmul.f32 %v405, -10.0
    %v438 = vmul.f32 %v406, -10.0
    %v439 = vmul.f32 %v407, -10.0
    %v440 = vmul.f32 %v408, -10.0
    %v441 = vmul.f32 %v409, -10.0
    %v442 = vmul.f32 %v410, %v378
    %v443 = vmul.f32 %v411, %v379
    %v444 = vmul.f32 %v412, %v380
    %v445 = vmul.f32 %v413, %v381
    %v446 = vmul.f32 %v414, %v382
    %v447 = vmul.f32 %v415, %v383
    %v448 = vmul.f32 %v416, %v384
    %v449 = vmul.f32 %v417, %v385
    %v450 = vmul.f32 %v418, %v386
    %v451 = vmul.f32 %v419, %v387
    %v452 = vmul.f32 %v420, %v388
    %v453 = vmul.f32 %v421, %v389
    %v454 = vmul.f32 %v422, %v390
    %v455 = vmul.f32 %v423, %v391
    %v456 = vmul.f32 %v424, %v392
    %v457 = vmul.f32 %v425, %v393
    %v458 = vmul.f32 %v426, %v394
    %v459 = vmul.f32 %v427, %v395
    %v460 = vmul.f32 %v428, %v396
    %v461 = vmul.f32 %v429, %v397
    %v462 = vmul.f32 %v430, %v398
    %v463 = vmul.f32 %v431, %v399
    %v464 = vmul.f32 %v432, %v400
    %v465 = vmul.f32 %v433, %v401
    %v466 = vmul.f32 %v434, %v402
    %v467 = vmul.f32 %v435, %v403
    %v468 = vmul.f32 %v436, %v404
    %v469 = vmul.f32 %v437, %v405
    %v470 = vmul.f32 %v438, %v406
    %v471 = vmul.f32 %v439, %v407
    %v472 = vmul.f32 %v440, %v408
    %v473 = vmul.f32 %v441, %v409
    %v474 = vmul.f32 %v442, 1.442695
    %v475 = vpow.pop %v474
    %v476 = vmul.f32 %v443, 1.442695
    %v477 = vpow.pop %v476
    %v478 = vmul.f32 %v444, 1.442695
    %v479 = vpow.pop %v478
    %v480 = vmul.f32 %v445, 1.442695
    %v481 = vpow.pop %v480
    %v482 = vmul.f32 %v446, 1.442695
    %v483 = vpow.pop %v482
    %v484 = vmul.f32 %v447, 1.442695
    %v485 = vpow.pop %v484
    %v486 = vmul.f32 %v448, 1.442695
    %v487 = vpow.pop %v486
    %v488 = vmul.f32 %v449, 1.442695
    %v489 = vpow.pop %v488
    %v490 = vmul.f32 %v450, 1.442695
    %v491 = vpow.pop %v490
    %v492 = vmul.f32 %v451, 1.442695
    %v493 = vpow.pop %v492
    %v494 = vmul.f32 %v452, 1.442695
    %v495 = vpow.pop %v494
    %v496 = vmul.f32 %v453, 1.442695
    %v497 = vpow.pop %v496
    %v498 = vmul.f32 %v454, 1.442695
    %v499 = vpow.pop %v498
    %v500 = vmul.f32 %v455, 1.442695
    %v501 = vpow.pop %v500
    %v502 = vmul.f32 %v456, 1.442695
    %v503 = vpow.pop %v502
    %v504 = vmul.f32 %v457, 1.442695
    %v505 = vpow.pop %v504
    %v506 = vmul.f32 %v458, 1.442695
    %v507 = vpow.pop %v506
    %v508 = vmul.f32 %v459, 1.442695
    %v509 = vpow.pop %v508
    %v510 = vmul.f32 %v460, 1.442695
    %v511 = vpow.pop %v510
    %v512 = vmul.f32 %v461, 1.442695
    %v513 = vpow.pop %v512
    %v514 = vmul.f32 %v462, 1.442695
    %v515 = vpow.pop %v514
    %v516 = vmul.f32 %v463, 1.442695
    %v517 = vpow.pop %v516
    %v518 = vmul.f32 %v464, 1.442695
    %v519 = vpow.pop %v518
    %v520 = vmul.f32 %v465, 1.442695
    %v521 = vpow.pop %v520
    %v522 = vmul.f32 %v466, 1.442695
    %v523 = vpow.pop %v522
    %v524 = vmul.f32 %v467, 1.442695
    %v525 = vpow.pop %v524
    %v526 = vmul.f32 %v468, 1.442695
    %v527 = vpow.pop %v526
    %v528 = vmul.f32 %v469, 1.442695
    %v529 = vpow.pop %v528
    %v530 = vmul.f32 %v470, 1.442695
    %v531 = vpow.pop %v530
    %v532 = vmul.f32 %v471, 1.442695
    %v533 = vpow.pop %v532
    %v534 = vmul.f32 %v472, 1.442695
    %v535 = vpow.pop %v534
    %v536 = vmul.f32 %v473, 1.442695
    %v537 = vpow.pop %v536
    %v538 = vld [vmem:[%s6] sm:$0xff]
    %v539 = vld [vmem:[%s6 + $0x8] sm:$0xff]
    %v540 = vld [vmem:[%s6 + $0x10] sm:$0xff]
    %v541 = vld [vmem:[%s6 + $0x18] sm:$0xff]
    %v542 = vld [vmem:[%s6 + $0x20] sm:$0xff]
    %v543 = vld [vmem:[%s6 + $0x28] sm:$0xff]
    %v544 = vld [vmem:[%s6 + $0x30] sm:$0xff]
    %v545 = vld [vmem:[%s6 + $0x38] sm:$0xff]
    %v546 = vld [vmem:[%s6 + $0x40] sm:$0xff]
    %v547 = vld [vmem:[%s6 + $0x48] sm:$0xff]
    %v548 = vld [vmem:[%s6 + $0x50] sm:$0xff]
    %v549 = vld [vmem:[%s6 + $0x58] sm:$0xff]
    %v550 = vld [vmem:[%s6 + $0x60] sm:$0xff]
    %v551 = vld [vmem:[%s6 + $0x68] sm:$0xff]
    %v552 = vld [vmem:[%s6 + $0x70] sm:$0xff]
    %v553 = vld [vmem:[%s6 + $0x78] sm:$0xff]
    %554 = vmatpush.msra.mxu0 %v553
    %555 = vmatpush.msra.mxu0 %v552
    %556 = vmatpush.msra.mxu0 %v551
    %557 = vmatpush.msra.mxu0 %v550
    %558 = vmatpush.msra.mxu0 %v549
    %559 = vmatpush.msra.mxu0 %v548
    %560 = vmatpush.msra.mxu0 %v547
    %561 = vmatpush.msra.mxu0 %v546
    %562 = vmatpush.msra.mxu0 %v545
    %563 = vmatpush.msra.mxu0 %v544
    %564 = vmatpush.msra.mxu0 %v543
    %565 = vmatpush.msra.mxu0 %v542
    %566 = vmatpush.msra.mxu0 %v541
    %567 = vmatpush.msra.mxu0 %v540
    %568 = vmatpush.msra.mxu0 %v539
    %569 = vmatpush.msra.mxu0 %v538
    %570 = vmatmul.f32.gmra.mxu0 %v475
    %v571 = vpop.f32.mrf.mxu0
    %v572 = vadd.f32 0.0, %v571
    %573 = vmatmul.f32.gmra.mxu0 %v477
    %v574 = vpop.f32.mrf.mxu0
    %v575 = vadd.f32 0.0, %v574
    %576 = vmatmul.f32.gmra.mxu0 %v479
    %v577 = vpop.f32.mrf.mxu0
    %v578 = vadd.f32 0.0, %v577
    %579 = vmatmul.f32.gmra.mxu0 %v481
    %v580 = vpop.f32.mrf.mxu0
    %v581 = vadd.f32 0.0, %v580
    %582 = vmatmul.f32.gmra.mxu0 %v483
    %v583 = vpop.f32.mrf.mxu0
    %v584 = vadd.f32 0.0, %v583
    %585 = vmatmul.f32.gmra.mxu0 %v485
    %v586 = vpop.f32.mrf.mxu0
    %v587 = vadd.f32 0.0, %v586
    %588 = vmatmul.f32.gmra.mxu0 %v487
    %v589 = vpop.f32.mrf.mxu0
    %v590 = vadd.f32 0.0, %v589
    %591 = vmatmul.f32.gmra.mxu0 %v489
    %v592 = vpop.f32.mrf.mxu0
    %v593 = vadd.f32 0.0, %v592
    %594 = vmatmul.f32.gmra.mxu0 %v491
    %v595 = vpop.f32.mrf.mxu0
    %v596 = vadd.f32 0.0, %v595
    %597 = vmatmul.f32.gmra.mxu0 %v493
    %v598 = vpop.f32.mrf.mxu0
    %v599 = vadd.f32 0.0, %v598
    %600 = vmatmul.f32.gmra.mxu0 %v495
    %v601 = vpop.f32.mrf.mxu0
    %v602 = vadd.f32 0.0, %v601
    %603 = vmatmul.f32.gmra.mxu0 %v497
    %v604 = vpop.f32.mrf.mxu0
    %v605 = vadd.f32 0.0, %v604
    %606 = vmatmul.f32.gmra.mxu0 %v499
    %v607 = vpop.f32.mrf.mxu0
    %v608 = vadd.f32 0.0, %v607
    %609 = vmatmul.f32.gmra.mxu0 %v501
    %v610 = vpop.f32.mrf.mxu0
    %v611 = vadd.f32 0.0, %v610
    %612 = vmatmul.f32.gmra.mxu0 %v503
    %v613 = vpop.f32.mrf.mxu0
    %v614 = vadd.f32 0.0, %v613
    %615 = vmatmul.f32.gmra.mxu0 %v505
    %v616 = vpop.f32.mrf.mxu0
    %v617 = vadd.f32 0.0, %v616
    %618 = vmatmul.f32.gmra.mxu0 %v507
    %v619 = vpop.f32.mrf.mxu0
    %v620 = vadd.f32 0.0, %v619
    %621 = vmatmul.f32.gmra.mxu0 %v509
    %v622 = vpop.f32.mrf.mxu0
    %v623 = vadd.f32 0.0, %v622
    %624 = vmatmul.f32.gmra.mxu0 %v511
    %v625 = vpop.f32.mrf.mxu0
    %v626 = vadd.f32 0.0, %v625
    %627 = vmatmul.f32.gmra.mxu0 %v513
    %v628 = vpop.f32.mrf.mxu0
    %v629 = vadd.f32 0.0, %v628
    %630 = vmatmul.f32.gmra.mxu0 %v515
    %v631 = vpop.f32.mrf.mxu0
    %v632 = vadd.f32 0.0, %v631
    %633 = vmatmul.f32.gmra.mxu0 %v517
    %v634 = vpop.f32.mrf.mxu0
    %v635 = vadd.f32 0.0, %v634
    %636 = vmatmul.f32.gmra.mxu0 %v519
    %v637 = vpop.f32.mrf.mxu0
    %v638 = vadd.f32 0.0, %v637
    %639 = vmatmul.f32.gmra.mxu0 %v521
    %v640 = vpop.f32.mrf.mxu0
    %v641 = vadd.f32 0.0, %v640
    %642 = vmatmul.f32.gmra.mxu0 %v523
    %v643 = vpop.f32.mrf.mxu0
    %v644 = vadd.f32 0.0, %v643
    %645 = vmatmul.f32.gmra.mxu0 %v525
    %v646 = vpop.f32.mrf.mxu0
    %v647 = vadd.f32 0.0, %v646
    %648 = vmatmul.f32.gmra.mxu0 %v527
    %v649 = vpop.f32.mrf.mxu0
    %v650 = vadd.f32 0.0, %v649
    %651 = vmatmul.f32.gmra.mxu0 %v529
    %v652 = vpop.f32.mrf.mxu0
    %v653 = vadd.f32 0.0, %v652
    %654 = vmatmul.f32.gmra.mxu0 %v531
    %v655 = vpop.f32.mrf.mxu0
    %v656 = vadd.f32 0.0, %v655
    %657 = vmatmul.f32.gmra.mxu0 %v533
    %v658 = vpop.f32.mrf.mxu0
    %v659 = vadd.f32 0.0, %v658
    %660 = vmatmul.f32.gmra.mxu0 %v535
    %v661 = vpop.f32.mrf.mxu0
    %v662 = vadd.f32 0.0, %v661
    %663 = vmatmul.f32.gmra.mxu0 %v537
    %v664 = vpop.f32.mrf.mxu0
    %v665 = vadd.f32 0.0, %v664
    %666 = vdwg.mxu0
    %v667 = vmul.f32 %v572, %v572
    %v668 = vmul.f32 %v575, %v575
    %v669 = vmul.f32 %v578, %v578
    %v670 = vmul.f32 %v581, %v581
    %v671 = vmul.f32 %v584, %v584
    %v672 = vmul.f32 %v587, %v587
    %v673 = vmul.f32 %v590, %v590
    %v674 = vmul.f32 %v593, %v593
    %v675 = vmul.f32 %v596, %v596
    %v676 = vmul.f32 %v599, %v599
    %v677 = vmul.f32 %v602, %v602
    %v678 = vmul.f32 %v605, %v605
    %v679 = vmul.f32 %v608, %v608
    %v680 = vmul.f32 %v611, %v611
    %v681 = vmul.f32 %v614, %v614
    %v682 = vmul.f32 %v617, %v617
    %v683 = vmul.f32 %v620, %v620
    %v684 = vmul.f32 %v623, %v623
    %v685 = vmul.f32 %v626, %v626
    %v686 = vmul.f32 %v629, %v629
    %v687 = vmul.f32 %v632, %v632
    %v688 = vmul.f32 %v635, %v635
    %v689 = vmul.f32 %v638, %v638
    %v690 = vmul.f32 %v641, %v641
    %v691 = vmul.f32 %v644, %v644
    %v692 = vmul.f32 %v647, %v647
    %v693 = vmul.f32 %v650, %v650
    %v694 = vmul.f32 %v653, %v653
    %v695 = vmul.f32 %v656, %v656
    %v696 = vmul.f32 %v659, %v659
    %v697 = vmul.f32 %v662, %v662
    %v698 = vmul.f32 %v665, %v665
    %699 = vadd.xlane.f32.xlu0 %v667
    %v700 = vpop.xlane.xlu0 %699
    %701 = vadd.xlane.f32.xlu0 %v668
    %v702 = vpop.xlane.xlu0 %701
    %703 = vadd.xlane.f32.xlu0 %v669
    %v704 = vpop.xlane.xlu0 %703
    %705 = vadd.xlane.f32.xlu0 %v670
    %v706 = vpop.xlane.xlu0 %705
    %707 = vadd.xlane.f32.xlu0 %v671
    %v708 = vpop.xlane.xlu0 %707
    %709 = vadd.xlane.f32.xlu0 %v672
    %v710 = vpop.xlane.xlu0 %709
    %711 = vadd.xlane.f32.xlu0 %v673
    %v712 = vpop.xlane.xlu0 %711
    %713 = vadd.xlane.f32.xlu0 %v674
    %v714 = vpop.xlane.xlu0 %713
    %715 = vadd.xlane.f32.xlu0 %v675
    %v716 = vpop.xlane.xlu0 %715
    %717 = vadd.xlane.f32.xlu0 %v676
    %v718 = vpop.xlane.xlu0 %717
    %719 = vadd.xlane.f32.xlu0 %v677
    %v720 = vpop.xlane.xlu0 %719
    %721 = vadd.xlane.f32.xlu0 %v678
    %v722 = vpop.xlane.xlu0 %721
    %723 = vadd.xlane.f32.xlu0 %v679
    %v724 = vpop.xlane.xlu0 %723
    %725 = vadd.xlane.f32.xlu0 %v680
    %v726 = vpop.xlane.xlu0 %725
    %727 = vadd.xlane.f32.xlu0 %v681
    %v728 = vpop.xlane.xlu0 %727
    %729 = vadd.xlane.f32.xlu0 %v682
    %v730 = vpop.xlane.xlu0 %729
    %731 = vadd.xlane.f32.xlu0 %v683
    %v732 = vpop.xlane.xlu0 %731
    %733 = vadd.xlane.f32.xlu0 %v684
    %v734 = vpop.xlane.xlu0 %733
    %735 = vadd.xlane.f32.xlu0 %v685
    %v736 = vpop.xlane.xlu0 %735
    %737 = vadd.xlane.f32.xlu0 %v686
    %v738 = vpop.xlane.xlu0 %737
    %739 = vadd.xlane.f32.xlu0 %v687
    %v740 = vpop.xlane.xlu0 %739
    %741 = vadd.xlane.f32.xlu0 %v688
    %v742 = vpop.xlane.xlu0 %741
    %743 = vadd.xlane.f32.xlu0 %v689
    %v744 = vpop.xlane.xlu0 %743
    %745 = vadd.xlane.f32.xlu0 %v690
    %v746 = vpop.xlane.xlu0 %745
    %747 = vadd.xlane.f32.xlu0 %v691
    %v748 = vpop.xlane.xlu0 %747
    %749 = vadd.xlane.f32.xlu0 %v692
    %v750 = vpop.xlane.xlu0 %749
    %751 = vadd.xlane.f32.xlu0 %v693
    %v752 = vpop.xlane.xlu0 %751
    %753 = vadd.xlane.f32.xlu0 %v694
    %v754 = vpop.xlane.xlu0 %753
    %755 = vadd.xlane.f32.xlu0 %v695
    %v756 = vpop.xlane.xlu0 %755
    %757 = vadd.xlane.f32.xlu0 %v696
    %v758 = vpop.xlane.xlu0 %757
    %759 = vadd.xlane.f32.xlu0 %v697
    %v760 = vpop.xlane.xlu0 %759
    %761 = vadd.xlane.f32.xlu0 %v698
    %v762 = vpop.xlane.xlu0 %761
    %v763 = vrsqrt.pop %v700
    %v764 = vmul.f32 %v763, %v700
    %v765 = vmul.f32 %v764, %v763
    %v766 = vmul.f32 0.5, %v765
    %v767 = vsub.f32 1.5, %v766
    %v768 = vmul.f32 %v763, %v767
    %v769 = vmul.f32 %v700, %v768
    %vm770 = vcmp.eq.f32.partialorder %v700, inf
    %v771 = vsel %vm770, %v700, %v769
    %vm772 = vcmp.eq.f32.partialorder %v700, 0.0
    %v773 = vand.u32 %v700, 2147483648
    %v774 = vsel %vm772, %v773, %v771
    %v775 = vrsqrt.pop %v702
    %v776 = vmul.f32 %v775, %v702
    %v777 = vmul.f32 %v776, %v775
    %v778 = vmul.f32 0.5, %v777
    %v779 = vsub.f32 1.5, %v778
    %v780 = vmul.f32 %v775, %v779
    %v781 = vmul.f32 %v702, %v780
    %vm782 = vcmp.eq.f32.partialorder %v702, inf
    %v783 = vsel %vm782, %v702, %v781
    %vm784 = vcmp.eq.f32.partialorder %v702, 0.0
    %v785 = vand.u32 %v702, 2147483648
    %v786 = vsel %vm784, %v785, %v783
    %v787 = vrsqrt.pop %v704
    %v788 = vmul.f32 %v787, %v704
    %v789 = vmul.f32 %v788, %v787
    %v790 = vmul.f32 0.5, %v789
    %v791 = vsub.f32 1.5, %v790
    %v792 = vmul.f32 %v787, %v791
    %v793 = vmul.f32 %v704, %v792
    %vm794 = vcmp.eq.f32.partialorder %v704, inf
    %v795 = vsel %vm794, %v704, %v793
    %vm796 = vcmp.eq.f32.partialorder %v704, 0.0
    %v797 = vand.u32 %v704, 2147483648
    %v798 = vsel %vm796, %v797, %v795
    %v799 = vrsqrt.pop %v706
    %v800 = vmul.f32 %v799, %v706
    %v801 = vmul.f32 %v800, %v799
    %v802 = vmul.f32 0.5, %v801
    %v803 = vsub.f32 1.5, %v802
    %v804 = vmul.f32 %v799, %v803
    %v805 = vmul.f32 %v706, %v804
    %vm806 = vcmp.eq.f32.partialorder %v706, inf
    %v807 = vsel %vm806, %v706, %v805
    %vm808 = vcmp.eq.f32.partialorder %v706, 0.0
    %v809 = vand.u32 %v706, 2147483648
    %v810 = vsel %vm808, %v809, %v807
    %v811 = vrsqrt.pop %v708
    %v812 = vmul.f32 %v811, %v708
    %v813 = vmul.f32 %v812, %v811
    %v814 = vmul.f32 0.5, %v813
    %v815 = vsub.f32 1.5, %v814
    %v816 = vmul.f32 %v811, %v815
    %v817 = vmul.f32 %v708, %v816
    %vm818 = vcmp.eq.f32.partialorder %v708, inf
    %v819 = vsel %vm818, %v708, %v817
    %vm820 = vcmp.eq.f32.partialorder %v708, 0.0
    %v821 = vand.u32 %v708, 2147483648
    %v822 = vsel %vm820, %v821, %v819
    %v823 = vrsqrt.pop %v710
    %v824 = vmul.f32 %v823, %v710
    %v825 = vmul.f32 %v824, %v823
    %v826 = vmul.f32 0.5, %v825
    %v827 = vsub.f32 1.5, %v826
    %v828 = vmul.f32 %v823, %v827
    %v829 = vmul.f32 %v710, %v828
    %vm830 = vcmp.eq.f32.partialorder %v710, inf
    %v831 = vsel %vm830, %v710, %v829
    %vm832 = vcmp.eq.f32.partialorder %v710, 0.0
    %v833 = vand.u32 %v710, 2147483648
    %v834 = vsel %vm832, %v833, %v831
    %v835 = vrsqrt.pop %v712
    %v836 = vmul.f32 %v835, %v712
    %v837 = vmul.f32 %v836, %v835
    %v838 = vmul.f32 0.5, %v837
    %v839 = vsub.f32 1.5, %v838
    %v840 = vmul.f32 %v835, %v839
    %v841 = vmul.f32 %v712, %v840
    %vm842 = vcmp.eq.f32.partialorder %v712, inf
    %v843 = vsel %vm842, %v712, %v841
    %vm844 = vcmp.eq.f32.partialorder %v712, 0.0
    %v845 = vand.u32 %v712, 2147483648
    %v846 = vsel %vm844, %v845, %v843
    %v847 = vrsqrt.pop %v714
    %v848 = vmul.f32 %v847, %v714
    %v849 = vmul.f32 %v848, %v847
    %v850 = vmul.f32 0.5, %v849
    %v851 = vsub.f32 1.5, %v850
    %v852 = vmul.f32 %v847, %v851
    %v853 = vmul.f32 %v714, %v852
    %vm854 = vcmp.eq.f32.partialorder %v714, inf
    %v855 = vsel %vm854, %v714, %v853
    %vm856 = vcmp.eq.f32.partialorder %v714, 0.0
    %v857 = vand.u32 %v714, 2147483648
    %v858 = vsel %vm856, %v857, %v855
    %v859 = vrsqrt.pop %v716
    %v860 = vmul.f32 %v859, %v716
    %v861 = vmul.f32 %v860, %v859
    %v862 = vmul.f32 0.5, %v861
    %v863 = vsub.f32 1.5, %v862
    %v864 = vmul.f32 %v859, %v863
    %v865 = vmul.f32 %v716, %v864
    %vm866 = vcmp.eq.f32.partialorder %v716, inf
    %v867 = vsel %vm866, %v716, %v865
    %vm868 = vcmp.eq.f32.partialorder %v716, 0.0
    %v869 = vand.u32 %v716, 2147483648
    %v870 = vsel %vm868, %v869, %v867
    %v871 = vrsqrt.pop %v718
    %v872 = vmul.f32 %v871, %v718
    %v873 = vmul.f32 %v872, %v871
    %v874 = vmul.f32 0.5, %v873
    %v875 = vsub.f32 1.5, %v874
    %v876 = vmul.f32 %v871, %v875
    %v877 = vmul.f32 %v718, %v876
    %vm878 = vcmp.eq.f32.partialorder %v718, inf
    %v879 = vsel %vm878, %v718, %v877
    %vm880 = vcmp.eq.f32.partialorder %v718, 0.0
    %v881 = vand.u32 %v718, 2147483648
    %v882 = vsel %vm880, %v881, %v879
    %v883 = vrsqrt.pop %v720
    %v884 = vmul.f32 %v883, %v720
    %v885 = vmul.f32 %v884, %v883
    %v886 = vmul.f32 0.5, %v885
    %v887 = vsub.f32 1.5, %v886
    %v888 = vmul.f32 %v883, %v887
    %v889 = vmul.f32 %v720, %v888
    %vm890 = vcmp.eq.f32.partialorder %v720, inf
    %v891 = vsel %vm890, %v720, %v889
    %vm892 = vcmp.eq.f32.partialorder %v720, 0.0
    %v893 = vand.u32 %v720, 2147483648
    %v894 = vsel %vm892, %v893, %v891
    %v895 = vrsqrt.pop %v722
    %v896 = vmul.f32 %v895, %v722
    %v897 = vmul.f32 %v896, %v895
    %v898 = vmul.f32 0.5, %v897
    %v899 = vsub.f32 1.5, %v898
    %v900 = vmul.f32 %v895, %v899
    %v901 = vmul.f32 %v722, %v900
    %vm902 = vcmp.eq.f32.partialorder %v722, inf
    %v903 = vsel %vm902, %v722, %v901
    %vm904 = vcmp.eq.f32.partialorder %v722, 0.0
    %v905 = vand.u32 %v722, 2147483648
    %v906 = vsel %vm904, %v905, %v903
    %v907 = vrsqrt.pop %v724
    %v908 = vmul.f32 %v907, %v724
    %v909 = vmul.f32 %v908, %v907
    %v910 = vmul.f32 0.5, %v909
    %v911 = vsub.f32 1.5, %v910
    %v912 = vmul.f32 %v907, %v911
    %v913 = vmul.f32 %v724, %v912
    %vm914 = vcmp.eq.f32.partialorder %v724, inf
    %v915 = vsel %vm914, %v724, %v913
    %vm916 = vcmp.eq.f32.partialorder %v724, 0.0
    %v917 = vand.u32 %v724, 2147483648
    %v918 = vsel %vm916, %v917, %v915
    %v919 = vrsqrt.pop %v726
    %v920 = vmul.f32 %v919, %v726
    %v921 = vmul.f32 %v920, %v919
    %v922 = vmul.f32 0.5, %v921
    %v923 = vsub.f32 1.5, %v922
    %v924 = vmul.f32 %v919, %v923
    %v925 = vmul.f32 %v726, %v924
    %vm926 = vcmp.eq.f32.partialorder %v726, inf
    %v927 = vsel %vm926, %v726, %v925
    %vm928 = vcmp.eq.f32.partialorder %v726, 0.0
    %v929 = vand.u32 %v726, 2147483648
    %v930 = vsel %vm928, %v929, %v927
    %v931 = vrsqrt.pop %v728
    %v932 = vmul.f32 %v931, %v728
    %v933 = vmul.f32 %v932, %v931
    %v934 = vmul.f32 0.5, %v933
    %v935 = vsub.f32 1.5, %v934
    %v936 = vmul.f32 %v931, %v935
    %v937 = vmul.f32 %v728, %v936
    %vm938 = vcmp.eq.f32.partialorder %v728, inf
    %v939 = vsel %vm938, %v728, %v937
    %vm940 = vcmp.eq.f32.partialorder %v728, 0.0
    %v941 = vand.u32 %v728, 2147483648
    %v942 = vsel %vm940, %v941, %v939
    %v943 = vrsqrt.pop %v730
    %v944 = vmul.f32 %v943, %v730
    %v945 = vmul.f32 %v944, %v943
    %v946 = vmul.f32 0.5, %v945
    %v947 = vsub.f32 1.5, %v946
    %v948 = vmul.f32 %v943, %v947
    %v949 = vmul.f32 %v730, %v948
    %vm950 = vcmp.eq.f32.partialorder %v730, inf
    %v951 = vsel %vm950, %v730, %v949
    %vm952 = vcmp.eq.f32.partialorder %v730, 0.0
    %v953 = vand.u32 %v730, 2147483648
    %v954 = vsel %vm952, %v953, %v951
    %v955 = vrsqrt.pop %v732
    %v956 = vmul.f32 %v955, %v732
    %v957 = vmul.f32 %v956, %v955
    %v958 = vmul.f32 0.5, %v957
    %v959 = vsub.f32 1.5, %v958
    %v960 = vmul.f32 %v955, %v959
    %v961 = vmul.f32 %v732, %v960
    %vm962 = vcmp.eq.f32.partialorder %v732, inf
    %v963 = vsel %vm962, %v732, %v961
    %vm964 = vcmp.eq.f32.partialorder %v732, 0.0
    %v965 = vand.u32 %v732, 2147483648
    %v966 = vsel %vm964, %v965, %v963
    %v967 = vrsqrt.pop %v734
    %v968 = vmul.f32 %v967, %v734
    %v969 = vmul.f32 %v968, %v967
    %v970 = vmul.f32 0.5, %v969
    %v971 = vsub.f32 1.5, %v970
    %v972 = vmul.f32 %v967, %v971
    %v973 = vmul.f32 %v734, %v972
    %vm974 = vcmp.eq.f32.partialorder %v734, inf
    %v975 = vsel %vm974, %v734, %v973
    %vm976 = vcmp.eq.f32.partialorder %v734, 0.0
    %v977 = vand.u32 %v734, 2147483648
    %v978 = vsel %vm976, %v977, %v975
    %v979 = vrsqrt.pop %v736
    %v980 = vmul.f32 %v979, %v736
    %v981 = vmul.f32 %v980, %v979
    %v982 = vmul.f32 0.5, %v981
    %v983 = vsub.f32 1.5, %v982
    %v984 = vmul.f32 %v979, %v983
    %v985 = vmul.f32 %v736, %v984
    %vm986 = vcmp.eq.f32.partialorder %v736, inf
    %v987 = vsel %vm986, %v736, %v985
    %vm988 = vcmp.eq.f32.partialorder %v736, 0.0
    %v989 = vand.u32 %v736, 2147483648
    %v990 = vsel %vm988, %v989, %v987
    %v991 = vrsqrt.pop %v738
    %v992 = vmul.f32 %v991, %v738
    %v993 = vmul.f32 %v992, %v991
    %v994 = vmul.f32 0.5, %v993
    %v995 = vsub.f32 1.5, %v994
    %v996 = vmul.f32 %v991, %v995
    %v997 = vmul.f32 %v738, %v996
    %vm998 = vcmp.eq.f32.partialorder %v738, inf
    %v999 = vsel %vm998, %v738, %v997
    %vm1000 = vcmp.eq.f32.partialorder %v738, 0.0
    %v1001 = vand.u32 %v738, 2147483648
    %v1002 = vsel %vm1000, %v1001, %v999
    %v1003 = vrsqrt.pop %v740
    %v1004 = vmul.f32 %v1003, %v740
    %v1005 = vmul.f32 %v1004, %v1003
    %v1006 = vmul.f32 0.5, %v1005
    %v1007 = vsub.f32 1.5, %v1006
    %v1008 = vmul.f32 %v1003, %v1007
    %v1009 = vmul.f32 %v740, %v1008
    %vm1010 = vcmp.eq.f32.partialorder %v740, inf
    %v1011 = vsel %vm1010, %v740, %v1009
    %vm1012 = vcmp.eq.f32.partialorder %v740, 0.0
    %v1013 = vand.u32 %v740, 2147483648
    %v1014 = vsel %vm1012, %v1013, %v1011
    %v1015 = vrsqrt.pop %v742
    %v1016 = vmul.f32 %v1015, %v742
    %v1017 = vmul.f32 %v1016, %v1015
    %v1018 = vmul.f32 0.5, %v1017
    %v1019 = vsub.f32 1.5, %v1018
    %v1020 = vmul.f32 %v1015, %v1019
    %v1021 = vmul.f32 %v742, %v1020
    %vm1022 = vcmp.eq.f32.partialorder %v742, inf
    %v1023 = vsel %vm1022, %v742, %v1021
    %vm1024 = vcmp.eq.f32.partialorder %v742, 0.0
    %v1025 = vand.u32 %v742, 2147483648
    %v1026 = vsel %vm1024, %v1025, %v1023
    %v1027 = vrsqrt.pop %v744
    %v1028 = vmul.f32 %v1027, %v744
    %v1029 = vmul.f32 %v1028, %v1027
    %v1030 = vmul.f32 0.5, %v1029
    %v1031 = vsub.f32 1.5, %v1030
    %v1032 = vmul.f32 %v1027, %v1031
    %v1033 = vmul.f32 %v744, %v1032
    %vm1034 = vcmp.eq.f32.partialorder %v744, inf
    %v1035 = vsel %vm1034, %v744, %v1033
    %vm1036 = vcmp.eq.f32.partialorder %v744, 0.0
    %v1037 = vand.u32 %v744, 2147483648
    %v1038 = vsel %vm1036, %v1037, %v1035
    %v1039 = vrsqrt.pop %v746
    %v1040 = vmul.f32 %v1039, %v746
    %v1041 = vmul.f32 %v1040, %v1039
    %v1042 = vmul.f32 0.5, %v1041
    %v1043 = vsub.f32 1.5, %v1042
    %v1044 = vmul.f32 %v1039, %v1043
    %v1045 = vmul.f32 %v746, %v1044
    %vm1046 = vcmp.eq.f32.partialorder %v746, inf
    %v1047 = vsel %vm1046, %v746, %v1045
    %vm1048 = vcmp.eq.f32.partialorder %v746, 0.0
    %v1049 = vand.u32 %v746, 2147483648
    %v1050 = vsel %vm1048, %v1049, %v1047
    %v1051 = vrsqrt.pop %v748
    %v1052 = vmul.f32 %v1051, %v748
    %v1053 = vmul.f32 %v1052, %v1051
    %v1054 = vmul.f32 0.5, %v1053
    %v1055 = vsub.f32 1.5, %v1054
    %v1056 = vmul.f32 %v1051, %v1055
    %v1057 = vmul.f32 %v748, %v1056
    %vm1058 = vcmp.eq.f32.partialorder %v748, inf
    %v1059 = vsel %vm1058, %v748, %v1057
    %vm1060 = vcmp.eq.f32.partialorder %v748, 0.0
    %v1061 = vand.u32 %v748, 2147483648
    %v1062 = vsel %vm1060, %v1061, %v1059
    %v1063 = vrsqrt.pop %v750
    %v1064 = vmul.f32 %v1063, %v750
    %v1065 = vmul.f32 %v1064, %v1063
    %v1066 = vmul.f32 0.5, %v1065
    %v1067 = vsub.f32 1.5, %v1066
    %v1068 = vmul.f32 %v1063, %v1067
    %v1069 = vmul.f32 %v750, %v1068
    %vm1070 = vcmp.eq.f32.partialorder %v750, inf
    %v1071 = vsel %vm1070, %v750, %v1069
    %vm1072 = vcmp.eq.f32.partialorder %v750, 0.0
    %v1073 = vand.u32 %v750, 2147483648
    %v1074 = vsel %vm1072, %v1073, %v1071
    %v1075 = vrsqrt.pop %v752
    %v1076 = vmul.f32 %v1075, %v752
    %v1077 = vmul.f32 %v1076, %v1075
    %v1078 = vmul.f32 0.5, %v1077
    %v1079 = vsub.f32 1.5, %v1078
    %v1080 = vmul.f32 %v1075, %v1079
    %v1081 = vmul.f32 %v752, %v1080
    %vm1082 = vcmp.eq.f32.partialorder %v752, inf
    %v1083 = vsel %vm1082, %v752, %v1081
    %vm1084 = vcmp.eq.f32.partialorder %v752, 0.0
    %v1085 = vand.u32 %v752, 2147483648
    %v1086 = vsel %vm1084, %v1085, %v1083
    %v1087 = vrsqrt.pop %v754
    %v1088 = vmul.f32 %v1087, %v754
    %v1089 = vmul.f32 %v1088, %v1087
    %v1090 = vmul.f32 0.5, %v1089
    %v1091 = vsub.f32 1.5, %v1090
    %v1092 = vmul.f32 %v1087, %v1091
    %v1093 = vmul.f32 %v754, %v1092
    %vm1094 = vcmp.eq.f32.partialorder %v754, inf
    %v1095 = vsel %vm1094, %v754, %v1093
    %vm1096 = vcmp.eq.f32.partialorder %v754, 0.0
    %v1097 = vand.u32 %v754, 2147483648
    %v1098 = vsel %vm1096, %v1097, %v1095
    %v1099 = vrsqrt.pop %v756
    %v1100 = vmul.f32 %v1099, %v756
    %v1101 = vmul.f32 %v1100, %v1099
    %v1102 = vmul.f32 0.5, %v1101
    %v1103 = vsub.f32 1.5, %v1102
    %v1104 = vmul.f32 %v1099, %v1103
    %v1105 = vmul.f32 %v756, %v1104
    %vm1106 = vcmp.eq.f32.partialorder %v756, inf
    %v1107 = vsel %vm1106, %v756, %v1105
    %vm1108 = vcmp.eq.f32.partialorder %v756, 0.0
    %v1109 = vand.u32 %v756, 2147483648
    %v1110 = vsel %vm1108, %v1109, %v1107
    %v1111 = vrsqrt.pop %v758
    %v1112 = vmul.f32 %v1111, %v758
    %v1113 = vmul.f32 %v1112, %v1111
    %v1114 = vmul.f32 0.5, %v1113
    %v1115 = vsub.f32 1.5, %v1114
    %v1116 = vmul.f32 %v1111, %v1115
    %v1117 = vmul.f32 %v758, %v1116
    %vm1118 = vcmp.eq.f32.partialorder %v758, inf
    %v1119 = vsel %vm1118, %v758, %v1117
    %vm1120 = vcmp.eq.f32.partialorder %v758, 0.0
    %v1121 = vand.u32 %v758, 2147483648
    %v1122 = vsel %vm1120, %v1121, %v1119
    %v1123 = vrsqrt.pop %v760
    %v1124 = vmul.f32 %v1123, %v760
    %v1125 = vmul.f32 %v1124, %v1123
    %v1126 = vmul.f32 0.5, %v1125
    %v1127 = vsub.f32 1.5, %v1126
    %v1128 = vmul.f32 %v1123, %v1127
    %v1129 = vmul.f32 %v760, %v1128
    %vm1130 = vcmp.eq.f32.partialorder %v760, inf
    %v1131 = vsel %vm1130, %v760, %v1129
    %vm1132 = vcmp.eq.f32.partialorder %v760, 0.0
    %v1133 = vand.u32 %v760, 2147483648
    %v1134 = vsel %vm1132, %v1133, %v1131
    %v1135 = vrsqrt.pop %v762
    %v1136 = vmul.f32 %v1135, %v762
    %v1137 = vmul.f32 %v1136, %v1135
    %v1138 = vmul.f32 0.5, %v1137
    %v1139 = vsub.f32 1.5, %v1138
    %v1140 = vmul.f32 %v1135, %v1139
    %v1141 = vmul.f32 %v762, %v1140
    %vm1142 = vcmp.eq.f32.partialorder %v762, inf
    %v1143 = vsel %vm1142, %v762, %v1141
    %vm1144 = vcmp.eq.f32.partialorder %v762, 0.0
    %v1145 = vand.u32 %v762, 2147483648
    %v1146 = vsel %vm1144, %v1145, %v1143
    %v1147 = vmul.f32 %v774, 0.17677669
    %v1148 = vmul.f32 %v786, 0.17677669
    %v1149 = vmul.f32 %v798, 0.17677669
    %v1150 = vmul.f32 %v810, 0.17677669
    %v1151 = vmul.f32 %v822, 0.17677669
    %v1152 = vmul.f32 %v834, 0.17677669
    %v1153 = vmul.f32 %v846, 0.17677669
    %v1154 = vmul.f32 %v858, 0.17677669
    %v1155 = vmul.f32 %v870, 0.17677669
    %v1156 = vmul.f32 %v882, 0.17677669
    %v1157 = vmul.f32 %v894, 0.17677669
    %v1158 = vmul.f32 %v906, 0.17677669
    %v1159 = vmul.f32 %v918, 0.17677669
    %v1160 = vmul.f32 %v930, 0.17677669
    %v1161 = vmul.f32 %v942, 0.17677669
    %v1162 = vmul.f32 %v954, 0.17677669
    %v1163 = vmul.f32 %v966, 0.17677669
    %v1164 = vmul.f32 %v978, 0.17677669
    %v1165 = vmul.f32 %v990, 0.17677669
    %v1166 = vmul.f32 %v1002, 0.17677669
    %v1167 = vmul.f32 %v1014, 0.17677669
    %v1168 = vmul.f32 %v1026, 0.17677669
    %v1169 = vmul.f32 %v1038, 0.17677669
    %v1170 = vmul.f32 %v1050, 0.17677669
    %v1171 = vmul.f32 %v1062, 0.17677669
    %v1172 = vmul.f32 %v1074, 0.17677669
    %v1173 = vmul.f32 %v1086, 0.17677669
    %v1174 = vmul.f32 %v1098, 0.17677669
    %v1175 = vmul.f32 %v1110, 0.17677669
    %v1176 = vmul.f32 %v1122, 0.17677669
    %v1177 = vmul.f32 %v1134, 0.17677669
    %v1178 = vmul.f32 %v1146, 0.17677669
    %v1179 = vadd.f32 %v1147, 1e-08
    %v1180 = vadd.f32 %v1148, 1e-08
    %v1181 = vadd.f32 %v1149, 1e-08
    %v1182 = vadd.f32 %v1150, 1e-08
    %v1183 = vadd.f32 %v1151, 1e-08
    %v1184 = vadd.f32 %v1152, 1e-08
    %v1185 = vadd.f32 %v1153, 1e-08
    %v1186 = vadd.f32 %v1154, 1e-08
    %v1187 = vadd.f32 %v1155, 1e-08
    %v1188 = vadd.f32 %v1156, 1e-08
    %v1189 = vadd.f32 %v1157, 1e-08
    %v1190 = vadd.f32 %v1158, 1e-08
    %v1191 = vadd.f32 %v1159, 1e-08
    %v1192 = vadd.f32 %v1160, 1e-08
    %v1193 = vadd.f32 %v1161, 1e-08
    %v1194 = vadd.f32 %v1162, 1e-08
    %v1195 = vadd.f32 %v1163, 1e-08
    %v1196 = vadd.f32 %v1164, 1e-08
    %v1197 = vadd.f32 %v1165, 1e-08
    %v1198 = vadd.f32 %v1166, 1e-08
    %v1199 = vadd.f32 %v1167, 1e-08
    %v1200 = vadd.f32 %v1168, 1e-08
    %v1201 = vadd.f32 %v1169, 1e-08
    %v1202 = vadd.f32 %v1170, 1e-08
    %v1203 = vadd.f32 %v1171, 1e-08
    %v1204 = vadd.f32 %v1172, 1e-08
    %v1205 = vadd.f32 %v1173, 1e-08
    %v1206 = vadd.f32 %v1174, 1e-08
    %v1207 = vadd.f32 %v1175, 1e-08
    %v1208 = vadd.f32 %v1176, 1e-08
    %v1209 = vadd.f32 %v1177, 1e-08
    %v1210 = vadd.f32 %v1178, 1e-08
    %v1211 = vrcp.pop %v1179
    %v1212 = vmul.f32 %v1179, %v1211
    %v1213 = vsub.f32 1.0, %v1212
    %v1214 = vmul.f32 %v1211, %v1213
    %v1215 = vadd.f32 %v1211, %v1214
    %vm1216 = vweird.f32 %v1179
    %vm1217 = vweird.f32 %v1211
    %vm1218 = vmor %vm1216, %vm1217
    %v1219 = vsel %vm1218, %v1211, %v1215
    %v1220 = vand.u32 2147483647, %v1179
    %vm1221 = vcmp.eq.f32.partialorder %v1220, 8.507059e+37
    %v1222 = vand.u32 %v1179, 2147483648
    %v1223 = vor.u32 1.1754944e-38, %v1222
    %v1224 = vsel %vm1221, %v1223, %v1219
    %v1225 = vrcp.pop %v1180
    %v1226 = vmul.f32 %v1180, %v1225
    %v1227 = vsub.f32 1.0, %v1226
    %v1228 = vmul.f32 %v1225, %v1227
    %v1229 = vadd.f32 %v1225, %v1228
    %vm1230 = vweird.f32 %v1180
    %vm1231 = vweird.f32 %v1225
    %vm1232 = vmor %vm1230, %vm1231
    %v1233 = vsel %vm1232, %v1225, %v1229
    %v1234 = vand.u32 2147483647, %v1180
    %vm1235 = vcmp.eq.f32.partialorder %v1234, 8.507059e+37
    %v1236 = vand.u32 %v1180, 2147483648
    %v1237 = vor.u32 1.1754944e-38, %v1236
    %v1238 = vsel %vm1235, %v1237, %v1233
    %v1239 = vrcp.pop %v1181
    %v1240 = vmul.f32 %v1181, %v1239
    %v1241 = vsub.f32 1.0, %v1240
    %v1242 = vmul.f32 %v1239, %v1241
    %v1243 = vadd.f32 %v1239, %v1242
    %vm1244 = vweird.f32 %v1181
    %vm1245 = vweird.f32 %v1239
    %vm1246 = vmor %vm1244, %vm1245
    %v1247 = vsel %vm1246, %v1239, %v1243
    %v1248 = vand.u32 2147483647, %v1181
    %vm1249 = vcmp.eq.f32.partialorder %v1248, 8.507059e+37
    %v1250 = vand.u32 %v1181, 2147483648
    %v1251 = vor.u32 1.1754944e-38, %v1250
    %v1252 = vsel %vm1249, %v1251, %v1247
    %v1253 = vrcp.pop %v1182
    %v1254 = vmul.f32 %v1182, %v1253
    %v1255 = vsub.f32 1.0, %v1254
    %v1256 = vmul.f32 %v1253, %v1255
    %v1257 = vadd.f32 %v1253, %v1256
    %vm1258 = vweird.f32 %v1182
    %vm1259 = vweird.f32 %v1253
    %vm1260 = vmor %vm1258, %vm1259
    %v1261 = vsel %vm1260, %v1253, %v1257
    %v1262 = vand.u32 2147483647, %v1182
    %vm1263 = vcmp.eq.f32.partialorder %v1262, 8.507059e+37
    %v1264 = vand.u32 %v1182, 2147483648
    %v1265 = vor.u32 1.1754944e-38, %v1264
    %v1266 = vsel %vm1263, %v1265, %v1261
    %v1267 = vrcp.pop %v1183
    %v1268 = vmul.f32 %v1183, %v1267
    %v1269 = vsub.f32 1.0, %v1268
    %v1270 = vmul.f32 %v1267, %v1269
    %v1271 = vadd.f32 %v1267, %v1270
    %vm1272 = vweird.f32 %v1183
    %vm1273 = vweird.f32 %v1267
    %vm1274 = vmor %vm1272, %vm1273
    %v1275 = vsel %vm1274, %v1267, %v1271
    %v1276 = vand.u32 2147483647, %v1183
    %vm1277 = vcmp.eq.f32.partialorder %v1276, 8.507059e+37
    %v1278 = vand.u32 %v1183, 2147483648
    %v1279 = vor.u32 1.1754944e-38, %v1278
    %v1280 = vsel %vm1277, %v1279, %v1275
    %v1281 = vrcp.pop %v1184
    %v1282 = vmul.f32 %v1184, %v1281
    %v1283 = vsub.f32 1.0, %v1282
    %v1284 = vmul.f32 %v1281, %v1283
    %v1285 = vadd.f32 %v1281, %v1284
    %vm1286 = vweird.f32 %v1184
    %vm1287 = vweird.f32 %v1281
    %vm1288 = vmor %vm1286, %vm1287
    %v1289 = vsel %vm1288, %v1281, %v1285
    %v1290 = vand.u32 2147483647, %v1184
    %vm1291 = vcmp.eq.f32.partialorder %v1290, 8.507059e+37
    %v1292 = vand.u32 %v1184, 2147483648
    %v1293 = vor.u32 1.1754944e-38, %v1292
    %v1294 = vsel %vm1291, %v1293, %v1289
    %v1295 = vrcp.pop %v1185
    %v1296 = vmul.f32 %v1185, %v1295
    %v1297 = vsub.f32 1.0, %v1296
    %v1298 = vmul.f32 %v1295, %v1297
    %v1299 = vadd.f32 %v1295, %v1298
    %vm1300 = vweird.f32 %v1185
    %vm1301 = vweird.f32 %v1295
    %vm1302 = vmor %vm1300, %vm1301
    %v1303 = vsel %vm1302, %v1295, %v1299
    %v1304 = vand.u32 2147483647, %v1185
    %vm1305 = vcmp.eq.f32.partialorder %v1304, 8.507059e+37
    %v1306 = vand.u32 %v1185, 2147483648
    %v1307 = vor.u32 1.1754944e-38, %v1306
    %v1308 = vsel %vm1305, %v1307, %v1303
    %v1309 = vrcp.pop %v1186
    %v1310 = vmul.f32 %v1186, %v1309
    %v1311 = vsub.f32 1.0, %v1310
    %v1312 = vmul.f32 %v1309, %v1311
    %v1313 = vadd.f32 %v1309, %v1312
    %vm1314 = vweird.f32 %v1186
    %vm1315 = vweird.f32 %v1309
    %vm1316 = vmor %vm1314, %vm1315
    %v1317 = vsel %vm1316, %v1309, %v1313
    %v1318 = vand.u32 2147483647, %v1186
    %vm1319 = vcmp.eq.f32.partialorder %v1318, 8.507059e+37
    %v1320 = vand.u32 %v1186, 2147483648
    %v1321 = vor.u32 1.1754944e-38, %v1320
    %v1322 = vsel %vm1319, %v1321, %v1317
    %v1323 = vrcp.pop %v1187
    %v1324 = vmul.f32 %v1187, %v1323
    %v1325 = vsub.f32 1.0, %v1324
    %v1326 = vmul.f32 %v1323, %v1325
    %v1327 = vadd.f32 %v1323, %v1326
    %vm1328 = vweird.f32 %v1187
    %vm1329 = vweird.f32 %v1323
    %vm1330 = vmor %vm1328, %vm1329
    %v1331 = vsel %vm1330, %v1323, %v1327
    %v1332 = vand.u32 2147483647, %v1187
    %vm1333 = vcmp.eq.f32.partialorder %v1332, 8.507059e+37
    %v1334 = vand.u32 %v1187, 2147483648
    %v1335 = vor.u32 1.1754944e-38, %v1334
    %v1336 = vsel %vm1333, %v1335, %v1331
    %v1337 = vrcp.pop %v1188
    %v1338 = vmul.f32 %v1188, %v1337
    %v1339 = vsub.f32 1.0, %v1338
    %v1340 = vmul.f32 %v1337, %v1339
    %v1341 = vadd.f32 %v1337, %v1340
    %vm1342 = vweird.f32 %v1188
    %vm1343 = vweird.f32 %v1337
    %vm1344 = vmor %vm1342, %vm1343
    %v1345 = vsel %vm1344, %v1337, %v1341
    %v1346 = vand.u32 2147483647, %v1188
    %vm1347 = vcmp.eq.f32.partialorder %v1346, 8.507059e+37
    %v1348 = vand.u32 %v1188, 2147483648
    %v1349 = vor.u32 1.1754944e-38, %v1348
    %v1350 = vsel %vm1347, %v1349, %v1345
    %v1351 = vrcp.pop %v1189
    %v1352 = vmul.f32 %v1189, %v1351
    %v1353 = vsub.f32 1.0, %v1352
    %v1354 = vmul.f32 %v1351, %v1353
    %v1355 = vadd.f32 %v1351, %v1354
    %vm1356 = vweird.f32 %v1189
    %vm1357 = vweird.f32 %v1351
    %vm1358 = vmor %vm1356, %vm1357
    %v1359 = vsel %vm1358, %v1351, %v1355
    %v1360 = vand.u32 2147483647, %v1189
    %vm1361 = vcmp.eq.f32.partialorder %v1360, 8.507059e+37
    %v1362 = vand.u32 %v1189, 2147483648
    %v1363 = vor.u32 1.1754944e-38, %v1362
    %v1364 = vsel %vm1361, %v1363, %v1359
    %v1365 = vrcp.pop %v1190
    %v1366 = vmul.f32 %v1190, %v1365
    %v1367 = vsub.f32 1.0, %v1366
    %v1368 = vmul.f32 %v1365, %v1367
    %v1369 = vadd.f32 %v1365, %v1368
    %vm1370 = vweird.f32 %v1190
    %vm1371 = vweird.f32 %v1365
    %vm1372 = vmor %vm1370, %vm1371
    %v1373 = vsel %vm1372, %v1365, %v1369
    %v1374 = vand.u32 2147483647, %v1190
    %vm1375 = vcmp.eq.f32.partialorder %v1374, 8.507059e+37
    %v1376 = vand.u32 %v1190, 2147483648
    %v1377 = vor.u32 1.1754944e-38, %v1376
    %v1378 = vsel %vm1375, %v1377, %v1373
    %v1379 = vrcp.pop %v1191
    %v1380 = vmul.f32 %v1191, %v1379
    %v1381 = vsub.f32 1.0, %v1380
    %v1382 = vmul.f32 %v1379, %v1381
    %v1383 = vadd.f32 %v1379, %v1382
    %vm1384 = vweird.f32 %v1191
    %vm1385 = vweird.f32 %v1379
    %vm1386 = vmor %vm1384, %vm1385
    %v1387 = vsel %vm1386, %v1379, %v1383
    %v1388 = vand.u32 2147483647, %v1191
    %vm1389 = vcmp.eq.f32.partialorder %v1388, 8.507059e+37
    %v1390 = vand.u32 %v1191, 2147483648
    %v1391 = vor.u32 1.1754944e-38, %v1390
    %v1392 = vsel %vm1389, %v1391, %v1387
    %v1393 = vrcp.pop %v1192
    %v1394 = vmul.f32 %v1192, %v1393
    %v1395 = vsub.f32 1.0, %v1394
    %v1396 = vmul.f32 %v1393, %v1395
    %v1397 = vadd.f32 %v1393, %v1396
    %vm1398 = vweird.f32 %v1192
    %vm1399 = vweird.f32 %v1393
    %vm1400 = vmor %vm1398, %vm1399
    %v1401 = vsel %vm1400, %v1393, %v1397
    %v1402 = vand.u32 2147483647, %v1192
    %vm1403 = vcmp.eq.f32.partialorder %v1402, 8.507059e+37
    %v1404 = vand.u32 %v1192, 2147483648
    %v1405 = vor.u32 1.1754944e-38, %v1404
    %v1406 = vsel %vm1403, %v1405, %v1401
    %v1407 = vrcp.pop %v1193
    %v1408 = vmul.f32 %v1193, %v1407
    %v1409 = vsub.f32 1.0, %v1408
    %v1410 = vmul.f32 %v1407, %v1409
    %v1411 = vadd.f32 %v1407, %v1410
    %vm1412 = vweird.f32 %v1193
    %vm1413 = vweird.f32 %v1407
    %vm1414 = vmor %vm1412, %vm1413
    %v1415 = vsel %vm1414, %v1407, %v1411
    %v1416 = vand.u32 2147483647, %v1193
    %vm1417 = vcmp.eq.f32.partialorder %v1416, 8.507059e+37
    %v1418 = vand.u32 %v1193, 2147483648
    %v1419 = vor.u32 1.1754944e-38, %v1418
    %v1420 = vsel %vm1417, %v1419, %v1415
    %v1421 = vrcp.pop %v1194
    %v1422 = vmul.f32 %v1194, %v1421
    %v1423 = vsub.f32 1.0, %v1422
    %v1424 = vmul.f32 %v1421, %v1423
    %v1425 = vadd.f32 %v1421, %v1424
    %vm1426 = vweird.f32 %v1194
    %vm1427 = vweird.f32 %v1421
    %vm1428 = vmor %vm1426, %vm1427
    %v1429 = vsel %vm1428, %v1421, %v1425
    %v1430 = vand.u32 2147483647, %v1194
    %vm1431 = vcmp.eq.f32.partialorder %v1430, 8.507059e+37
    %v1432 = vand.u32 %v1194, 2147483648
    %v1433 = vor.u32 1.1754944e-38, %v1432
    %v1434 = vsel %vm1431, %v1433, %v1429
    %v1435 = vrcp.pop %v1195
    %v1436 = vmul.f32 %v1195, %v1435
    %v1437 = vsub.f32 1.0, %v1436
    %v1438 = vmul.f32 %v1435, %v1437
    %v1439 = vadd.f32 %v1435, %v1438
    %vm1440 = vweird.f32 %v1195
    %vm1441 = vweird.f32 %v1435
    %vm1442 = vmor %vm1440, %vm1441
    %v1443 = vsel %vm1442, %v1435, %v1439
    %v1444 = vand.u32 2147483647, %v1195
    %vm1445 = vcmp.eq.f32.partialorder %v1444, 8.507059e+37
    %v1446 = vand.u32 %v1195, 2147483648
    %v1447 = vor.u32 1.1754944e-38, %v1446
    %v1448 = vsel %vm1445, %v1447, %v1443
    %v1449 = vrcp.pop %v1196
    %v1450 = vmul.f32 %v1196, %v1449
    %v1451 = vsub.f32 1.0, %v1450
    %v1452 = vmul.f32 %v1449, %v1451
    %v1453 = vadd.f32 %v1449, %v1452
    %vm1454 = vweird.f32 %v1196
    %vm1455 = vweird.f32 %v1449
    %vm1456 = vmor %vm1454, %vm1455
    %v1457 = vsel %vm1456, %v1449, %v1453
    %v1458 = vand.u32 2147483647, %v1196
    %vm1459 = vcmp.eq.f32.partialorder %v1458, 8.507059e+37
    %v1460 = vand.u32 %v1196, 2147483648
    %v1461 = vor.u32 1.1754944e-38, %v1460
    %v1462 = vsel %vm1459, %v1461, %v1457
    %v1463 = vrcp.pop %v1197
    %v1464 = vmul.f32 %v1197, %v1463
    %v1465 = vsub.f32 1.0, %v1464
    %v1466 = vmul.f32 %v1463, %v1465
    %v1467 = vadd.f32 %v1463, %v1466
    %vm1468 = vweird.f32 %v1197
    %vm1469 = vweird.f32 %v1463
    %vm1470 = vmor %vm1468, %vm1469
    %v1471 = vsel %vm1470, %v1463, %v1467
    %v1472 = vand.u32 2147483647, %v1197
    %vm1473 = vcmp.eq.f32.partialorder %v1472, 8.507059e+37
    %v1474 = vand.u32 %v1197, 2147483648
    %v1475 = vor.u32 1.1754944e-38, %v1474
    %v1476 = vsel %vm1473, %v1475, %v1471
    %v1477 = vrcp.pop %v1198
    %v1478 = vmul.f32 %v1198, %v1477
    %v1479 = vsub.f32 1.0, %v1478
    %v1480 = vmul.f32 %v1477, %v1479
    %v1481 = vadd.f32 %v1477, %v1480
    %vm1482 = vweird.f32 %v1198
    %vm1483 = vweird.f32 %v1477
    %vm1484 = vmor %vm1482, %vm1483
    %v1485 = vsel %vm1484, %v1477, %v1481
    %v1486 = vand.u32 2147483647, %v1198
    %vm1487 = vcmp.eq.f32.partialorder %v1486, 8.507059e+37
    %v1488 = vand.u32 %v1198, 2147483648
    %v1489 = vor.u32 1.1754944e-38, %v1488
    %v1490 = vsel %vm1487, %v1489, %v1485
    %v1491 = vrcp.pop %v1199
    %v1492 = vmul.f32 %v1199, %v1491
    %v1493 = vsub.f32 1.0, %v1492
    %v1494 = vmul.f32 %v1491, %v1493
    %v1495 = vadd.f32 %v1491, %v1494
    %vm1496 = vweird.f32 %v1199
    %vm1497 = vweird.f32 %v1491
    %vm1498 = vmor %vm1496, %vm1497
    %v1499 = vsel %vm1498, %v1491, %v1495
    %v1500 = vand.u32 2147483647, %v1199
    %vm1501 = vcmp.eq.f32.partialorder %v1500, 8.507059e+37
    %v1502 = vand.u32 %v1199, 2147483648
    %v1503 = vor.u32 1.1754944e-38, %v1502
    %v1504 = vsel %vm1501, %v1503, %v1499
    %v1505 = vrcp.pop %v1200
    %v1506 = vmul.f32 %v1200, %v1505
    %v1507 = vsub.f32 1.0, %v1506
    %v1508 = vmul.f32 %v1505, %v1507
    %v1509 = vadd.f32 %v1505, %v1508
    %vm1510 = vweird.f32 %v1200
    %vm1511 = vweird.f32 %v1505
    %vm1512 = vmor %vm1510, %vm1511
    %v1513 = vsel %vm1512, %v1505, %v1509
    %v1514 = vand.u32 2147483647, %v1200
    %vm1515 = vcmp.eq.f32.partialorder %v1514, 8.507059e+37
    %v1516 = vand.u32 %v1200, 2147483648
    %v1517 = vor.u32 1.1754944e-38, %v1516
    %v1518 = vsel %vm1515, %v1517, %v1513
    %v1519 = vrcp.pop %v1201
    %v1520 = vmul.f32 %v1201, %v1519
    %v1521 = vsub.f32 1.0, %v1520
    %v1522 = vmul.f32 %v1519, %v1521
    %v1523 = vadd.f32 %v1519, %v1522
    %vm1524 = vweird.f32 %v1201
    %vm1525 = vweird.f32 %v1519
    %vm1526 = vmor %vm1524, %vm1525
    %v1527 = vsel %vm1526, %v1519, %v1523
    %v1528 = vand.u32 2147483647, %v1201
    %vm1529 = vcmp.eq.f32.partialorder %v1528, 8.507059e+37
    %v1530 = vand.u32 %v1201, 2147483648
    %v1531 = vor.u32 1.1754944e-38, %v1530
    %v1532 = vsel %vm1529, %v1531, %v1527
    %v1533 = vrcp.pop %v1202
    %v1534 = vmul.f32 %v1202, %v1533
    %v1535 = vsub.f32 1.0, %v1534
    %v1536 = vmul.f32 %v1533, %v1535
    %v1537 = vadd.f32 %v1533, %v1536
    %vm1538 = vweird.f32 %v1202
    %vm1539 = vweird.f32 %v1533
    %vm1540 = vmor %vm1538, %vm1539
    %v1541 = vsel %vm1540, %v1533, %v1537
    %v1542 = vand.u32 2147483647, %v1202
    %vm1543 = vcmp.eq.f32.partialorder %v1542, 8.507059e+37
    %v1544 = vand.u32 %v1202, 2147483648
    %v1545 = vor.u32 1.1754944e-38, %v1544
    %v1546 = vsel %vm1543, %v1545, %v1541
    %v1547 = vrcp.pop %v1203
    %v1548 = vmul.f32 %v1203, %v1547
    %v1549 = vsub.f32 1.0, %v1548
    %v1550 = vmul.f32 %v1547, %v1549
    %v1551 = vadd.f32 %v1547, %v1550
    %vm1552 = vweird.f32 %v1203
    %vm1553 = vweird.f32 %v1547
    %vm1554 = vmor %vm1552, %vm1553
    %v1555 = vsel %vm1554, %v1547, %v1551
    %v1556 = vand.u32 2147483647, %v1203
    %vm1557 = vcmp.eq.f32.partialorder %v1556, 8.507059e+37
    %v1558 = vand.u32 %v1203, 2147483648
    %v1559 = vor.u32 1.1754944e-38, %v1558
    %v1560 = vsel %vm1557, %v1559, %v1555
    %v1561 = vrcp.pop %v1204
    %v1562 = vmul.f32 %v1204, %v1561
    %v1563 = vsub.f32 1.0, %v1562
    %v1564 = vmul.f32 %v1561, %v1563
    %v1565 = vadd.f32 %v1561, %v1564
    %vm1566 = vweird.f32 %v1204
    %vm1567 = vweird.f32 %v1561
    %vm1568 = vmor %vm1566, %vm1567
    %v1569 = vsel %vm1568, %v1561, %v1565
    %v1570 = vand.u32 2147483647, %v1204
    %vm1571 = vcmp.eq.f32.partialorder %v1570, 8.507059e+37
    %v1572 = vand.u32 %v1204, 2147483648
    %v1573 = vor.u32 1.1754944e-38, %v1572
    %v1574 = vsel %vm1571, %v1573, %v1569
    %v1575 = vrcp.pop %v1205
    %v1576 = vmul.f32 %v1205, %v1575
    %v1577 = vsub.f32 1.0, %v1576
    %v1578 = vmul.f32 %v1575, %v1577
    %v1579 = vadd.f32 %v1575, %v1578
    %vm1580 = vweird.f32 %v1205
    %vm1581 = vweird.f32 %v1575
    %vm1582 = vmor %vm1580, %vm1581
    %v1583 = vsel %vm1582, %v1575, %v1579
    %v1584 = vand.u32 2147483647, %v1205
    %vm1585 = vcmp.eq.f32.partialorder %v1584, 8.507059e+37
    %v1586 = vand.u32 %v1205, 2147483648
    %v1587 = vor.u32 1.1754944e-38, %v1586
    %v1588 = vsel %vm1585, %v1587, %v1583
    %v1589 = vrcp.pop %v1206
    %v1590 = vmul.f32 %v1206, %v1589
    %v1591 = vsub.f32 1.0, %v1590
    %v1592 = vmul.f32 %v1589, %v1591
    %v1593 = vadd.f32 %v1589, %v1592
    %vm1594 = vweird.f32 %v1206
    %vm1595 = vweird.f32 %v1589
    %vm1596 = vmor %vm1594, %vm1595
    %v1597 = vsel %vm1596, %v1589, %v1593
    %v1598 = vand.u32 2147483647, %v1206
    %vm1599 = vcmp.eq.f32.partialorder %v1598, 8.507059e+37
    %v1600 = vand.u32 %v1206, 2147483648
    %v1601 = vor.u32 1.1754944e-38, %v1600
    %v1602 = vsel %vm1599, %v1601, %v1597
    %v1603 = vrcp.pop %v1207
    %v1604 = vmul.f32 %v1207, %v1603
    %v1605 = vsub.f32 1.0, %v1604
    %v1606 = vmul.f32 %v1603, %v1605
    %v1607 = vadd.f32 %v1603, %v1606
    %vm1608 = vweird.f32 %v1207
    %vm1609 = vweird.f32 %v1603
    %vm1610 = vmor %vm1608, %vm1609
    %v1611 = vsel %vm1610, %v1603, %v1607
    %v1612 = vand.u32 2147483647, %v1207
    %vm1613 = vcmp.eq.f32.partialorder %v1612, 8.507059e+37
    %v1614 = vand.u32 %v1207, 2147483648
    %v1615 = vor.u32 1.1754944e-38, %v1614
    %v1616 = vsel %vm1613, %v1615, %v1611
    %v1617 = vrcp.pop %v1208
    %v1618 = vmul.f32 %v1208, %v1617
    %v1619 = vsub.f32 1.0, %v1618
    %v1620 = vmul.f32 %v1617, %v1619
    %v1621 = vadd.f32 %v1617, %v1620
    %vm1622 = vweird.f32 %v1208
    %vm1623 = vweird.f32 %v1617
    %vm1624 = vmor %vm1622, %vm1623
    %v1625 = vsel %vm1624, %v1617, %v1621
    %v1626 = vand.u32 2147483647, %v1208
    %vm1627 = vcmp.eq.f32.partialorder %v1626, 8.507059e+37
    %v1628 = vand.u32 %v1208, 2147483648
    %v1629 = vor.u32 1.1754944e-38, %v1628
    %v1630 = vsel %vm1627, %v1629, %v1625
    %v1631 = vrcp.pop %v1209
    %v1632 = vmul.f32 %v1209, %v1631
    %v1633 = vsub.f32 1.0, %v1632
    %v1634 = vmul.f32 %v1631, %v1633
    %v1635 = vadd.f32 %v1631, %v1634
    %vm1636 = vweird.f32 %v1209
    %vm1637 = vweird.f32 %v1631
    %vm1638 = vmor %vm1636, %vm1637
    %v1639 = vsel %vm1638, %v1631, %v1635
    %v1640 = vand.u32 2147483647, %v1209
    %vm1641 = vcmp.eq.f32.partialorder %v1640, 8.507059e+37
    %v1642 = vand.u32 %v1209, 2147483648
    %v1643 = vor.u32 1.1754944e-38, %v1642
    %v1644 = vsel %vm1641, %v1643, %v1639
    %v1645 = vrcp.pop %v1210
    %v1646 = vmul.f32 %v1210, %v1645
    %v1647 = vsub.f32 1.0, %v1646
    %v1648 = vmul.f32 %v1645, %v1647
    %v1649 = vadd.f32 %v1645, %v1648
    %vm1650 = vweird.f32 %v1210
    %vm1651 = vweird.f32 %v1645
    %vm1652 = vmor %vm1650, %vm1651
    %v1653 = vsel %vm1652, %v1645, %v1649
    %v1654 = vand.u32 2147483647, %v1210
    %vm1655 = vcmp.eq.f32.partialorder %v1654, 8.507059e+37
    %v1656 = vand.u32 %v1210, 2147483648
    %v1657 = vor.u32 1.1754944e-38, %v1656
    %v1658 = vsel %vm1655, %v1657, %v1653
    %v1659 = vmul.f32 %v572, %v1224
    %v1660 = vmul.f32 %v575, %v1238
    %v1661 = vmul.f32 %v578, %v1252
    %v1662 = vmul.f32 %v581, %v1266
    %v1663 = vmul.f32 %v584, %v1280
    %v1664 = vmul.f32 %v587, %v1294
    %v1665 = vmul.f32 %v590, %v1308
    %v1666 = vmul.f32 %v593, %v1322
    %v1667 = vmul.f32 %v596, %v1336
    %v1668 = vmul.f32 %v599, %v1350
    %v1669 = vmul.f32 %v602, %v1364
    %v1670 = vmul.f32 %v605, %v1378
    %v1671 = vmul.f32 %v608, %v1392
    %v1672 = vmul.f32 %v611, %v1406
    %v1673 = vmul.f32 %v614, %v1420
    %v1674 = vmul.f32 %v617, %v1434
    %v1675 = vmul.f32 %v620, %v1448
    %v1676 = vmul.f32 %v623, %v1462
    %v1677 = vmul.f32 %v626, %v1476
    %v1678 = vmul.f32 %v629, %v1490
    %v1679 = vmul.f32 %v632, %v1504
    %v1680 = vmul.f32 %v635, %v1518
    %v1681 = vmul.f32 %v638, %v1532
    %v1682 = vmul.f32 %v641, %v1546
    %v1683 = vmul.f32 %v644, %v1560
    %v1684 = vmul.f32 %v647, %v1574
    %v1685 = vmul.f32 %v650, %v1588
    %v1686 = vmul.f32 %v653, %v1602
    %v1687 = vmul.f32 %v656, %v1616
    %v1688 = vmul.f32 %v659, %v1630
    %v1689 = vmul.f32 %v662, %v1644
    %v1690 = vmul.f32 %v665, %v1658
    %v1691 = vperm.slane %v96, 0
    %v1692 = vmul.f32 %v1691, %v1659
    %v1693 = vmul.f32 %v1691, %v1660
    %v1694 = vmul.f32 %v1691, %v1661
    %v1695 = vmul.f32 %v1691, %v1662
    %v1696 = vmul.f32 %v1691, %v1663
    %v1697 = vmul.f32 %v1691, %v1664
    %v1698 = vmul.f32 %v1691, %v1665
    %v1699 = vmul.f32 %v1691, %v1666
    %v1700 = vmul.f32 %v1691, %v1667
    %v1701 = vmul.f32 %v1691, %v1668
    %v1702 = vmul.f32 %v1691, %v1669
    %v1703 = vmul.f32 %v1691, %v1670
    %v1704 = vmul.f32 %v1691, %v1671
    %v1705 = vmul.f32 %v1691, %v1672
    %v1706 = vmul.f32 %v1691, %v1673
    %v1707 = vmul.f32 %v1691, %v1674
    %v1708 = vmul.f32 %v1691, %v1675
    %v1709 = vmul.f32 %v1691, %v1676
    %v1710 = vmul.f32 %v1691, %v1677
    %v1711 = vmul.f32 %v1691, %v1678
    %v1712 = vmul.f32 %v1691, %v1679
    %v1713 = vmul.f32 %v1691, %v1680
    %v1714 = vmul.f32 %v1691, %v1681
    %v1715 = vmul.f32 %v1691, %v1682
    %v1716 = vmul.f32 %v1691, %v1683
    %v1717 = vmul.f32 %v1691, %v1684
    %v1718 = vmul.f32 %v1691, %v1685
    %v1719 = vmul.f32 %v1691, %v1686
    %v1720 = vmul.f32 %v1691, %v1687
    %v1721 = vmul.f32 %v1691, %v1688
    %v1722 = vmul.f32 %v1691, %v1689
    %v1723 = vmul.f32 %v1691, %v1690
    %v1724 = vand.u32 2147483647, %v1692
    %v1725 = vand.u32 2147483647, %v1693
    %v1726 = vand.u32 2147483647, %v1694
    %v1727 = vand.u32 2147483647, %v1695
    %v1728 = vand.u32 2147483647, %v1696
    %v1729 = vand.u32 2147483647, %v1697
    %v1730 = vand.u32 2147483647, %v1698
    %v1731 = vand.u32 2147483647, %v1699
    %v1732 = vand.u32 2147483647, %v1700
    %v1733 = vand.u32 2147483647, %v1701
    %v1734 = vand.u32 2147483647, %v1702
    %v1735 = vand.u32 2147483647, %v1703
    %v1736 = vand.u32 2147483647, %v1704
    %v1737 = vand.u32 2147483647, %v1705
    %v1738 = vand.u32 2147483647, %v1706
    %v1739 = vand.u32 2147483647, %v1707
    %v1740 = vand.u32 2147483647, %v1708
    %v1741 = vand.u32 2147483647, %v1709
    %v1742 = vand.u32 2147483647, %v1710
    %v1743 = vand.u32 2147483647, %v1711
    %v1744 = vand.u32 2147483647, %v1712
    %v1745 = vand.u32 2147483647, %v1713
    %v1746 = vand.u32 2147483647, %v1714
    %v1747 = vand.u32 2147483647, %v1715
    %v1748 = vand.u32 2147483647, %v1716
    %v1749 = vand.u32 2147483647, %v1717
    %v1750 = vand.u32 2147483647, %v1718
    %v1751 = vand.u32 2147483647, %v1719
    %v1752 = vand.u32 2147483647, %v1720
    %v1753 = vand.u32 2147483647, %v1721
    %v1754 = vand.u32 2147483647, %v1722
    %v1755 = vand.u32 2147483647, %v1723
    %v1756 = vsub.f32 0.0, %v1724
    %v1757 = vsub.f32 0.0, %v1725
    %v1758 = vsub.f32 0.0, %v1726
    %v1759 = vsub.f32 0.0, %v1727
    %v1760 = vsub.f32 0.0, %v1728
    %v1761 = vsub.f32 0.0, %v1729
    %v1762 = vsub.f32 0.0, %v1730
    %v1763 = vsub.f32 0.0, %v1731
    %v1764 = vsub.f32 0.0, %v1732
    %v1765 = vsub.f32 0.0, %v1733
    %v1766 = vsub.f32 0.0, %v1734
    %v1767 = vsub.f32 0.0, %v1735
    %v1768 = vsub.f32 0.0, %v1736
    %v1769 = vsub.f32 0.0, %v1737
    %v1770 = vsub.f32 0.0, %v1738
    %v1771 = vsub.f32 0.0, %v1739
    %v1772 = vsub.f32 0.0, %v1740
    %v1773 = vsub.f32 0.0, %v1741
    %v1774 = vsub.f32 0.0, %v1742
    %v1775 = vsub.f32 0.0, %v1743
    %v1776 = vsub.f32 0.0, %v1744
    %v1777 = vsub.f32 0.0, %v1745
    %v1778 = vsub.f32 0.0, %v1746
    %v1779 = vsub.f32 0.0, %v1747
    %v1780 = vsub.f32 0.0, %v1748
    %v1781 = vsub.f32 0.0, %v1749
    %v1782 = vsub.f32 0.0, %v1750
    %v1783 = vsub.f32 0.0, %v1751
    %v1784 = vsub.f32 0.0, %v1752
    %v1785 = vsub.f32 0.0, %v1753
    %v1786 = vsub.f32 0.0, %v1754
    %v1787 = vsub.f32 0.0, %v1755
    %v1788 = vmul.f32 %v1756, 1.442695
    %v1789 = vpow.pop %v1788
    %v1790 = vmul.f32 %v1757, 1.442695
    %v1791 = vpow.pop %v1790
    %v1792 = vmul.f32 %v1758, 1.442695
    %v1793 = vpow.pop %v1792
    %v1794 = vmul.f32 %v1759, 1.442695
    %v1795 = vpow.pop %v1794
    %v1796 = vmul.f32 %v1760, 1.442695
    %v1797 = vpow.pop %v1796
    %v1798 = vmul.f32 %v1761, 1.442695
    %v1799 = vpow.pop %v1798
    %v1800 = vmul.f32 %v1762, 1.442695
    %v1801 = vpow.pop %v1800
    %v1802 = vmul.f32 %v1763, 1.442695
    %v1803 = vpow.pop %v1802
    %v1804 = vmul.f32 %v1764, 1.442695
    %v1805 = vpow.pop %v1804
    %v1806 = vmul.f32 %v1765, 1.442695
    %v1807 = vpow.pop %v1806
    %v1808 = vmul.f32 %v1766, 1.442695
    %v1809 = vpow.pop %v1808
    %v1810 = vmul.f32 %v1767, 1.442695
    %v1811 = vpow.pop %v1810
    %v1812 = vmul.f32 %v1768, 1.442695
    %v1813 = vpow.pop %v1812
    %v1814 = vmul.f32 %v1769, 1.442695
    %v1815 = vpow.pop %v1814
    %v1816 = vmul.f32 %v1770, 1.442695
    %v1817 = vpow.pop %v1816
    %v1818 = vmul.f32 %v1771, 1.442695
    %v1819 = vpow.pop %v1818
    %v1820 = vmul.f32 %v1772, 1.442695
    %v1821 = vpow.pop %v1820
    %v1822 = vmul.f32 %v1773, 1.442695
    %v1823 = vpow.pop %v1822
    %v1824 = vmul.f32 %v1774, 1.442695
    %v1825 = vpow.pop %v1824
    %v1826 = vmul.f32 %v1775, 1.442695
    %v1827 = vpow.pop %v1826
    %v1828 = vmul.f32 %v1776, 1.442695
    %v1829 = vpow.pop %v1828
    %v1830 = vmul.f32 %v1777, 1.442695
    %v1831 = vpow.pop %v1830
    %v1832 = vmul.f32 %v1778, 1.442695
    %v1833 = vpow.pop %v1832
    %v1834 = vmul.f32 %v1779, 1.442695
    %v1835 = vpow.pop %v1834
    %v1836 = vmul.f32 %v1780, 1.442695
    %v1837 = vpow.pop %v1836
    %v1838 = vmul.f32 %v1781, 1.442695
    %v1839 = vpow.pop %v1838
    %v1840 = vmul.f32 %v1782, 1.442695
    %v1841 = vpow.pop %v1840
    %v1842 = vmul.f32 %v1783, 1.442695
    %v1843 = vpow.pop %v1842
    %v1844 = vmul.f32 %v1784, 1.442695
    %v1845 = vpow.pop %v1844
    %v1846 = vmul.f32 %v1785, 1.442695
    %v1847 = vpow.pop %v1846
    %v1848 = vmul.f32 %v1786, 1.442695
    %v1849 = vpow.pop %v1848
    %v1850 = vmul.f32 %v1787, 1.442695
    %v1851 = vpow.pop %v1850
    %v1852 = vadd.f32 %v1789, 1.0
    %v1853 = vlog2.pop %v1852
    %v1854 = vmul.f32 %v1853, 0.6931472
    %v1855 = vmul.f32 -0.5, %v1789
    %v1856 = vadd.f32 %v1855, 1.0
    %v1857 = vmul.f32 %v1856, %v1789
    %v1858 = vand.u32 2147483647, %v1789
    %vm1859 = vcmp.lt.f32.partialorder %v1858, 0.0004427343
    %v1860 = vsel %vm1859, %v1857, %v1854
    %v1861 = vadd.f32 %v1791, 1.0
    %v1862 = vlog2.pop %v1861
    %v1863 = vmul.f32 %v1862, 0.6931472
    %v1864 = vmul.f32 -0.5, %v1791
    %v1865 = vadd.f32 %v1864, 1.0
    %v1866 = vmul.f32 %v1865, %v1791
    %v1867 = vand.u32 2147483647, %v1791
    %vm1868 = vcmp.lt.f32.partialorder %v1867, 0.0004427343
    %v1869 = vsel %vm1868, %v1866, %v1863
    %v1870 = vadd.f32 %v1793, 1.0
    %v1871 = vlog2.pop %v1870
    %v1872 = vmul.f32 %v1871, 0.6931472
    %v1873 = vmul.f32 -0.5, %v1793
    %v1874 = vadd.f32 %v1873, 1.0
    %v1875 = vmul.f32 %v1874, %v1793
    %v1876 = vand.u32 2147483647, %v1793
    %vm1877 = vcmp.lt.f32.partialorder %v1876, 0.0004427343
    %v1878 = vsel %vm1877, %v1875, %v1872
    %v1879 = vadd.f32 %v1795, 1.0
    %v1880 = vlog2.pop %v1879
    %v1881 = vmul.f32 %v1880, 0.6931472
    %v1882 = vmul.f32 -0.5, %v1795
    %v1883 = vadd.f32 %v1882, 1.0
    %v1884 = vmul.f32 %v1883, %v1795
    %v1885 = vand.u32 2147483647, %v1795
    %vm1886 = vcmp.lt.f32.partialorder %v1885, 0.0004427343
    %v1887 = vsel %vm1886, %v1884, %v1881
    %v1888 = vadd.f32 %v1797, 1.0
    %v1889 = vlog2.pop %v1888
    %v1890 = vmul.f32 %v1889, 0.6931472
    %v1891 = vmul.f32 -0.5, %v1797
    %v1892 = vadd.f32 %v1891, 1.0
    %v1893 = vmul.f32 %v1892, %v1797
    %v1894 = vand.u32 2147483647, %v1797
    %vm1895 = vcmp.lt.f32.partialorder %v1894, 0.0004427343
    %v1896 = vsel %vm1895, %v1893, %v1890
    %v1897 = vadd.f32 %v1799, 1.0
    %v1898 = vlog2.pop %v1897
    %v1899 = vmul.f32 %v1898, 0.6931472
    %v1900 = vmul.f32 -0.5, %v1799
    %v1901 = vadd.f32 %v1900, 1.0
    %v1902 = vmul.f32 %v1901, %v1799
    %v1903 = vand.u32 2147483647, %v1799
    %vm1904 = vcmp.lt.f32.partialorder %v1903, 0.0004427343
    %v1905 = vsel %vm1904, %v1902, %v1899
    %v1906 = vadd.f32 %v1801, 1.0
    %v1907 = vlog2.pop %v1906
    %v1908 = vmul.f32 %v1907, 0.6931472
    %v1909 = vmul.f32 -0.5, %v1801
    %v1910 = vadd.f32 %v1909, 1.0
    %v1911 = vmul.f32 %v1910, %v1801
    %v1912 = vand.u32 2147483647, %v1801
    %vm1913 = vcmp.lt.f32.partialorder %v1912, 0.0004427343
    %v1914 = vsel %vm1913, %v1911, %v1908
    %v1915 = vadd.f32 %v1803, 1.0
    %v1916 = vlog2.pop %v1915
    %v1917 = vmul.f32 %v1916, 0.6931472
    %v1918 = vmul.f32 -0.5, %v1803
    %v1919 = vadd.f32 %v1918, 1.0
    %v1920 = vmul.f32 %v1919, %v1803
    %v1921 = vand.u32 2147483647, %v1803
    %vm1922 = vcmp.lt.f32.partialorder %v1921, 0.0004427343
    %v1923 = vsel %vm1922, %v1920, %v1917
    %v1924 = vadd.f32 %v1805, 1.0
    %v1925 = vlog2.pop %v1924
    %v1926 = vmul.f32 %v1925, 0.6931472
    %v1927 = vmul.f32 -0.5, %v1805
    %v1928 = vadd.f32 %v1927, 1.0
    %v1929 = vmul.f32 %v1928, %v1805
    %v1930 = vand.u32 2147483647, %v1805
    %vm1931 = vcmp.lt.f32.partialorder %v1930, 0.0004427343
    %v1932 = vsel %vm1931, %v1929, %v1926
    %v1933 = vadd.f32 %v1807, 1.0
    %v1934 = vlog2.pop %v1933
    %v1935 = vmul.f32 %v1934, 0.6931472
    %v1936 = vmul.f32 -0.5, %v1807
    %v1937 = vadd.f32 %v1936, 1.0
    %v1938 = vmul.f32 %v1937, %v1807
    %v1939 = vand.u32 2147483647, %v1807
    %vm1940 = vcmp.lt.f32.partialorder %v1939, 0.0004427343
    %v1941 = vsel %vm1940, %v1938, %v1935
    %v1942 = vadd.f32 %v1809, 1.0
    %v1943 = vlog2.pop %v1942
    %v1944 = vmul.f32 %v1943, 0.6931472
    %v1945 = vmul.f32 -0.5, %v1809
    %v1946 = vadd.f32 %v1945, 1.0
    %v1947 = vmul.f32 %v1946, %v1809
    %v1948 = vand.u32 2147483647, %v1809
    %vm1949 = vcmp.lt.f32.partialorder %v1948, 0.0004427343
    %v1950 = vsel %vm1949, %v1947, %v1944
    %v1951 = vadd.f32 %v1811, 1.0
    %v1952 = vlog2.pop %v1951
    %v1953 = vmul.f32 %v1952, 0.6931472
    %v1954 = vmul.f32 -0.5, %v1811
    %v1955 = vadd.f32 %v1954, 1.0
    %v1956 = vmul.f32 %v1955, %v1811
    %v1957 = vand.u32 2147483647, %v1811
    %vm1958 = vcmp.lt.f32.partialorder %v1957, 0.0004427343
    %v1959 = vsel %vm1958, %v1956, %v1953
    %v1960 = vadd.f32 %v1813, 1.0
    %v1961 = vlog2.pop %v1960
    %v1962 = vmul.f32 %v1961, 0.6931472
    %v1963 = vmul.f32 -0.5, %v1813
    %v1964 = vadd.f32 %v1963, 1.0
    %v1965 = vmul.f32 %v1964, %v1813
    %v1966 = vand.u32 2147483647, %v1813
    %vm1967 = vcmp.lt.f32.partialorder %v1966, 0.0004427343
    %v1968 = vsel %vm1967, %v1965, %v1962
    %v1969 = vadd.f32 %v1815, 1.0
    %v1970 = vlog2.pop %v1969
    %v1971 = vmul.f32 %v1970, 0.6931472
    %v1972 = vmul.f32 -0.5, %v1815
    %v1973 = vadd.f32 %v1972, 1.0
    %v1974 = vmul.f32 %v1973, %v1815
    %v1975 = vand.u32 2147483647, %v1815
    %vm1976 = vcmp.lt.f32.partialorder %v1975, 0.0004427343
    %v1977 = vsel %vm1976, %v1974, %v1971
    %v1978 = vadd.f32 %v1817, 1.0
    %v1979 = vlog2.pop %v1978
    %v1980 = vmul.f32 %v1979, 0.6931472
    %v1981 = vmul.f32 -0.5, %v1817
    %v1982 = vadd.f32 %v1981, 1.0
    %v1983 = vmul.f32 %v1982, %v1817
    %v1984 = vand.u32 2147483647, %v1817
    %vm1985 = vcmp.lt.f32.partialorder %v1984, 0.0004427343
    %v1986 = vsel %vm1985, %v1983, %v1980
    %v1987 = vadd.f32 %v1819, 1.0
    %v1988 = vlog2.pop %v1987
    %v1989 = vmul.f32 %v1988, 0.6931472
    %v1990 = vmul.f32 -0.5, %v1819
    %v1991 = vadd.f32 %v1990, 1.0
    %v1992 = vmul.f32 %v1991, %v1819
    %v1993 = vand.u32 2147483647, %v1819
    %vm1994 = vcmp.lt.f32.partialorder %v1993, 0.0004427343
    %v1995 = vsel %vm1994, %v1992, %v1989
    %v1996 = vadd.f32 %v1821, 1.0
    %v1997 = vlog2.pop %v1996
    %v1998 = vmul.f32 %v1997, 0.6931472
    %v1999 = vmul.f32 -0.5, %v1821
    %v2000 = vadd.f32 %v1999, 1.0
    %v2001 = vmul.f32 %v2000, %v1821
    %v2002 = vand.u32 2147483647, %v1821
    %vm2003 = vcmp.lt.f32.partialorder %v2002, 0.0004427343
    %v2004 = vsel %vm2003, %v2001, %v1998
    %v2005 = vadd.f32 %v1823, 1.0
    %v2006 = vlog2.pop %v2005
    %v2007 = vmul.f32 %v2006, 0.6931472
    %v2008 = vmul.f32 -0.5, %v1823
    %v2009 = vadd.f32 %v2008, 1.0
    %v2010 = vmul.f32 %v2009, %v1823
    %v2011 = vand.u32 2147483647, %v1823
    %vm2012 = vcmp.lt.f32.partialorder %v2011, 0.0004427343
    %v2013 = vsel %vm2012, %v2010, %v2007
    %v2014 = vadd.f32 %v1825, 1.0
    %v2015 = vlog2.pop %v2014
    %v2016 = vmul.f32 %v2015, 0.6931472
    %v2017 = vmul.f32 -0.5, %v1825
    %v2018 = vadd.f32 %v2017, 1.0
    %v2019 = vmul.f32 %v2018, %v1825
    %v2020 = vand.u32 2147483647, %v1825
    %vm2021 = vcmp.lt.f32.partialorder %v2020, 0.0004427343
    %v2022 = vsel %vm2021, %v2019, %v2016
    %v2023 = vadd.f32 %v1827, 1.0
    %v2024 = vlog2.pop %v2023
    %v2025 = vmul.f32 %v2024, 0.6931472
    %v2026 = vmul.f32 -0.5, %v1827
    %v2027 = vadd.f32 %v2026, 1.0
    %v2028 = vmul.f32 %v2027, %v1827
    %v2029 = vand.u32 2147483647, %v1827
    %vm2030 = vcmp.lt.f32.partialorder %v2029, 0.0004427343
    %v2031 = vsel %vm2030, %v2028, %v2025
    %v2032 = vadd.f32 %v1829, 1.0
    %v2033 = vlog2.pop %v2032
    %v2034 = vmul.f32 %v2033, 0.6931472
    %v2035 = vmul.f32 -0.5, %v1829
    %v2036 = vadd.f32 %v2035, 1.0
    %v2037 = vmul.f32 %v2036, %v1829
    %v2038 = vand.u32 2147483647, %v1829
    %vm2039 = vcmp.lt.f32.partialorder %v2038, 0.0004427343
    %v2040 = vsel %vm2039, %v2037, %v2034
    %v2041 = vadd.f32 %v1831, 1.0
    %v2042 = vlog2.pop %v2041
    %v2043 = vmul.f32 %v2042, 0.6931472
    %v2044 = vmul.f32 -0.5, %v1831
    %v2045 = vadd.f32 %v2044, 1.0
    %v2046 = vmul.f32 %v2045, %v1831
    %v2047 = vand.u32 2147483647, %v1831
    %vm2048 = vcmp.lt.f32.partialorder %v2047, 0.0004427343
    %v2049 = vsel %vm2048, %v2046, %v2043
    %v2050 = vadd.f32 %v1833, 1.0
    %v2051 = vlog2.pop %v2050
    %v2052 = vmul.f32 %v2051, 0.6931472
    %v2053 = vmul.f32 -0.5, %v1833
    %v2054 = vadd.f32 %v2053, 1.0
    %v2055 = vmul.f32 %v2054, %v1833
    %v2056 = vand.u32 2147483647, %v1833
    %vm2057 = vcmp.lt.f32.partialorder %v2056, 0.0004427343
    %v2058 = vsel %vm2057, %v2055, %v2052
    %v2059 = vadd.f32 %v1835, 1.0
    %v2060 = vlog2.pop %v2059
    %v2061 = vmul.f32 %v2060, 0.6931472
    %v2062 = vmul.f32 -0.5, %v1835
    %v2063 = vadd.f32 %v2062, 1.0
    %v2064 = vmul.f32 %v2063, %v1835
    %v2065 = vand.u32 2147483647, %v1835
    %vm2066 = vcmp.lt.f32.partialorder %v2065, 0.0004427343
    %v2067 = vsel %vm2066, %v2064, %v2061
    %v2068 = vadd.f32 %v1837, 1.0
    %v2069 = vlog2.pop %v2068
    %v2070 = vmul.f32 %v2069, 0.6931472
    %v2071 = vmul.f32 -0.5, %v1837
    %v2072 = vadd.f32 %v2071, 1.0
    %v2073 = vmul.f32 %v2072, %v1837
    %v2074 = vand.u32 2147483647, %v1837
    %vm2075 = vcmp.lt.f32.partialorder %v2074, 0.0004427343
    %v2076 = vsel %vm2075, %v2073, %v2070
    %v2077 = vadd.f32 %v1839, 1.0
    %v2078 = vlog2.pop %v2077
    %v2079 = vmul.f32 %v2078, 0.6931472
    %v2080 = vmul.f32 -0.5, %v1839
    %v2081 = vadd.f32 %v2080, 1.0
    %v2082 = vmul.f32 %v2081, %v1839
    %v2083 = vand.u32 2147483647, %v1839
    %vm2084 = vcmp.lt.f32.partialorder %v2083, 0.0004427343
    %v2085 = vsel %vm2084, %v2082, %v2079
    %v2086 = vadd.f32 %v1841, 1.0
    %v2087 = vlog2.pop %v2086
    %v2088 = vmul.f32 %v2087, 0.6931472
    %v2089 = vmul.f32 -0.5, %v1841
    %v2090 = vadd.f32 %v2089, 1.0
    %v2091 = vmul.f32 %v2090, %v1841
    %v2092 = vand.u32 2147483647, %v1841
    %vm2093 = vcmp.lt.f32.partialorder %v2092, 0.0004427343
    %v2094 = vsel %vm2093, %v2091, %v2088
    %v2095 = vadd.f32 %v1843, 1.0
    %v2096 = vlog2.pop %v2095
    %v2097 = vmul.f32 %v2096, 0.6931472
    %v2098 = vmul.f32 -0.5, %v1843
    %v2099 = vadd.f32 %v2098, 1.0
    %v2100 = vmul.f32 %v2099, %v1843
    %v2101 = vand.u32 2147483647, %v1843
    %vm2102 = vcmp.lt.f32.partialorder %v2101, 0.0004427343
    %v2103 = vsel %vm2102, %v2100, %v2097
    %v2104 = vadd.f32 %v1845, 1.0
    %v2105 = vlog2.pop %v2104
    %v2106 = vmul.f32 %v2105, 0.6931472
    %v2107 = vmul.f32 -0.5, %v1845
    %v2108 = vadd.f32 %v2107, 1.0
    %v2109 = vmul.f32 %v2108, %v1845
    %v2110 = vand.u32 2147483647, %v1845
    %vm2111 = vcmp.lt.f32.partialorder %v2110, 0.0004427343
    %v2112 = vsel %vm2111, %v2109, %v2106
    %v2113 = vadd.f32 %v1847, 1.0
    %v2114 = vlog2.pop %v2113
    %v2115 = vmul.f32 %v2114, 0.6931472
    %v2116 = vmul.f32 -0.5, %v1847
    %v2117 = vadd.f32 %v2116, 1.0
    %v2118 = vmul.f32 %v2117, %v1847
    %v2119 = vand.u32 2147483647, %v1847
    %vm2120 = vcmp.lt.f32.partialorder %v2119, 0.0004427343
    %v2121 = vsel %vm2120, %v2118, %v2115
    %v2122 = vadd.f32 %v1849, 1.0
    %v2123 = vlog2.pop %v2122
    %v2124 = vmul.f32 %v2123, 0.6931472
    %v2125 = vmul.f32 -0.5, %v1849
    %v2126 = vadd.f32 %v2125, 1.0
    %v2127 = vmul.f32 %v2126, %v1849
    %v2128 = vand.u32 2147483647, %v1849
    %vm2129 = vcmp.lt.f32.partialorder %v2128, 0.0004427343
    %v2130 = vsel %vm2129, %v2127, %v2124
    %v2131 = vadd.f32 %v1851, 1.0
    %v2132 = vlog2.pop %v2131
    %v2133 = vmul.f32 %v2132, 0.6931472
    %v2134 = vmul.f32 -0.5, %v1851
    %v2135 = vadd.f32 %v2134, 1.0
    %v2136 = vmul.f32 %v2135, %v1851
    %v2137 = vand.u32 2147483647, %v1851
    %vm2138 = vcmp.lt.f32.partialorder %v2137, 0.0004427343
    %v2139 = vsel %vm2138, %v2136, %v2133
    %v2140 = vmax.f32 %v1692, 0.0
    %v2141 = vmax.f32 %v1693, 0.0
    %v2142 = vmax.f32 %v1694, 0.0
    %v2143 = vmax.f32 %v1695, 0.0
    %v2144 = vmax.f32 %v1696, 0.0
    %v2145 = vmax.f32 %v1697, 0.0
    %v2146 = vmax.f32 %v1698, 0.0
    %v2147 = vmax.f32 %v1699, 0.0
    %v2148 = vmax.f32 %v1700, 0.0
    %v2149 = vmax.f32 %v1701, 0.0
    %v2150 = vmax.f32 %v1702, 0.0
    %v2151 = vmax.f32 %v1703, 0.0
    %v2152 = vmax.f32 %v1704, 0.0
    %v2153 = vmax.f32 %v1705, 0.0
    %v2154 = vmax.f32 %v1706, 0.0
    %v2155 = vmax.f32 %v1707, 0.0
    %v2156 = vmax.f32 %v1708, 0.0
    %v2157 = vmax.f32 %v1709, 0.0
    %v2158 = vmax.f32 %v1710, 0.0
    %v2159 = vmax.f32 %v1711, 0.0
    %v2160 = vmax.f32 %v1712, 0.0
    %v2161 = vmax.f32 %v1713, 0.0
    %v2162 = vmax.f32 %v1714, 0.0
    %v2163 = vmax.f32 %v1715, 0.0
    %v2164 = vmax.f32 %v1716, 0.0
    %v2165 = vmax.f32 %v1717, 0.0
    %v2166 = vmax.f32 %v1718, 0.0
    %v2167 = vmax.f32 %v1719, 0.0
    %v2168 = vmax.f32 %v1720, 0.0
    %v2169 = vmax.f32 %v1721, 0.0
    %v2170 = vmax.f32 %v1722, 0.0
    %v2171 = vmax.f32 %v1723, 0.0
    %v2172 = vadd.f32 %v1860, %v2140
    %v2173 = vadd.f32 %v1869, %v2141
    %v2174 = vadd.f32 %v1878, %v2142
    %v2175 = vadd.f32 %v1887, %v2143
    %v2176 = vadd.f32 %v1896, %v2144
    %v2177 = vadd.f32 %v1905, %v2145
    %v2178 = vadd.f32 %v1914, %v2146
    %v2179 = vadd.f32 %v1923, %v2147
    %v2180 = vadd.f32 %v1932, %v2148
    %v2181 = vadd.f32 %v1941, %v2149
    %v2182 = vadd.f32 %v1950, %v2150
    %v2183 = vadd.f32 %v1959, %v2151
    %v2184 = vadd.f32 %v1968, %v2152
    %v2185 = vadd.f32 %v1977, %v2153
    %v2186 = vadd.f32 %v1986, %v2154
    %v2187 = vadd.f32 %v1995, %v2155
    %v2188 = vadd.f32 %v2004, %v2156
    %v2189 = vadd.f32 %v2013, %v2157
    %v2190 = vadd.f32 %v2022, %v2158
    %v2191 = vadd.f32 %v2031, %v2159
    %v2192 = vadd.f32 %v2040, %v2160
    %v2193 = vadd.f32 %v2049, %v2161
    %v2194 = vadd.f32 %v2058, %v2162
    %v2195 = vadd.f32 %v2067, %v2163
    %v2196 = vadd.f32 %v2076, %v2164
    %v2197 = vadd.f32 %v2085, %v2165
    %v2198 = vadd.f32 %v2094, %v2166
    %v2199 = vadd.f32 %v2103, %v2167
    %v2200 = vadd.f32 %v2112, %v2168
    %v2201 = vadd.f32 %v2121, %v2169
    %v2202 = vadd.f32 %v2130, %v2170
    %v2203 = vadd.f32 %v2139, %v2171
    %v2204 = vld [vmem:[%s7] sm:$0xff]
    %v2205 = vld [vmem:[%s7 + $0x8] sm:$0xff]
    %v2206 = vld [vmem:[%s7 + $0x10] sm:$0xff]
    %v2207 = vld [vmem:[%s7 + $0x18] sm:$0xff]
    %v2208 = vld [vmem:[%s7 + $0x20] sm:$0xff]
    %v2209 = vld [vmem:[%s7 + $0x28] sm:$0xff]
    %v2210 = vld [vmem:[%s7 + $0x30] sm:$0xff]
    %v2211 = vld [vmem:[%s7 + $0x38] sm:$0xff]
    %v2212 = vld [vmem:[%s7 + $0x40] sm:$0xff]
    %v2213 = vld [vmem:[%s7 + $0x48] sm:$0xff]
    %v2214 = vld [vmem:[%s7 + $0x50] sm:$0xff]
    %v2215 = vld [vmem:[%s7 + $0x58] sm:$0xff]
    %v2216 = vld [vmem:[%s7 + $0x60] sm:$0xff]
    %v2217 = vld [vmem:[%s7 + $0x68] sm:$0xff]
    %v2218 = vld [vmem:[%s7 + $0x70] sm:$0xff]
    %v2219 = vld [vmem:[%s7 + $0x78] sm:$0xff]
    %2220 = vmatpush.msra.mxu0 %v2219
    %2221 = vmatpush.msra.mxu0 %v2218
    %2222 = vmatpush.msra.mxu0 %v2217
    %2223 = vmatpush.msra.mxu0 %v2216
    %2224 = vmatpush.msra.mxu0 %v2215
    %2225 = vmatpush.msra.mxu0 %v2214
    %2226 = vmatpush.msra.mxu0 %v2213
    %2227 = vmatpush.msra.mxu0 %v2212
    %2228 = vmatpush.msra.mxu0 %v2211
    %2229 = vmatpush.msra.mxu0 %v2210
    %2230 = vmatpush.msra.mxu0 %v2209
    %2231 = vmatpush.msra.mxu0 %v2208
    %2232 = vmatpush.msra.mxu0 %v2207
    %2233 = vmatpush.msra.mxu0 %v2206
    %2234 = vmatpush.msra.mxu0 %v2205
    %2235 = vmatpush.msra.mxu0 %v2204
    %2236 = vmatmul.f32.gmra.mxu0 %v2172
    %v2237 = vpop.f32.mrf.mxu0
    %v2238 = vadd.f32 0.0, %v2237
    %2239 = vmatmul.f32.gmra.mxu0 %v2173
    %v2240 = vpop.f32.mrf.mxu0
    %v2241 = vadd.f32 0.0, %v2240
    %2242 = vmatmul.f32.gmra.mxu0 %v2174
    %v2243 = vpop.f32.mrf.mxu0
    %v2244 = vadd.f32 0.0, %v2243
    %2245 = vmatmul.f32.gmra.mxu0 %v2175
    %v2246 = vpop.f32.mrf.mxu0
    %v2247 = vadd.f32 0.0, %v2246
    %2248 = vmatmul.f32.gmra.mxu0 %v2176
    %v2249 = vpop.f32.mrf.mxu0
    %v2250 = vadd.f32 0.0, %v2249
    %2251 = vmatmul.f32.gmra.mxu0 %v2177
    %v2252 = vpop.f32.mrf.mxu0
    %v2253 = vadd.f32 0.0, %v2252
    %2254 = vmatmul.f32.gmra.mxu0 %v2178
    %v2255 = vpop.f32.mrf.mxu0
    %v2256 = vadd.f32 0.0, %v2255
    %2257 = vmatmul.f32.gmra.mxu0 %v2179
    %v2258 = vpop.f32.mrf.mxu0
    %v2259 = vadd.f32 0.0, %v2258
    %2260 = vmatmul.f32.gmra.mxu0 %v2180
    %v2261 = vpop.f32.mrf.mxu0
    %v2262 = vadd.f32 0.0, %v2261
    %2263 = vmatmul.f32.gmra.mxu0 %v2181
    %v2264 = vpop.f32.mrf.mxu0
    %v2265 = vadd.f32 0.0, %v2264
    %2266 = vmatmul.f32.gmra.mxu0 %v2182
    %v2267 = vpop.f32.mrf.mxu0
    %v2268 = vadd.f32 0.0, %v2267
    %2269 = vmatmul.f32.gmra.mxu0 %v2183
    %v2270 = vpop.f32.mrf.mxu0
    %v2271 = vadd.f32 0.0, %v2270
    %2272 = vmatmul.f32.gmra.mxu0 %v2184
    %v2273 = vpop.f32.mrf.mxu0
    %v2274 = vadd.f32 0.0, %v2273
    %2275 = vmatmul.f32.gmra.mxu0 %v2185
    %v2276 = vpop.f32.mrf.mxu0
    %v2277 = vadd.f32 0.0, %v2276
    %2278 = vmatmul.f32.gmra.mxu0 %v2186
    %v2279 = vpop.f32.mrf.mxu0
    %v2280 = vadd.f32 0.0, %v2279
    %2281 = vmatmul.f32.gmra.mxu0 %v2187
    %v2282 = vpop.f32.mrf.mxu0
    %v2283 = vadd.f32 0.0, %v2282
    %2284 = vmatmul.f32.gmra.mxu0 %v2188
    %v2285 = vpop.f32.mrf.mxu0
    %v2286 = vadd.f32 0.0, %v2285
    %2287 = vmatmul.f32.gmra.mxu0 %v2189
    %v2288 = vpop.f32.mrf.mxu0
    %v2289 = vadd.f32 0.0, %v2288
    %2290 = vmatmul.f32.gmra.mxu0 %v2190
    %v2291 = vpop.f32.mrf.mxu0
    %v2292 = vadd.f32 0.0, %v2291
    %2293 = vmatmul.f32.gmra.mxu0 %v2191
    %v2294 = vpop.f32.mrf.mxu0
    %v2295 = vadd.f32 0.0, %v2294
    %2296 = vmatmul.f32.gmra.mxu0 %v2192
    %v2297 = vpop.f32.mrf.mxu0
    %v2298 = vadd.f32 0.0, %v2297
    %2299 = vmatmul.f32.gmra.mxu0 %v2193
    %v2300 = vpop.f32.mrf.mxu0
    %v2301 = vadd.f32 0.0, %v2300
    %2302 = vmatmul.f32.gmra.mxu0 %v2194
    %v2303 = vpop.f32.mrf.mxu0
    %v2304 = vadd.f32 0.0, %v2303
    %2305 = vmatmul.f32.gmra.mxu0 %v2195
    %v2306 = vpop.f32.mrf.mxu0
    %v2307 = vadd.f32 0.0, %v2306
    %2308 = vmatmul.f32.gmra.mxu0 %v2196
    %v2309 = vpop.f32.mrf.mxu0
    %v2310 = vadd.f32 0.0, %v2309
    %2311 = vmatmul.f32.gmra.mxu0 %v2197
    %v2312 = vpop.f32.mrf.mxu0
    %v2313 = vadd.f32 0.0, %v2312
    %2314 = vmatmul.f32.gmra.mxu0 %v2198
    %v2315 = vpop.f32.mrf.mxu0
    %v2316 = vadd.f32 0.0, %v2315
    %2317 = vmatmul.f32.gmra.mxu0 %v2199
    %v2318 = vpop.f32.mrf.mxu0
    %v2319 = vadd.f32 0.0, %v2318
    %2320 = vmatmul.f32.gmra.mxu0 %v2200
    %v2321 = vpop.f32.mrf.mxu0
    %v2322 = vadd.f32 0.0, %v2321
    %2323 = vmatmul.f32.gmra.mxu0 %v2201
    %v2324 = vpop.f32.mrf.mxu0
    %v2325 = vadd.f32 0.0, %v2324
    %2326 = vmatmul.f32.gmra.mxu0 %v2202
    %v2327 = vpop.f32.mrf.mxu0
    %v2328 = vadd.f32 0.0, %v2327
    %2329 = vmatmul.f32.gmra.mxu0 %v2203
    %v2330 = vpop.f32.mrf.mxu0
    %v2331 = vadd.f32 0.0, %v2330
    %2332 = vdwg.mxu0
    %v2333 = vmul.f32 %v2238, %v2238
    %v2334 = vmul.f32 %v2241, %v2241
    %v2335 = vmul.f32 %v2244, %v2244
    %v2336 = vmul.f32 %v2247, %v2247
    %v2337 = vmul.f32 %v2250, %v2250
    %v2338 = vmul.f32 %v2253, %v2253
    %v2339 = vmul.f32 %v2256, %v2256
    %v2340 = vmul.f32 %v2259, %v2259
    %v2341 = vmul.f32 %v2262, %v2262
    %v2342 = vmul.f32 %v2265, %v2265
    %v2343 = vmul.f32 %v2268, %v2268
    %v2344 = vmul.f32 %v2271, %v2271
    %v2345 = vmul.f32 %v2274, %v2274
    %v2346 = vmul.f32 %v2277, %v2277
    %v2347 = vmul.f32 %v2280, %v2280
    %v2348 = vmul.f32 %v2283, %v2283
    %v2349 = vmul.f32 %v2286, %v2286
    %v2350 = vmul.f32 %v2289, %v2289
    %v2351 = vmul.f32 %v2292, %v2292
    %v2352 = vmul.f32 %v2295, %v2295
    %v2353 = vmul.f32 %v2298, %v2298
    %v2354 = vmul.f32 %v2301, %v2301
    %v2355 = vmul.f32 %v2304, %v2304
    %v2356 = vmul.f32 %v2307, %v2307
    %v2357 = vmul.f32 %v2310, %v2310
    %v2358 = vmul.f32 %v2313, %v2313
    %v2359 = vmul.f32 %v2316, %v2316
    %v2360 = vmul.f32 %v2319, %v2319
    %v2361 = vmul.f32 %v2322, %v2322
    %v2362 = vmul.f32 %v2325, %v2325
    %v2363 = vmul.f32 %v2328, %v2328
    %v2364 = vmul.f32 %v2331, %v2331
    %2365 = vadd.xlane.f32.xlu0 %v2333
    %v2366 = vpop.xlane.xlu0 %2365
    %2367 = vadd.xlane.f32.xlu0 %v2334
    %v2368 = vpop.xlane.xlu0 %2367
    %2369 = vadd.xlane.f32.xlu0 %v2335
    %v2370 = vpop.xlane.xlu0 %2369
    %2371 = vadd.xlane.f32.xlu0 %v2336
    %v2372 = vpop.xlane.xlu0 %2371
    %2373 = vadd.xlane.f32.xlu0 %v2337
    %v2374 = vpop.xlane.xlu0 %2373
    %2375 = vadd.xlane.f32.xlu0 %v2338
    %v2376 = vpop.xlane.xlu0 %2375
    %2377 = vadd.xlane.f32.xlu0 %v2339
    %v2378 = vpop.xlane.xlu0 %2377
    %2379 = vadd.xlane.f32.xlu0 %v2340
    %v2380 = vpop.xlane.xlu0 %2379
    %2381 = vadd.xlane.f32.xlu0 %v2341
    %v2382 = vpop.xlane.xlu0 %2381
    %2383 = vadd.xlane.f32.xlu0 %v2342
    %v2384 = vpop.xlane.xlu0 %2383
    %2385 = vadd.xlane.f32.xlu0 %v2343
    %v2386 = vpop.xlane.xlu0 %2385
    %2387 = vadd.xlane.f32.xlu0 %v2344
    %v2388 = vpop.xlane.xlu0 %2387
    %2389 = vadd.xlane.f32.xlu0 %v2345
    %v2390 = vpop.xlane.xlu0 %2389
    %2391 = vadd.xlane.f32.xlu0 %v2346
    %v2392 = vpop.xlane.xlu0 %2391
    %2393 = vadd.xlane.f32.xlu0 %v2347
    %v2394 = vpop.xlane.xlu0 %2393
    %2395 = vadd.xlane.f32.xlu0 %v2348
    %v2396 = vpop.xlane.xlu0 %2395
    %2397 = vadd.xlane.f32.xlu0 %v2349
    %v2398 = vpop.xlane.xlu0 %2397
    %2399 = vadd.xlane.f32.xlu0 %v2350
    %v2400 = vpop.xlane.xlu0 %2399
    %2401 = vadd.xlane.f32.xlu0 %v2351
    %v2402 = vpop.xlane.xlu0 %2401
    %2403 = vadd.xlane.f32.xlu0 %v2352
    %v2404 = vpop.xlane.xlu0 %2403
    %2405 = vadd.xlane.f32.xlu0 %v2353
    %v2406 = vpop.xlane.xlu0 %2405
    %2407 = vadd.xlane.f32.xlu0 %v2354
    %v2408 = vpop.xlane.xlu0 %2407
    %2409 = vadd.xlane.f32.xlu0 %v2355
    %v2410 = vpop.xlane.xlu0 %2409
    %2411 = vadd.xlane.f32.xlu0 %v2356
    %v2412 = vpop.xlane.xlu0 %2411
    %2413 = vadd.xlane.f32.xlu0 %v2357
    %v2414 = vpop.xlane.xlu0 %2413
    %2415 = vadd.xlane.f32.xlu0 %v2358
    %v2416 = vpop.xlane.xlu0 %2415
    %2417 = vadd.xlane.f32.xlu0 %v2359
    %v2418 = vpop.xlane.xlu0 %2417
    %2419 = vadd.xlane.f32.xlu0 %v2360
    %v2420 = vpop.xlane.xlu0 %2419
    %2421 = vadd.xlane.f32.xlu0 %v2361
    %v2422 = vpop.xlane.xlu0 %2421
    %2423 = vadd.xlane.f32.xlu0 %v2362
    %v2424 = vpop.xlane.xlu0 %2423
    %2425 = vadd.xlane.f32.xlu0 %v2363
    %v2426 = vpop.xlane.xlu0 %2425
    %2427 = vadd.xlane.f32.xlu0 %v2364
    %v2428 = vpop.xlane.xlu0 %2427
    %v2429 = vrsqrt.pop %v2366
    %v2430 = vmul.f32 %v2429, %v2366
    %v2431 = vmul.f32 %v2430, %v2429
    %v2432 = vmul.f32 0.5, %v2431
    %v2433 = vsub.f32 1.5, %v2432
    %v2434 = vmul.f32 %v2429, %v2433
    %v2435 = vmul.f32 %v2366, %v2434
    %vm2436 = vcmp.eq.f32.partialorder %v2366, inf
    %v2437 = vsel %vm2436, %v2366, %v2435
    %vm2438 = vcmp.eq.f32.partialorder %v2366, 0.0
    %v2439 = vand.u32 %v2366, 2147483648
    %v2440 = vsel %vm2438, %v2439, %v2437
    %v2441 = vrsqrt.pop %v2368
    %v2442 = vmul.f32 %v2441, %v2368
    %v2443 = vmul.f32 %v2442, %v2441
    %v2444 = vmul.f32 0.5, %v2443
    %v2445 = vsub.f32 1.5, %v2444
    %v2446 = vmul.f32 %v2441, %v2445
    %v2447 = vmul.f32 %v2368, %v2446
    %vm2448 = vcmp.eq.f32.partialorder %v2368, inf
    %v2449 = vsel %vm2448, %v2368, %v2447
    %vm2450 = vcmp.eq.f32.partialorder %v2368, 0.0
    %v2451 = vand.u32 %v2368, 2147483648
    %v2452 = vsel %vm2450, %v2451, %v2449
    %v2453 = vrsqrt.pop %v2370
    %v2454 = vmul.f32 %v2453, %v2370
    %v2455 = vmul.f32 %v2454, %v2453
    %v2456 = vmul.f32 0.5, %v2455
    %v2457 = vsub.f32 1.5, %v2456
    %v2458 = vmul.f32 %v2453, %v2457
    %v2459 = vmul.f32 %v2370, %v2458
    %vm2460 = vcmp.eq.f32.partialorder %v2370, inf
    %v2461 = vsel %vm2460, %v2370, %v2459
    %vm2462 = vcmp.eq.f32.partialorder %v2370, 0.0
    %v2463 = vand.u32 %v2370, 2147483648
    %v2464 = vsel %vm2462, %v2463, %v2461
    %v2465 = vrsqrt.pop %v2372
    %v2466 = vmul.f32 %v2465, %v2372
    %v2467 = vmul.f32 %v2466, %v2465
    %v2468 = vmul.f32 0.5, %v2467
    %v2469 = vsub.f32 1.5, %v2468
    %v2470 = vmul.f32 %v2465, %v2469
    %v2471 = vmul.f32 %v2372, %v2470
    %vm2472 = vcmp.eq.f32.partialorder %v2372, inf
    %v2473 = vsel %vm2472, %v2372, %v2471
    %vm2474 = vcmp.eq.f32.partialorder %v2372, 0.0
    %v2475 = vand.u32 %v2372, 2147483648
    %v2476 = vsel %vm2474, %v2475, %v2473
    %v2477 = vrsqrt.pop %v2374
    %v2478 = vmul.f32 %v2477, %v2374
    %v2479 = vmul.f32 %v2478, %v2477
    %v2480 = vmul.f32 0.5, %v2479
    %v2481 = vsub.f32 1.5, %v2480
    %v2482 = vmul.f32 %v2477, %v2481
    %v2483 = vmul.f32 %v2374, %v2482
    %vm2484 = vcmp.eq.f32.partialorder %v2374, inf
    %v2485 = vsel %vm2484, %v2374, %v2483
    %vm2486 = vcmp.eq.f32.partialorder %v2374, 0.0
    %v2487 = vand.u32 %v2374, 2147483648
    %v2488 = vsel %vm2486, %v2487, %v2485
    %v2489 = vrsqrt.pop %v2376
    %v2490 = vmul.f32 %v2489, %v2376
    %v2491 = vmul.f32 %v2490, %v2489
    %v2492 = vmul.f32 0.5, %v2491
    %v2493 = vsub.f32 1.5, %v2492
    %v2494 = vmul.f32 %v2489, %v2493
    %v2495 = vmul.f32 %v2376, %v2494
    %vm2496 = vcmp.eq.f32.partialorder %v2376, inf
    %v2497 = vsel %vm2496, %v2376, %v2495
    %vm2498 = vcmp.eq.f32.partialorder %v2376, 0.0
    %v2499 = vand.u32 %v2376, 2147483648
    %v2500 = vsel %vm2498, %v2499, %v2497
    %v2501 = vrsqrt.pop %v2378
    %v2502 = vmul.f32 %v2501, %v2378
    %v2503 = vmul.f32 %v2502, %v2501
    %v2504 = vmul.f32 0.5, %v2503
    %v2505 = vsub.f32 1.5, %v2504
    %v2506 = vmul.f32 %v2501, %v2505
    %v2507 = vmul.f32 %v2378, %v2506
    %vm2508 = vcmp.eq.f32.partialorder %v2378, inf
    %v2509 = vsel %vm2508, %v2378, %v2507
    %vm2510 = vcmp.eq.f32.partialorder %v2378, 0.0
    %v2511 = vand.u32 %v2378, 2147483648
    %v2512 = vsel %vm2510, %v2511, %v2509
    %v2513 = vrsqrt.pop %v2380
    %v2514 = vmul.f32 %v2513, %v2380
    %v2515 = vmul.f32 %v2514, %v2513
    %v2516 = vmul.f32 0.5, %v2515
    %v2517 = vsub.f32 1.5, %v2516
    %v2518 = vmul.f32 %v2513, %v2517
    %v2519 = vmul.f32 %v2380, %v2518
    %vm2520 = vcmp.eq.f32.partialorder %v2380, inf
    %v2521 = vsel %vm2520, %v2380, %v2519
    %vm2522 = vcmp.eq.f32.partialorder %v2380, 0.0
    %v2523 = vand.u32 %v2380, 2147483648
    %v2524 = vsel %vm2522, %v2523, %v2521
    %v2525 = vrsqrt.pop %v2382
    %v2526 = vmul.f32 %v2525, %v2382
    %v2527 = vmul.f32 %v2526, %v2525
    %v2528 = vmul.f32 0.5, %v2527
    %v2529 = vsub.f32 1.5, %v2528
    %v2530 = vmul.f32 %v2525, %v2529
    %v2531 = vmul.f32 %v2382, %v2530
    %vm2532 = vcmp.eq.f32.partialorder %v2382, inf
    %v2533 = vsel %vm2532, %v2382, %v2531
    %vm2534 = vcmp.eq.f32.partialorder %v2382, 0.0
    %v2535 = vand.u32 %v2382, 2147483648
    %v2536 = vsel %vm2534, %v2535, %v2533
    %v2537 = vrsqrt.pop %v2384
    %v2538 = vmul.f32 %v2537, %v2384
    %v2539 = vmul.f32 %v2538, %v2537
    %v2540 = vmul.f32 0.5, %v2539
    %v2541 = vsub.f32 1.5, %v2540
    %v2542 = vmul.f32 %v2537, %v2541
    %v2543 = vmul.f32 %v2384, %v2542
    %vm2544 = vcmp.eq.f32.partialorder %v2384, inf
    %v2545 = vsel %vm2544, %v2384, %v2543
    %vm2546 = vcmp.eq.f32.partialorder %v2384, 0.0
    %v2547 = vand.u32 %v2384, 2147483648
    %v2548 = vsel %vm2546, %v2547, %v2545
    %v2549 = vrsqrt.pop %v2386
    %v2550 = vmul.f32 %v2549, %v2386
    %v2551 = vmul.f32 %v2550, %v2549
    %v2552 = vmul.f32 0.5, %v2551
    %v2553 = vsub.f32 1.5, %v2552
    %v2554 = vmul.f32 %v2549, %v2553
    %v2555 = vmul.f32 %v2386, %v2554
    %vm2556 = vcmp.eq.f32.partialorder %v2386, inf
    %v2557 = vsel %vm2556, %v2386, %v2555
    %vm2558 = vcmp.eq.f32.partialorder %v2386, 0.0
    %v2559 = vand.u32 %v2386, 2147483648
    %v2560 = vsel %vm2558, %v2559, %v2557
    %v2561 = vrsqrt.pop %v2388
    %v2562 = vmul.f32 %v2561, %v2388
    %v2563 = vmul.f32 %v2562, %v2561
    %v2564 = vmul.f32 0.5, %v2563
    %v2565 = vsub.f32 1.5, %v2564
    %v2566 = vmul.f32 %v2561, %v2565
    %v2567 = vmul.f32 %v2388, %v2566
    %vm2568 = vcmp.eq.f32.partialorder %v2388, inf
    %v2569 = vsel %vm2568, %v2388, %v2567
    %vm2570 = vcmp.eq.f32.partialorder %v2388, 0.0
    %v2571 = vand.u32 %v2388, 2147483648
    %v2572 = vsel %vm2570, %v2571, %v2569
    %v2573 = vrsqrt.pop %v2390
    %v2574 = vmul.f32 %v2573, %v2390
    %v2575 = vmul.f32 %v2574, %v2573
    %v2576 = vmul.f32 0.5, %v2575
    %v2577 = vsub.f32 1.5, %v2576
    %v2578 = vmul.f32 %v2573, %v2577
    %v2579 = vmul.f32 %v2390, %v2578
    %vm2580 = vcmp.eq.f32.partialorder %v2390, inf
    %v2581 = vsel %vm2580, %v2390, %v2579
    %vm2582 = vcmp.eq.f32.partialorder %v2390, 0.0
    %v2583 = vand.u32 %v2390, 2147483648
    %v2584 = vsel %vm2582, %v2583, %v2581
    %v2585 = vrsqrt.pop %v2392
    %v2586 = vmul.f32 %v2585, %v2392
    %v2587 = vmul.f32 %v2586, %v2585
    %v2588 = vmul.f32 0.5, %v2587
    %v2589 = vsub.f32 1.5, %v2588
    %v2590 = vmul.f32 %v2585, %v2589
    %v2591 = vmul.f32 %v2392, %v2590
    %vm2592 = vcmp.eq.f32.partialorder %v2392, inf
    %v2593 = vsel %vm2592, %v2392, %v2591
    %vm2594 = vcmp.eq.f32.partialorder %v2392, 0.0
    %v2595 = vand.u32 %v2392, 2147483648
    %v2596 = vsel %vm2594, %v2595, %v2593
    %v2597 = vrsqrt.pop %v2394
    %v2598 = vmul.f32 %v2597, %v2394
    %v2599 = vmul.f32 %v2598, %v2597
    %v2600 = vmul.f32 0.5, %v2599
    %v2601 = vsub.f32 1.5, %v2600
    %v2602 = vmul.f32 %v2597, %v2601
    %v2603 = vmul.f32 %v2394, %v2602
    %vm2604 = vcmp.eq.f32.partialorder %v2394, inf
    %v2605 = vsel %vm2604, %v2394, %v2603
    %vm2606 = vcmp.eq.f32.partialorder %v2394, 0.0
    %v2607 = vand.u32 %v2394, 2147483648
    %v2608 = vsel %vm2606, %v2607, %v2605
    %v2609 = vrsqrt.pop %v2396
    %v2610 = vmul.f32 %v2609, %v2396
    %v2611 = vmul.f32 %v2610, %v2609
    %v2612 = vmul.f32 0.5, %v2611
    %v2613 = vsub.f32 1.5, %v2612
    %v2614 = vmul.f32 %v2609, %v2613
    %v2615 = vmul.f32 %v2396, %v2614
    %vm2616 = vcmp.eq.f32.partialorder %v2396, inf
    %v2617 = vsel %vm2616, %v2396, %v2615
    %vm2618 = vcmp.eq.f32.partialorder %v2396, 0.0
    %v2619 = vand.u32 %v2396, 2147483648
    %v2620 = vsel %vm2618, %v2619, %v2617
    %v2621 = vrsqrt.pop %v2398
    %v2622 = vmul.f32 %v2621, %v2398
    %v2623 = vmul.f32 %v2622, %v2621
    %v2624 = vmul.f32 0.5, %v2623
    %v2625 = vsub.f32 1.5, %v2624
    %v2626 = vmul.f32 %v2621, %v2625
    %v2627 = vmul.f32 %v2398, %v2626
    %vm2628 = vcmp.eq.f32.partialorder %v2398, inf
    %v2629 = vsel %vm2628, %v2398, %v2627
    %vm2630 = vcmp.eq.f32.partialorder %v2398, 0.0
    %v2631 = vand.u32 %v2398, 2147483648
    %v2632 = vsel %vm2630, %v2631, %v2629
    %v2633 = vrsqrt.pop %v2400
    %v2634 = vmul.f32 %v2633, %v2400
    %v2635 = vmul.f32 %v2634, %v2633
    %v2636 = vmul.f32 0.5, %v2635
    %v2637 = vsub.f32 1.5, %v2636
    %v2638 = vmul.f32 %v2633, %v2637
    %v2639 = vmul.f32 %v2400, %v2638
    %vm2640 = vcmp.eq.f32.partialorder %v2400, inf
    %v2641 = vsel %vm2640, %v2400, %v2639
    %vm2642 = vcmp.eq.f32.partialorder %v2400, 0.0
    %v2643 = vand.u32 %v2400, 2147483648
    %v2644 = vsel %vm2642, %v2643, %v2641
    %v2645 = vrsqrt.pop %v2402
    %v2646 = vmul.f32 %v2645, %v2402
    %v2647 = vmul.f32 %v2646, %v2645
    %v2648 = vmul.f32 0.5, %v2647
    %v2649 = vsub.f32 1.5, %v2648
    %v2650 = vmul.f32 %v2645, %v2649
    %v2651 = vmul.f32 %v2402, %v2650
    %vm2652 = vcmp.eq.f32.partialorder %v2402, inf
    %v2653 = vsel %vm2652, %v2402, %v2651
    %vm2654 = vcmp.eq.f32.partialorder %v2402, 0.0
    %v2655 = vand.u32 %v2402, 2147483648
    %v2656 = vsel %vm2654, %v2655, %v2653
    %v2657 = vrsqrt.pop %v2404
    %v2658 = vmul.f32 %v2657, %v2404
    %v2659 = vmul.f32 %v2658, %v2657
    %v2660 = vmul.f32 0.5, %v2659
    %v2661 = vsub.f32 1.5, %v2660
    %v2662 = vmul.f32 %v2657, %v2661
    %v2663 = vmul.f32 %v2404, %v2662
    %vm2664 = vcmp.eq.f32.partialorder %v2404, inf
    %v2665 = vsel %vm2664, %v2404, %v2663
    %vm2666 = vcmp.eq.f32.partialorder %v2404, 0.0
    %v2667 = vand.u32 %v2404, 2147483648
    %v2668 = vsel %vm2666, %v2667, %v2665
    %v2669 = vrsqrt.pop %v2406
    %v2670 = vmul.f32 %v2669, %v2406
    %v2671 = vmul.f32 %v2670, %v2669
    %v2672 = vmul.f32 0.5, %v2671
    %v2673 = vsub.f32 1.5, %v2672
    %v2674 = vmul.f32 %v2669, %v2673
    %v2675 = vmul.f32 %v2406, %v2674
    %vm2676 = vcmp.eq.f32.partialorder %v2406, inf
    %v2677 = vsel %vm2676, %v2406, %v2675
    %vm2678 = vcmp.eq.f32.partialorder %v2406, 0.0
    %v2679 = vand.u32 %v2406, 2147483648
    %v2680 = vsel %vm2678, %v2679, %v2677
    %v2681 = vrsqrt.pop %v2408
    %v2682 = vmul.f32 %v2681, %v2408
    %v2683 = vmul.f32 %v2682, %v2681
    %v2684 = vmul.f32 0.5, %v2683
    %v2685 = vsub.f32 1.5, %v2684
    %v2686 = vmul.f32 %v2681, %v2685
    %v2687 = vmul.f32 %v2408, %v2686
    %vm2688 = vcmp.eq.f32.partialorder %v2408, inf
    %v2689 = vsel %vm2688, %v2408, %v2687
    %vm2690 = vcmp.eq.f32.partialorder %v2408, 0.0
    %v2691 = vand.u32 %v2408, 2147483648
    %v2692 = vsel %vm2690, %v2691, %v2689
    %v2693 = vrsqrt.pop %v2410
    %v2694 = vmul.f32 %v2693, %v2410
    %v2695 = vmul.f32 %v2694, %v2693
    %v2696 = vmul.f32 0.5, %v2695
    %v2697 = vsub.f32 1.5, %v2696
    %v2698 = vmul.f32 %v2693, %v2697
    %v2699 = vmul.f32 %v2410, %v2698
    %vm2700 = vcmp.eq.f32.partialorder %v2410, inf
    %v2701 = vsel %vm2700, %v2410, %v2699
    %vm2702 = vcmp.eq.f32.partialorder %v2410, 0.0
    %v2703 = vand.u32 %v2410, 2147483648
    %v2704 = vsel %vm2702, %v2703, %v2701
    %v2705 = vrsqrt.pop %v2412
    %v2706 = vmul.f32 %v2705, %v2412
    %v2707 = vmul.f32 %v2706, %v2705
    %v2708 = vmul.f32 0.5, %v2707
    %v2709 = vsub.f32 1.5, %v2708
    %v2710 = vmul.f32 %v2705, %v2709
    %v2711 = vmul.f32 %v2412, %v2710
    %vm2712 = vcmp.eq.f32.partialorder %v2412, inf
    %v2713 = vsel %vm2712, %v2412, %v2711
    %vm2714 = vcmp.eq.f32.partialorder %v2412, 0.0
    %v2715 = vand.u32 %v2412, 2147483648
    %v2716 = vsel %vm2714, %v2715, %v2713
    %v2717 = vrsqrt.pop %v2414
    %v2718 = vmul.f32 %v2717, %v2414
    %v2719 = vmul.f32 %v2718, %v2717
    %v2720 = vmul.f32 0.5, %v2719
    %v2721 = vsub.f32 1.5, %v2720
    %v2722 = vmul.f32 %v2717, %v2721
    %v2723 = vmul.f32 %v2414, %v2722
    %vm2724 = vcmp.eq.f32.partialorder %v2414, inf
    %v2725 = vsel %vm2724, %v2414, %v2723
    %vm2726 = vcmp.eq.f32.partialorder %v2414, 0.0
    %v2727 = vand.u32 %v2414, 2147483648
    %v2728 = vsel %vm2726, %v2727, %v2725
    %v2729 = vrsqrt.pop %v2416
    %v2730 = vmul.f32 %v2729, %v2416
    %v2731 = vmul.f32 %v2730, %v2729
    %v2732 = vmul.f32 0.5, %v2731
    %v2733 = vsub.f32 1.5, %v2732
    %v2734 = vmul.f32 %v2729, %v2733
    %v2735 = vmul.f32 %v2416, %v2734
    %vm2736 = vcmp.eq.f32.partialorder %v2416, inf
    %v2737 = vsel %vm2736, %v2416, %v2735
    %vm2738 = vcmp.eq.f32.partialorder %v2416, 0.0
    %v2739 = vand.u32 %v2416, 2147483648
    %v2740 = vsel %vm2738, %v2739, %v2737
    %v2741 = vrsqrt.pop %v2418
    %v2742 = vmul.f32 %v2741, %v2418
    %v2743 = vmul.f32 %v2742, %v2741
    %v2744 = vmul.f32 0.5, %v2743
    %v2745 = vsub.f32 1.5, %v2744
    %v2746 = vmul.f32 %v2741, %v2745
    %v2747 = vmul.f32 %v2418, %v2746
    %vm2748 = vcmp.eq.f32.partialorder %v2418, inf
    %v2749 = vsel %vm2748, %v2418, %v2747
    %vm2750 = vcmp.eq.f32.partialorder %v2418, 0.0
    %v2751 = vand.u32 %v2418, 2147483648
    %v2752 = vsel %vm2750, %v2751, %v2749
    %v2753 = vrsqrt.pop %v2420
    %v2754 = vmul.f32 %v2753, %v2420
    %v2755 = vmul.f32 %v2754, %v2753
    %v2756 = vmul.f32 0.5, %v2755
    %v2757 = vsub.f32 1.5, %v2756
    %v2758 = vmul.f32 %v2753, %v2757
    %v2759 = vmul.f32 %v2420, %v2758
    %vm2760 = vcmp.eq.f32.partialorder %v2420, inf
    %v2761 = vsel %vm2760, %v2420, %v2759
    %vm2762 = vcmp.eq.f32.partialorder %v2420, 0.0
    %v2763 = vand.u32 %v2420, 2147483648
    %v2764 = vsel %vm2762, %v2763, %v2761
    %v2765 = vrsqrt.pop %v2422
    %v2766 = vmul.f32 %v2765, %v2422
    %v2767 = vmul.f32 %v2766, %v2765
    %v2768 = vmul.f32 0.5, %v2767
    %v2769 = vsub.f32 1.5, %v2768
    %v2770 = vmul.f32 %v2765, %v2769
    %v2771 = vmul.f32 %v2422, %v2770
    %vm2772 = vcmp.eq.f32.partialorder %v2422, inf
    %v2773 = vsel %vm2772, %v2422, %v2771
    %vm2774 = vcmp.eq.f32.partialorder %v2422, 0.0
    %v2775 = vand.u32 %v2422, 2147483648
    %v2776 = vsel %vm2774, %v2775, %v2773
    %v2777 = vrsqrt.pop %v2424
    %v2778 = vmul.f32 %v2777, %v2424
    %v2779 = vmul.f32 %v2778, %v2777
    %v2780 = vmul.f32 0.5, %v2779
    %v2781 = vsub.f32 1.5, %v2780
    %v2782 = vmul.f32 %v2777, %v2781
    %v2783 = vmul.f32 %v2424, %v2782
    %vm2784 = vcmp.eq.f32.partialorder %v2424, inf
    %v2785 = vsel %vm2784, %v2424, %v2783
    %vm2786 = vcmp.eq.f32.partialorder %v2424, 0.0
    %v2787 = vand.u32 %v2424, 2147483648
    %v2788 = vsel %vm2786, %v2787, %v2785
    %v2789 = vrsqrt.pop %v2426
    %v2790 = vmul.f32 %v2789, %v2426
    %v2791 = vmul.f32 %v2790, %v2789
    %v2792 = vmul.f32 0.5, %v2791
    %v2793 = vsub.f32 1.5, %v2792
    %v2794 = vmul.f32 %v2789, %v2793
    %v2795 = vmul.f32 %v2426, %v2794
    %vm2796 = vcmp.eq.f32.partialorder %v2426, inf
    %v2797 = vsel %vm2796, %v2426, %v2795
    %vm2798 = vcmp.eq.f32.partialorder %v2426, 0.0
    %v2799 = vand.u32 %v2426, 2147483648
    %v2800 = vsel %vm2798, %v2799, %v2797
    %v2801 = vrsqrt.pop %v2428
    %v2802 = vmul.f32 %v2801, %v2428
    %v2803 = vmul.f32 %v2802, %v2801
    %v2804 = vmul.f32 0.5, %v2803
    %v2805 = vsub.f32 1.5, %v2804
    %v2806 = vmul.f32 %v2801, %v2805
    %v2807 = vmul.f32 %v2428, %v2806
    %vm2808 = vcmp.eq.f32.partialorder %v2428, inf
    %v2809 = vsel %vm2808, %v2428, %v2807
    %vm2810 = vcmp.eq.f32.partialorder %v2428, 0.0
    %v2811 = vand.u32 %v2428, 2147483648
    %v2812 = vsel %vm2810, %v2811, %v2809
    %v2813 = vmul.f32 %v2440, 0.17677669
    %v2814 = vmul.f32 %v2452, 0.17677669
    %v2815 = vmul.f32 %v2464, 0.17677669
    %v2816 = vmul.f32 %v2476, 0.17677669
    %v2817 = vmul.f32 %v2488, 0.17677669
    %v2818 = vmul.f32 %v2500, 0.17677669
    %v2819 = vmul.f32 %v2512, 0.17677669
    %v2820 = vmul.f32 %v2524, 0.17677669
    %v2821 = vmul.f32 %v2536, 0.17677669
    %v2822 = vmul.f32 %v2548, 0.17677669
    %v2823 = vmul.f32 %v2560, 0.17677669
    %v2824 = vmul.f32 %v2572, 0.17677669
    %v2825 = vmul.f32 %v2584, 0.17677669
    %v2826 = vmul.f32 %v2596, 0.17677669
    %v2827 = vmul.f32 %v2608, 0.17677669
    %v2828 = vmul.f32 %v2620, 0.17677669
    %v2829 = vmul.f32 %v2632, 0.17677669
    %v2830 = vmul.f32 %v2644, 0.17677669
    %v2831 = vmul.f32 %v2656, 0.17677669
    %v2832 = vmul.f32 %v2668, 0.17677669
    %v2833 = vmul.f32 %v2680, 0.17677669
    %v2834 = vmul.f32 %v2692, 0.17677669
    %v2835 = vmul.f32 %v2704, 0.17677669
    %v2836 = vmul.f32 %v2716, 0.17677669
    %v2837 = vmul.f32 %v2728, 0.17677669
    %v2838 = vmul.f32 %v2740, 0.17677669
    %v2839 = vmul.f32 %v2752, 0.17677669
    %v2840 = vmul.f32 %v2764, 0.17677669
    %v2841 = vmul.f32 %v2776, 0.17677669
    %v2842 = vmul.f32 %v2788, 0.17677669
    %v2843 = vmul.f32 %v2800, 0.17677669
    %v2844 = vmul.f32 %v2812, 0.17677669
    %v2845 = vadd.f32 %v2813, 1e-08
    %v2846 = vadd.f32 %v2814, 1e-08
    %v2847 = vadd.f32 %v2815, 1e-08
    %v2848 = vadd.f32 %v2816, 1e-08
    %v2849 = vadd.f32 %v2817, 1e-08
    %v2850 = vadd.f32 %v2818, 1e-08
    %v2851 = vadd.f32 %v2819, 1e-08
    %v2852 = vadd.f32 %v2820, 1e-08
    %v2853 = vadd.f32 %v2821, 1e-08
    %v2854 = vadd.f32 %v2822, 1e-08
    %v2855 = vadd.f32 %v2823, 1e-08
    %v2856 = vadd.f32 %v2824, 1e-08
    %v2857 = vadd.f32 %v2825, 1e-08
    %v2858 = vadd.f32 %v2826, 1e-08
    %v2859 = vadd.f32 %v2827, 1e-08
    %v2860 = vadd.f32 %v2828, 1e-08
    %v2861 = vadd.f32 %v2829, 1e-08
    %v2862 = vadd.f32 %v2830, 1e-08
    %v2863 = vadd.f32 %v2831, 1e-08
    %v2864 = vadd.f32 %v2832, 1e-08
    %v2865 = vadd.f32 %v2833, 1e-08
    %v2866 = vadd.f32 %v2834, 1e-08
    %v2867 = vadd.f32 %v2835, 1e-08
    %v2868 = vadd.f32 %v2836, 1e-08
    %v2869 = vadd.f32 %v2837, 1e-08
    %v2870 = vadd.f32 %v2838, 1e-08
    %v2871 = vadd.f32 %v2839, 1e-08
    %v2872 = vadd.f32 %v2840, 1e-08
    %v2873 = vadd.f32 %v2841, 1e-08
    %v2874 = vadd.f32 %v2842, 1e-08
    %v2875 = vadd.f32 %v2843, 1e-08
    %v2876 = vadd.f32 %v2844, 1e-08
    %v2877 = vrcp.pop %v2845
    %v2878 = vmul.f32 %v2845, %v2877
    %v2879 = vsub.f32 1.0, %v2878
    %v2880 = vmul.f32 %v2877, %v2879
    %v2881 = vadd.f32 %v2877, %v2880
    %vm2882 = vweird.f32 %v2845
    %vm2883 = vweird.f32 %v2877
    %vm2884 = vmor %vm2882, %vm2883
    %v2885 = vsel %vm2884, %v2877, %v2881
    %v2886 = vand.u32 2147483647, %v2845
    %vm2887 = vcmp.eq.f32.partialorder %v2886, 8.507059e+37
    %v2888 = vand.u32 %v2845, 2147483648
    %v2889 = vor.u32 1.1754944e-38, %v2888
    %v2890 = vsel %vm2887, %v2889, %v2885
    %v2891 = vrcp.pop %v2846
    %v2892 = vmul.f32 %v2846, %v2891
    %v2893 = vsub.f32 1.0, %v2892
    %v2894 = vmul.f32 %v2891, %v2893
    %v2895 = vadd.f32 %v2891, %v2894
    %vm2896 = vweird.f32 %v2846
    %vm2897 = vweird.f32 %v2891
    %vm2898 = vmor %vm2896, %vm2897
    %v2899 = vsel %vm2898, %v2891, %v2895
    %v2900 = vand.u32 2147483647, %v2846
    %vm2901 = vcmp.eq.f32.partialorder %v2900, 8.507059e+37
    %v2902 = vand.u32 %v2846, 2147483648
    %v2903 = vor.u32 1.1754944e-38, %v2902
    %v2904 = vsel %vm2901, %v2903, %v2899
    %v2905 = vrcp.pop %v2847
    %v2906 = vmul.f32 %v2847, %v2905
    %v2907 = vsub.f32 1.0, %v2906
    %v2908 = vmul.f32 %v2905, %v2907
    %v2909 = vadd.f32 %v2905, %v2908
    %vm2910 = vweird.f32 %v2847
    %vm2911 = vweird.f32 %v2905
    %vm2912 = vmor %vm2910, %vm2911
    %v2913 = vsel %vm2912, %v2905, %v2909
    %v2914 = vand.u32 2147483647, %v2847
    %vm2915 = vcmp.eq.f32.partialorder %v2914, 8.507059e+37
    %v2916 = vand.u32 %v2847, 2147483648
    %v2917 = vor.u32 1.1754944e-38, %v2916
    %v2918 = vsel %vm2915, %v2917, %v2913
    %v2919 = vrcp.pop %v2848
    %v2920 = vmul.f32 %v2848, %v2919
    %v2921 = vsub.f32 1.0, %v2920
    %v2922 = vmul.f32 %v2919, %v2921
    %v2923 = vadd.f32 %v2919, %v2922
    %vm2924 = vweird.f32 %v2848
    %vm2925 = vweird.f32 %v2919
    %vm2926 = vmor %vm2924, %vm2925
    %v2927 = vsel %vm2926, %v2919, %v2923
    %v2928 = vand.u32 2147483647, %v2848
    %vm2929 = vcmp.eq.f32.partialorder %v2928, 8.507059e+37
    %v2930 = vand.u32 %v2848, 2147483648
    %v2931 = vor.u32 1.1754944e-38, %v2930
    %v2932 = vsel %vm2929, %v2931, %v2927
    %v2933 = vrcp.pop %v2849
    %v2934 = vmul.f32 %v2849, %v2933
    %v2935 = vsub.f32 1.0, %v2934
    %v2936 = vmul.f32 %v2933, %v2935
    %v2937 = vadd.f32 %v2933, %v2936
    %vm2938 = vweird.f32 %v2849
    %vm2939 = vweird.f32 %v2933
    %vm2940 = vmor %vm2938, %vm2939
    %v2941 = vsel %vm2940, %v2933, %v2937
    %v2942 = vand.u32 2147483647, %v2849
    %vm2943 = vcmp.eq.f32.partialorder %v2942, 8.507059e+37
    %v2944 = vand.u32 %v2849, 2147483648
    %v2945 = vor.u32 1.1754944e-38, %v2944
    %v2946 = vsel %vm2943, %v2945, %v2941
    %v2947 = vrcp.pop %v2850
    %v2948 = vmul.f32 %v2850, %v2947
    %v2949 = vsub.f32 1.0, %v2948
    %v2950 = vmul.f32 %v2947, %v2949
    %v2951 = vadd.f32 %v2947, %v2950
    %vm2952 = vweird.f32 %v2850
    %vm2953 = vweird.f32 %v2947
    %vm2954 = vmor %vm2952, %vm2953
    %v2955 = vsel %vm2954, %v2947, %v2951
    %v2956 = vand.u32 2147483647, %v2850
    %vm2957 = vcmp.eq.f32.partialorder %v2956, 8.507059e+37
    %v2958 = vand.u32 %v2850, 2147483648
    %v2959 = vor.u32 1.1754944e-38, %v2958
    %v2960 = vsel %vm2957, %v2959, %v2955
    %v2961 = vrcp.pop %v2851
    %v2962 = vmul.f32 %v2851, %v2961
    %v2963 = vsub.f32 1.0, %v2962
    %v2964 = vmul.f32 %v2961, %v2963
    %v2965 = vadd.f32 %v2961, %v2964
    %vm2966 = vweird.f32 %v2851
    %vm2967 = vweird.f32 %v2961
    %vm2968 = vmor %vm2966, %vm2967
    %v2969 = vsel %vm2968, %v2961, %v2965
    %v2970 = vand.u32 2147483647, %v2851
    %vm2971 = vcmp.eq.f32.partialorder %v2970, 8.507059e+37
    %v2972 = vand.u32 %v2851, 2147483648
    %v2973 = vor.u32 1.1754944e-38, %v2972
    %v2974 = vsel %vm2971, %v2973, %v2969
    %v2975 = vrcp.pop %v2852
    %v2976 = vmul.f32 %v2852, %v2975
    %v2977 = vsub.f32 1.0, %v2976
    %v2978 = vmul.f32 %v2975, %v2977
    %v2979 = vadd.f32 %v2975, %v2978
    %vm2980 = vweird.f32 %v2852
    %vm2981 = vweird.f32 %v2975
    %vm2982 = vmor %vm2980, %vm2981
    %v2983 = vsel %vm2982, %v2975, %v2979
    %v2984 = vand.u32 2147483647, %v2852
    %vm2985 = vcmp.eq.f32.partialorder %v2984, 8.507059e+37
    %v2986 = vand.u32 %v2852, 2147483648
    %v2987 = vor.u32 1.1754944e-38, %v2986
    %v2988 = vsel %vm2985, %v2987, %v2983
    %v2989 = vrcp.pop %v2853
    %v2990 = vmul.f32 %v2853, %v2989
    %v2991 = vsub.f32 1.0, %v2990
    %v2992 = vmul.f32 %v2989, %v2991
    %v2993 = vadd.f32 %v2989, %v2992
    %vm2994 = vweird.f32 %v2853
    %vm2995 = vweird.f32 %v2989
    %vm2996 = vmor %vm2994, %vm2995
    %v2997 = vsel %vm2996, %v2989, %v2993
    %v2998 = vand.u32 2147483647, %v2853
    %vm2999 = vcmp.eq.f32.partialorder %v2998, 8.507059e+37
    %v3000 = vand.u32 %v2853, 2147483648
    %v3001 = vor.u32 1.1754944e-38, %v3000
    %v3002 = vsel %vm2999, %v3001, %v2997
    %v3003 = vrcp.pop %v2854
    %v3004 = vmul.f32 %v2854, %v3003
    %v3005 = vsub.f32 1.0, %v3004
    %v3006 = vmul.f32 %v3003, %v3005
    %v3007 = vadd.f32 %v3003, %v3006
    %vm3008 = vweird.f32 %v2854
    %vm3009 = vweird.f32 %v3003
    %vm3010 = vmor %vm3008, %vm3009
    %v3011 = vsel %vm3010, %v3003, %v3007
    %v3012 = vand.u32 2147483647, %v2854
    %vm3013 = vcmp.eq.f32.partialorder %v3012, 8.507059e+37
    %v3014 = vand.u32 %v2854, 2147483648
    %v3015 = vor.u32 1.1754944e-38, %v3014
    %v3016 = vsel %vm3013, %v3015, %v3011
    %v3017 = vrcp.pop %v2855
    %v3018 = vmul.f32 %v2855, %v3017
    %v3019 = vsub.f32 1.0, %v3018
    %v3020 = vmul.f32 %v3017, %v3019
    %v3021 = vadd.f32 %v3017, %v3020
    %vm3022 = vweird.f32 %v2855
    %vm3023 = vweird.f32 %v3017
    %vm3024 = vmor %vm3022, %vm3023
    %v3025 = vsel %vm3024, %v3017, %v3021
    %v3026 = vand.u32 2147483647, %v2855
    %vm3027 = vcmp.eq.f32.partialorder %v3026, 8.507059e+37
    %v3028 = vand.u32 %v2855, 2147483648
    %v3029 = vor.u32 1.1754944e-38, %v3028
    %v3030 = vsel %vm3027, %v3029, %v3025
    %v3031 = vrcp.pop %v2856
    %v3032 = vmul.f32 %v2856, %v3031
    %v3033 = vsub.f32 1.0, %v3032
    %v3034 = vmul.f32 %v3031, %v3033
    %v3035 = vadd.f32 %v3031, %v3034
    %vm3036 = vweird.f32 %v2856
    %vm3037 = vweird.f32 %v3031
    %vm3038 = vmor %vm3036, %vm3037
    %v3039 = vsel %vm3038, %v3031, %v3035
    %v3040 = vand.u32 2147483647, %v2856
    %vm3041 = vcmp.eq.f32.partialorder %v3040, 8.507059e+37
    %v3042 = vand.u32 %v2856, 2147483648
    %v3043 = vor.u32 1.1754944e-38, %v3042
    %v3044 = vsel %vm3041, %v3043, %v3039
    %v3045 = vrcp.pop %v2857
    %v3046 = vmul.f32 %v2857, %v3045
    %v3047 = vsub.f32 1.0, %v3046
    %v3048 = vmul.f32 %v3045, %v3047
    %v3049 = vadd.f32 %v3045, %v3048
    %vm3050 = vweird.f32 %v2857
    %vm3051 = vweird.f32 %v3045
    %vm3052 = vmor %vm3050, %vm3051
    %v3053 = vsel %vm3052, %v3045, %v3049
    %v3054 = vand.u32 2147483647, %v2857
    %vm3055 = vcmp.eq.f32.partialorder %v3054, 8.507059e+37
    %v3056 = vand.u32 %v2857, 2147483648
    %v3057 = vor.u32 1.1754944e-38, %v3056
    %v3058 = vsel %vm3055, %v3057, %v3053
    %v3059 = vrcp.pop %v2858
    %v3060 = vmul.f32 %v2858, %v3059
    %v3061 = vsub.f32 1.0, %v3060
    %v3062 = vmul.f32 %v3059, %v3061
    %v3063 = vadd.f32 %v3059, %v3062
    %vm3064 = vweird.f32 %v2858
    %vm3065 = vweird.f32 %v3059
    %vm3066 = vmor %vm3064, %vm3065
    %v3067 = vsel %vm3066, %v3059, %v3063
    %v3068 = vand.u32 2147483647, %v2858
    %vm3069 = vcmp.eq.f32.partialorder %v3068, 8.507059e+37
    %v3070 = vand.u32 %v2858, 2147483648
    %v3071 = vor.u32 1.1754944e-38, %v3070
    %v3072 = vsel %vm3069, %v3071, %v3067
    %v3073 = vrcp.pop %v2859
    %v3074 = vmul.f32 %v2859, %v3073
    %v3075 = vsub.f32 1.0, %v3074
    %v3076 = vmul.f32 %v3073, %v3075
    %v3077 = vadd.f32 %v3073, %v3076
    %vm3078 = vweird.f32 %v2859
    %vm3079 = vweird.f32 %v3073
    %vm3080 = vmor %vm3078, %vm3079
    %v3081 = vsel %vm3080, %v3073, %v3077
    %v3082 = vand.u32 2147483647, %v2859
    %vm3083 = vcmp.eq.f32.partialorder %v3082, 8.507059e+37
    %v3084 = vand.u32 %v2859, 2147483648
    %v3085 = vor.u32 1.1754944e-38, %v3084
    %v3086 = vsel %vm3083, %v3085, %v3081
    %v3087 = vrcp.pop %v2860
    %v3088 = vmul.f32 %v2860, %v3087
    %v3089 = vsub.f32 1.0, %v3088
    %v3090 = vmul.f32 %v3087, %v3089
    %v3091 = vadd.f32 %v3087, %v3090
    %vm3092 = vweird.f32 %v2860
    %vm3093 = vweird.f32 %v3087
    %vm3094 = vmor %vm3092, %vm3093
    %v3095 = vsel %vm3094, %v3087, %v3091
    %v3096 = vand.u32 2147483647, %v2860
    %vm3097 = vcmp.eq.f32.partialorder %v3096, 8.507059e+37
    %v3098 = vand.u32 %v2860, 2147483648
    %v3099 = vor.u32 1.1754944e-38, %v3098
    %v3100 = vsel %vm3097, %v3099, %v3095
    %v3101 = vrcp.pop %v2861
    %v3102 = vmul.f32 %v2861, %v3101
    %v3103 = vsub.f32 1.0, %v3102
    %v3104 = vmul.f32 %v3101, %v3103
    %v3105 = vadd.f32 %v3101, %v3104
    %vm3106 = vweird.f32 %v2861
    %vm3107 = vweird.f32 %v3101
    %vm3108 = vmor %vm3106, %vm3107
    %v3109 = vsel %vm3108, %v3101, %v3105
    %v3110 = vand.u32 2147483647, %v2861
    %vm3111 = vcmp.eq.f32.partialorder %v3110, 8.507059e+37
    %v3112 = vand.u32 %v2861, 2147483648
    %v3113 = vor.u32 1.1754944e-38, %v3112
    %v3114 = vsel %vm3111, %v3113, %v3109
    %v3115 = vrcp.pop %v2862
    %v3116 = vmul.f32 %v2862, %v3115
    %v3117 = vsub.f32 1.0, %v3116
    %v3118 = vmul.f32 %v3115, %v3117
    %v3119 = vadd.f32 %v3115, %v3118
    %vm3120 = vweird.f32 %v2862
    %vm3121 = vweird.f32 %v3115
    %vm3122 = vmor %vm3120, %vm3121
    %v3123 = vsel %vm3122, %v3115, %v3119
    %v3124 = vand.u32 2147483647, %v2862
    %vm3125 = vcmp.eq.f32.partialorder %v3124, 8.507059e+37
    %v3126 = vand.u32 %v2862, 2147483648
    %v3127 = vor.u32 1.1754944e-38, %v3126
    %v3128 = vsel %vm3125, %v3127, %v3123
    %v3129 = vrcp.pop %v2863
    %v3130 = vmul.f32 %v2863, %v3129
    %v3131 = vsub.f32 1.0, %v3130
    %v3132 = vmul.f32 %v3129, %v3131
    %v3133 = vadd.f32 %v3129, %v3132
    %vm3134 = vweird.f32 %v2863
    %vm3135 = vweird.f32 %v3129
    %vm3136 = vmor %vm3134, %vm3135
    %v3137 = vsel %vm3136, %v3129, %v3133
    %v3138 = vand.u32 2147483647, %v2863
    %vm3139 = vcmp.eq.f32.partialorder %v3138, 8.507059e+37
    %v3140 = vand.u32 %v2863, 2147483648
    %v3141 = vor.u32 1.1754944e-38, %v3140
    %v3142 = vsel %vm3139, %v3141, %v3137
    %v3143 = vrcp.pop %v2864
    %v3144 = vmul.f32 %v2864, %v3143
    %v3145 = vsub.f32 1.0, %v3144
    %v3146 = vmul.f32 %v3143, %v3145
    %v3147 = vadd.f32 %v3143, %v3146
    %vm3148 = vweird.f32 %v2864
    %vm3149 = vweird.f32 %v3143
    %vm3150 = vmor %vm3148, %vm3149
    %v3151 = vsel %vm3150, %v3143, %v3147
    %v3152 = vand.u32 2147483647, %v2864
    %vm3153 = vcmp.eq.f32.partialorder %v3152, 8.507059e+37
    %v3154 = vand.u32 %v2864, 2147483648
    %v3155 = vor.u32 1.1754944e-38, %v3154
    %v3156 = vsel %vm3153, %v3155, %v3151
    %v3157 = vrcp.pop %v2865
    %v3158 = vmul.f32 %v2865, %v3157
    %v3159 = vsub.f32 1.0, %v3158
    %v3160 = vmul.f32 %v3157, %v3159
    %v3161 = vadd.f32 %v3157, %v3160
    %vm3162 = vweird.f32 %v2865
    %vm3163 = vweird.f32 %v3157
    %vm3164 = vmor %vm3162, %vm3163
    %v3165 = vsel %vm3164, %v3157, %v3161
    %v3166 = vand.u32 2147483647, %v2865
    %vm3167 = vcmp.eq.f32.partialorder %v3166, 8.507059e+37
    %v3168 = vand.u32 %v2865, 2147483648
    %v3169 = vor.u32 1.1754944e-38, %v3168
    %v3170 = vsel %vm3167, %v3169, %v3165
    %v3171 = vrcp.pop %v2866
    %v3172 = vmul.f32 %v2866, %v3171
    %v3173 = vsub.f32 1.0, %v3172
    %v3174 = vmul.f32 %v3171, %v3173
    %v3175 = vadd.f32 %v3171, %v3174
    %vm3176 = vweird.f32 %v2866
    %vm3177 = vweird.f32 %v3171
    %vm3178 = vmor %vm3176, %vm3177
    %v3179 = vsel %vm3178, %v3171, %v3175
    %v3180 = vand.u32 2147483647, %v2866
    %vm3181 = vcmp.eq.f32.partialorder %v3180, 8.507059e+37
    %v3182 = vand.u32 %v2866, 2147483648
    %v3183 = vor.u32 1.1754944e-38, %v3182
    %v3184 = vsel %vm3181, %v3183, %v3179
    %v3185 = vrcp.pop %v2867
    %v3186 = vmul.f32 %v2867, %v3185
    %v3187 = vsub.f32 1.0, %v3186
    %v3188 = vmul.f32 %v3185, %v3187
    %v3189 = vadd.f32 %v3185, %v3188
    %vm3190 = vweird.f32 %v2867
    %vm3191 = vweird.f32 %v3185
    %vm3192 = vmor %vm3190, %vm3191
    %v3193 = vsel %vm3192, %v3185, %v3189
    %v3194 = vand.u32 2147483647, %v2867
    %vm3195 = vcmp.eq.f32.partialorder %v3194, 8.507059e+37
    %v3196 = vand.u32 %v2867, 2147483648
    %v3197 = vor.u32 1.1754944e-38, %v3196
    %v3198 = vsel %vm3195, %v3197, %v3193
    %v3199 = vrcp.pop %v2868
    %v3200 = vmul.f32 %v2868, %v3199
    %v3201 = vsub.f32 1.0, %v3200
    %v3202 = vmul.f32 %v3199, %v3201
    %v3203 = vadd.f32 %v3199, %v3202
    %vm3204 = vweird.f32 %v2868
    %vm3205 = vweird.f32 %v3199
    %vm3206 = vmor %vm3204, %vm3205
    %v3207 = vsel %vm3206, %v3199, %v3203
    %v3208 = vand.u32 2147483647, %v2868
    %vm3209 = vcmp.eq.f32.partialorder %v3208, 8.507059e+37
    %v3210 = vand.u32 %v2868, 2147483648
    %v3211 = vor.u32 1.1754944e-38, %v3210
    %v3212 = vsel %vm3209, %v3211, %v3207
    %v3213 = vrcp.pop %v2869
    %v3214 = vmul.f32 %v2869, %v3213
    %v3215 = vsub.f32 1.0, %v3214
    %v3216 = vmul.f32 %v3213, %v3215
    %v3217 = vadd.f32 %v3213, %v3216
    %vm3218 = vweird.f32 %v2869
    %vm3219 = vweird.f32 %v3213
    %vm3220 = vmor %vm3218, %vm3219
    %v3221 = vsel %vm3220, %v3213, %v3217
    %v3222 = vand.u32 2147483647, %v2869
    %vm3223 = vcmp.eq.f32.partialorder %v3222, 8.507059e+37
    %v3224 = vand.u32 %v2869, 2147483648
    %v3225 = vor.u32 1.1754944e-38, %v3224
    %v3226 = vsel %vm3223, %v3225, %v3221
    %v3227 = vrcp.pop %v2870
    %v3228 = vmul.f32 %v2870, %v3227
    %v3229 = vsub.f32 1.0, %v3228
    %v3230 = vmul.f32 %v3227, %v3229
    %v3231 = vadd.f32 %v3227, %v3230
    %vm3232 = vweird.f32 %v2870
    %vm3233 = vweird.f32 %v3227
    %vm3234 = vmor %vm3232, %vm3233
    %v3235 = vsel %vm3234, %v3227, %v3231
    %v3236 = vand.u32 2147483647, %v2870
    %vm3237 = vcmp.eq.f32.partialorder %v3236, 8.507059e+37
    %v3238 = vand.u32 %v2870, 2147483648
    %v3239 = vor.u32 1.1754944e-38, %v3238
    %v3240 = vsel %vm3237, %v3239, %v3235
    %v3241 = vrcp.pop %v2871
    %v3242 = vmul.f32 %v2871, %v3241
    %v3243 = vsub.f32 1.0, %v3242
    %v3244 = vmul.f32 %v3241, %v3243
    %v3245 = vadd.f32 %v3241, %v3244
    %vm3246 = vweird.f32 %v2871
    %vm3247 = vweird.f32 %v3241
    %vm3248 = vmor %vm3246, %vm3247
    %v3249 = vsel %vm3248, %v3241, %v3245
    %v3250 = vand.u32 2147483647, %v2871
    %vm3251 = vcmp.eq.f32.partialorder %v3250, 8.507059e+37
    %v3252 = vand.u32 %v2871, 2147483648
    %v3253 = vor.u32 1.1754944e-38, %v3252
    %v3254 = vsel %vm3251, %v3253, %v3249
    %v3255 = vrcp.pop %v2872
    %v3256 = vmul.f32 %v2872, %v3255
    %v3257 = vsub.f32 1.0, %v3256
    %v3258 = vmul.f32 %v3255, %v3257
    %v3259 = vadd.f32 %v3255, %v3258
    %vm3260 = vweird.f32 %v2872
    %vm3261 = vweird.f32 %v3255
    %vm3262 = vmor %vm3260, %vm3261
    %v3263 = vsel %vm3262, %v3255, %v3259
    %v3264 = vand.u32 2147483647, %v2872
    %vm3265 = vcmp.eq.f32.partialorder %v3264, 8.507059e+37
    %v3266 = vand.u32 %v2872, 2147483648
    %v3267 = vor.u32 1.1754944e-38, %v3266
    %v3268 = vsel %vm3265, %v3267, %v3263
    %v3269 = vrcp.pop %v2873
    %v3270 = vmul.f32 %v2873, %v3269
    %v3271 = vsub.f32 1.0, %v3270
    %v3272 = vmul.f32 %v3269, %v3271
    %v3273 = vadd.f32 %v3269, %v3272
    %vm3274 = vweird.f32 %v2873
    %vm3275 = vweird.f32 %v3269
    %vm3276 = vmor %vm3274, %vm3275
    %v3277 = vsel %vm3276, %v3269, %v3273
    %v3278 = vand.u32 2147483647, %v2873
    %vm3279 = vcmp.eq.f32.partialorder %v3278, 8.507059e+37
    %v3280 = vand.u32 %v2873, 2147483648
    %v3281 = vor.u32 1.1754944e-38, %v3280
    %v3282 = vsel %vm3279, %v3281, %v3277
    %v3283 = vrcp.pop %v2874
    %v3284 = vmul.f32 %v2874, %v3283
    %v3285 = vsub.f32 1.0, %v3284
    %v3286 = vmul.f32 %v3283, %v3285
    %v3287 = vadd.f32 %v3283, %v3286
    %vm3288 = vweird.f32 %v2874
    %vm3289 = vweird.f32 %v3283
    %vm3290 = vmor %vm3288, %vm3289
    %v3291 = vsel %vm3290, %v3283, %v3287
    %v3292 = vand.u32 2147483647, %v2874
    %vm3293 = vcmp.eq.f32.partialorder %v3292, 8.507059e+37
    %v3294 = vand.u32 %v2874, 2147483648
    %v3295 = vor.u32 1.1754944e-38, %v3294
    %v3296 = vsel %vm3293, %v3295, %v3291
    %v3297 = vrcp.pop %v2875
    %v3298 = vmul.f32 %v2875, %v3297
    %v3299 = vsub.f32 1.0, %v3298
    %v3300 = vmul.f32 %v3297, %v3299
    %v3301 = vadd.f32 %v3297, %v3300
    %vm3302 = vweird.f32 %v2875
    %vm3303 = vweird.f32 %v3297
    %vm3304 = vmor %vm3302, %vm3303
    %v3305 = vsel %vm3304, %v3297, %v3301
    %v3306 = vand.u32 2147483647, %v2875
    %vm3307 = vcmp.eq.f32.partialorder %v3306, 8.507059e+37
    %v3308 = vand.u32 %v2875, 2147483648
    %v3309 = vor.u32 1.1754944e-38, %v3308
    %v3310 = vsel %vm3307, %v3309, %v3305
    %v3311 = vrcp.pop %v2876
    %v3312 = vmul.f32 %v2876, %v3311
    %v3313 = vsub.f32 1.0, %v3312
    %v3314 = vmul.f32 %v3311, %v3313
    %v3315 = vadd.f32 %v3311, %v3314
    %vm3316 = vweird.f32 %v2876
    %vm3317 = vweird.f32 %v3311
    %vm3318 = vmor %vm3316, %vm3317
    %v3319 = vsel %vm3318, %v3311, %v3315
    %v3320 = vand.u32 2147483647, %v2876
    %vm3321 = vcmp.eq.f32.partialorder %v3320, 8.507059e+37
    %v3322 = vand.u32 %v2876, 2147483648
    %v3323 = vor.u32 1.1754944e-38, %v3322
    %v3324 = vsel %vm3321, %v3323, %v3319
    %v3325 = vmul.f32 %v2238, %v2890
    %v3326 = vmul.f32 %v2241, %v2904
    %v3327 = vmul.f32 %v2244, %v2918
    %v3328 = vmul.f32 %v2247, %v2932
    %v3329 = vmul.f32 %v2250, %v2946
    %v3330 = vmul.f32 %v2253, %v2960
    %v3331 = vmul.f32 %v2256, %v2974
    %v3332 = vmul.f32 %v2259, %v2988
    %v3333 = vmul.f32 %v2262, %v3002
    %v3334 = vmul.f32 %v2265, %v3016
    %v3335 = vmul.f32 %v2268, %v3030
    %v3336 = vmul.f32 %v2271, %v3044
    %v3337 = vmul.f32 %v2274, %v3058
    %v3338 = vmul.f32 %v2277, %v3072
    %v3339 = vmul.f32 %v2280, %v3086
    %v3340 = vmul.f32 %v2283, %v3100
    %v3341 = vmul.f32 %v2286, %v3114
    %v3342 = vmul.f32 %v2289, %v3128
    %v3343 = vmul.f32 %v2292, %v3142
    %v3344 = vmul.f32 %v2295, %v3156
    %v3345 = vmul.f32 %v2298, %v3170
    %v3346 = vmul.f32 %v2301, %v3184
    %v3347 = vmul.f32 %v2304, %v3198
    %v3348 = vmul.f32 %v2307, %v3212
    %v3349 = vmul.f32 %v2310, %v3226
    %v3350 = vmul.f32 %v2313, %v3240
    %v3351 = vmul.f32 %v2316, %v3254
    %v3352 = vmul.f32 %v2319, %v3268
    %v3353 = vmul.f32 %v2322, %v3282
    %v3354 = vmul.f32 %v2325, %v3296
    %v3355 = vmul.f32 %v2328, %v3310
    %v3356 = vmul.f32 %v2331, %v3324
    %v3357 = vperm.slane %v97, 0
    %v3358 = vmul.f32 %v3357, %v3325
    %v3359 = vmul.f32 %v3357, %v3326
    %v3360 = vmul.f32 %v3357, %v3327
    %v3361 = vmul.f32 %v3357, %v3328
    %v3362 = vmul.f32 %v3357, %v3329
    %v3363 = vmul.f32 %v3357, %v3330
    %v3364 = vmul.f32 %v3357, %v3331
    %v3365 = vmul.f32 %v3357, %v3332
    %v3366 = vmul.f32 %v3357, %v3333
    %v3367 = vmul.f32 %v3357, %v3334
    %v3368 = vmul.f32 %v3357, %v3335
    %v3369 = vmul.f32 %v3357, %v3336
    %v3370 = vmul.f32 %v3357, %v3337
    %v3371 = vmul.f32 %v3357, %v3338
    %v3372 = vmul.f32 %v3357, %v3339
    %v3373 = vmul.f32 %v3357, %v3340
    %v3374 = vmul.f32 %v3357, %v3341
    %v3375 = vmul.f32 %v3357, %v3342
    %v3376 = vmul.f32 %v3357, %v3343
    %v3377 = vmul.f32 %v3357, %v3344
    %v3378 = vmul.f32 %v3357, %v3345
    %v3379 = vmul.f32 %v3357, %v3346
    %v3380 = vmul.f32 %v3357, %v3347
    %v3381 = vmul.f32 %v3357, %v3348
    %v3382 = vmul.f32 %v3357, %v3349
    %v3383 = vmul.f32 %v3357, %v3350
    %v3384 = vmul.f32 %v3357, %v3351
    %v3385 = vmul.f32 %v3357, %v3352
    %v3386 = vmul.f32 %v3357, %v3353
    %v3387 = vmul.f32 %v3357, %v3354
    %v3388 = vmul.f32 %v3357, %v3355
    %v3389 = vmul.f32 %v3357, %v3356
    %v3390 = vand.u32 2147483647, %v3358
    %v3391 = vand.u32 2147483647, %v3359
    %v3392 = vand.u32 2147483647, %v3360
    %v3393 = vand.u32 2147483647, %v3361
    %v3394 = vand.u32 2147483647, %v3362
    %v3395 = vand.u32 2147483647, %v3363
    %v3396 = vand.u32 2147483647, %v3364
    %v3397 = vand.u32 2147483647, %v3365
    %v3398 = vand.u32 2147483647, %v3366
    %v3399 = vand.u32 2147483647, %v3367
    %v3400 = vand.u32 2147483647, %v3368
    %v3401 = vand.u32 2147483647, %v3369
    %v3402 = vand.u32 2147483647, %v3370
    %v3403 = vand.u32 2147483647, %v3371
    %v3404 = vand.u32 2147483647, %v3372
    %v3405 = vand.u32 2147483647, %v3373
    %v3406 = vand.u32 2147483647, %v3374
    %v3407 = vand.u32 2147483647, %v3375
    %v3408 = vand.u32 2147483647, %v3376
    %v3409 = vand.u32 2147483647, %v3377
    %v3410 = vand.u32 2147483647, %v3378
    %v3411 = vand.u32 2147483647, %v3379
    %v3412 = vand.u32 2147483647, %v3380
    %v3413 = vand.u32 2147483647, %v3381
    %v3414 = vand.u32 2147483647, %v3382
    %v3415 = vand.u32 2147483647, %v3383
    %v3416 = vand.u32 2147483647, %v3384
    %v3417 = vand.u32 2147483647, %v3385
    %v3418 = vand.u32 2147483647, %v3386
    %v3419 = vand.u32 2147483647, %v3387
    %v3420 = vand.u32 2147483647, %v3388
    %v3421 = vand.u32 2147483647, %v3389
    %v3422 = vsub.f32 0.0, %v3390
    %v3423 = vsub.f32 0.0, %v3391
    %v3424 = vsub.f32 0.0, %v3392
    %v3425 = vsub.f32 0.0, %v3393
    %v3426 = vsub.f32 0.0, %v3394
    %v3427 = vsub.f32 0.0, %v3395
    %v3428 = vsub.f32 0.0, %v3396
    %v3429 = vsub.f32 0.0, %v3397
    %v3430 = vsub.f32 0.0, %v3398
    %v3431 = vsub.f32 0.0, %v3399
    %v3432 = vsub.f32 0.0, %v3400
    %v3433 = vsub.f32 0.0, %v3401
    %v3434 = vsub.f32 0.0, %v3402
    %v3435 = vsub.f32 0.0, %v3403
    %v3436 = vsub.f32 0.0, %v3404
    %v3437 = vsub.f32 0.0, %v3405
    %v3438 = vsub.f32 0.0, %v3406
    %v3439 = vsub.f32 0.0, %v3407
    %v3440 = vsub.f32 0.0, %v3408
    %v3441 = vsub.f32 0.0, %v3409
    %v3442 = vsub.f32 0.0, %v3410
    %v3443 = vsub.f32 0.0, %v3411
    %v3444 = vsub.f32 0.0, %v3412
    %v3445 = vsub.f32 0.0, %v3413
    %v3446 = vsub.f32 0.0, %v3414
    %v3447 = vsub.f32 0.0, %v3415
    %v3448 = vsub.f32 0.0, %v3416
    %v3449 = vsub.f32 0.0, %v3417
    %v3450 = vsub.f32 0.0, %v3418
    %v3451 = vsub.f32 0.0, %v3419
    %v3452 = vsub.f32 0.0, %v3420
    %v3453 = vsub.f32 0.0, %v3421
    %v3454 = vmul.f32 %v3422, 1.442695
    %v3455 = vpow.pop %v3454
    %v3456 = vmul.f32 %v3423, 1.442695
    %v3457 = vpow.pop %v3456
    %v3458 = vmul.f32 %v3424, 1.442695
    %v3459 = vpow.pop %v3458
    %v3460 = vmul.f32 %v3425, 1.442695
    %v3461 = vpow.pop %v3460
    %v3462 = vmul.f32 %v3426, 1.442695
    %v3463 = vpow.pop %v3462
    %v3464 = vmul.f32 %v3427, 1.442695
    %v3465 = vpow.pop %v3464
    %v3466 = vmul.f32 %v3428, 1.442695
    %v3467 = vpow.pop %v3466
    %v3468 = vmul.f32 %v3429, 1.442695
    %v3469 = vpow.pop %v3468
    %v3470 = vmul.f32 %v3430, 1.442695
    %v3471 = vpow.pop %v3470
    %v3472 = vmul.f32 %v3431, 1.442695
    %v3473 = vpow.pop %v3472
    %v3474 = vmul.f32 %v3432, 1.442695
    %v3475 = vpow.pop %v3474
    %v3476 = vmul.f32 %v3433, 1.442695
    %v3477 = vpow.pop %v3476
    %v3478 = vmul.f32 %v3434, 1.442695
    %v3479 = vpow.pop %v3478
    %v3480 = vmul.f32 %v3435, 1.442695
    %v3481 = vpow.pop %v3480
    %v3482 = vmul.f32 %v3436, 1.442695
    %v3483 = vpow.pop %v3482
    %v3484 = vmul.f32 %v3437, 1.442695
    %v3485 = vpow.pop %v3484
    %v3486 = vmul.f32 %v3438, 1.442695
    %v3487 = vpow.pop %v3486
    %v3488 = vmul.f32 %v3439, 1.442695
    %v3489 = vpow.pop %v3488
    %v3490 = vmul.f32 %v3440, 1.442695
    %v3491 = vpow.pop %v3490
    %v3492 = vmul.f32 %v3441, 1.442695
    %v3493 = vpow.pop %v3492
    %v3494 = vmul.f32 %v3442, 1.442695
    %v3495 = vpow.pop %v3494
    %v3496 = vmul.f32 %v3443, 1.442695
    %v3497 = vpow.pop %v3496
    %v3498 = vmul.f32 %v3444, 1.442695
    %v3499 = vpow.pop %v3498
    %v3500 = vmul.f32 %v3445, 1.442695
    %v3501 = vpow.pop %v3500
    %v3502 = vmul.f32 %v3446, 1.442695
    %v3503 = vpow.pop %v3502
    %v3504 = vmul.f32 %v3447, 1.442695
    %v3505 = vpow.pop %v3504
    %v3506 = vmul.f32 %v3448, 1.442695
    %v3507 = vpow.pop %v3506
    %v3508 = vmul.f32 %v3449, 1.442695
    %v3509 = vpow.pop %v3508
    %v3510 = vmul.f32 %v3450, 1.442695
    %v3511 = vpow.pop %v3510
    %v3512 = vmul.f32 %v3451, 1.442695
    %v3513 = vpow.pop %v3512
    %v3514 = vmul.f32 %v3452, 1.442695
    %v3515 = vpow.pop %v3514
    %v3516 = vmul.f32 %v3453, 1.442695
    %v3517 = vpow.pop %v3516
    %v3518 = vadd.f32 %v3455, 1.0
    %v3519 = vlog2.pop %v3518
    %v3520 = vmul.f32 %v3519, 0.6931472
    %v3521 = vmul.f32 -0.5, %v3455
    %v3522 = vadd.f32 %v3521, 1.0
    %v3523 = vmul.f32 %v3522, %v3455
    %v3524 = vand.u32 2147483647, %v3455
    %vm3525 = vcmp.lt.f32.partialorder %v3524, 0.0004427343
    %v3526 = vsel %vm3525, %v3523, %v3520
    %v3527 = vadd.f32 %v3457, 1.0
    %v3528 = vlog2.pop %v3527
    %v3529 = vmul.f32 %v3528, 0.6931472
    %v3530 = vmul.f32 -0.5, %v3457
    %v3531 = vadd.f32 %v3530, 1.0
    %v3532 = vmul.f32 %v3531, %v3457
    %v3533 = vand.u32 2147483647, %v3457
    %vm3534 = vcmp.lt.f32.partialorder %v3533, 0.0004427343
    %v3535 = vsel %vm3534, %v3532, %v3529
    %v3536 = vadd.f32 %v3459, 1.0
    %v3537 = vlog2.pop %v3536
    %v3538 = vmul.f32 %v3537, 0.6931472
    %v3539 = vmul.f32 -0.5, %v3459
    %v3540 = vadd.f32 %v3539, 1.0
    %v3541 = vmul.f32 %v3540, %v3459
    %v3542 = vand.u32 2147483647, %v3459
    %vm3543 = vcmp.lt.f32.partialorder %v3542, 0.0004427343
    %v3544 = vsel %vm3543, %v3541, %v3538
    %v3545 = vadd.f32 %v3461, 1.0
    %v3546 = vlog2.pop %v3545
    %v3547 = vmul.f32 %v3546, 0.6931472
    %v3548 = vmul.f32 -0.5, %v3461
    %v3549 = vadd.f32 %v3548, 1.0
    %v3550 = vmul.f32 %v3549, %v3461
    %v3551 = vand.u32 2147483647, %v3461
    %vm3552 = vcmp.lt.f32.partialorder %v3551, 0.0004427343
    %v3553 = vsel %vm3552, %v3550, %v3547
    %v3554 = vadd.f32 %v3463, 1.0
    %v3555 = vlog2.pop %v3554
    %v3556 = vmul.f32 %v3555, 0.6931472
    %v3557 = vmul.f32 -0.5, %v3463
    %v3558 = vadd.f32 %v3557, 1.0
    %v3559 = vmul.f32 %v3558, %v3463
    %v3560 = vand.u32 2147483647, %v3463
    %vm3561 = vcmp.lt.f32.partialorder %v3560, 0.0004427343
    %v3562 = vsel %vm3561, %v3559, %v3556
    %v3563 = vadd.f32 %v3465, 1.0
    %v3564 = vlog2.pop %v3563
    %v3565 = vmul.f32 %v3564, 0.6931472
    %v3566 = vmul.f32 -0.5, %v3465
    %v3567 = vadd.f32 %v3566, 1.0
    %v3568 = vmul.f32 %v3567, %v3465
    %v3569 = vand.u32 2147483647, %v3465
    %vm3570 = vcmp.lt.f32.partialorder %v3569, 0.0004427343
    %v3571 = vsel %vm3570, %v3568, %v3565
    %v3572 = vadd.f32 %v3467, 1.0
    %v3573 = vlog2.pop %v3572
    %v3574 = vmul.f32 %v3573, 0.6931472
    %v3575 = vmul.f32 -0.5, %v3467
    %v3576 = vadd.f32 %v3575, 1.0
    %v3577 = vmul.f32 %v3576, %v3467
    %v3578 = vand.u32 2147483647, %v3467
    %vm3579 = vcmp.lt.f32.partialorder %v3578, 0.0004427343
    %v3580 = vsel %vm3579, %v3577, %v3574
    %v3581 = vadd.f32 %v3469, 1.0
    %v3582 = vlog2.pop %v3581
    %v3583 = vmul.f32 %v3582, 0.6931472
    %v3584 = vmul.f32 -0.5, %v3469
    %v3585 = vadd.f32 %v3584, 1.0
    %v3586 = vmul.f32 %v3585, %v3469
    %v3587 = vand.u32 2147483647, %v3469
    %vm3588 = vcmp.lt.f32.partialorder %v3587, 0.0004427343
    %v3589 = vsel %vm3588, %v3586, %v3583
    %v3590 = vadd.f32 %v3471, 1.0
    %v3591 = vlog2.pop %v3590
    %v3592 = vmul.f32 %v3591, 0.6931472
    %v3593 = vmul.f32 -0.5, %v3471
    %v3594 = vadd.f32 %v3593, 1.0
    %v3595 = vmul.f32 %v3594, %v3471
    %v3596 = vand.u32 2147483647, %v3471
    %vm3597 = vcmp.lt.f32.partialorder %v3596, 0.0004427343
    %v3598 = vsel %vm3597, %v3595, %v3592
    %v3599 = vadd.f32 %v3473, 1.0
    %v3600 = vlog2.pop %v3599
    %v3601 = vmul.f32 %v3600, 0.6931472
    %v3602 = vmul.f32 -0.5, %v3473
    %v3603 = vadd.f32 %v3602, 1.0
    %v3604 = vmul.f32 %v3603, %v3473
    %v3605 = vand.u32 2147483647, %v3473
    %vm3606 = vcmp.lt.f32.partialorder %v3605, 0.0004427343
    %v3607 = vsel %vm3606, %v3604, %v3601
    %v3608 = vadd.f32 %v3475, 1.0
    %v3609 = vlog2.pop %v3608
    %v3610 = vmul.f32 %v3609, 0.6931472
    %v3611 = vmul.f32 -0.5, %v3475
    %v3612 = vadd.f32 %v3611, 1.0
    %v3613 = vmul.f32 %v3612, %v3475
    %v3614 = vand.u32 2147483647, %v3475
    %vm3615 = vcmp.lt.f32.partialorder %v3614, 0.0004427343
    %v3616 = vsel %vm3615, %v3613, %v3610
    %v3617 = vadd.f32 %v3477, 1.0
    %v3618 = vlog2.pop %v3617
    %v3619 = vmul.f32 %v3618, 0.6931472
    %v3620 = vmul.f32 -0.5, %v3477
    %v3621 = vadd.f32 %v3620, 1.0
    %v3622 = vmul.f32 %v3621, %v3477
    %v3623 = vand.u32 2147483647, %v3477
    %vm3624 = vcmp.lt.f32.partialorder %v3623, 0.0004427343
    %v3625 = vsel %vm3624, %v3622, %v3619
    %v3626 = vadd.f32 %v3479, 1.0
    %v3627 = vlog2.pop %v3626
    %v3628 = vmul.f32 %v3627, 0.6931472
    %v3629 = vmul.f32 -0.5, %v3479
    %v3630 = vadd.f32 %v3629, 1.0
    %v3631 = vmul.f32 %v3630, %v3479
    %v3632 = vand.u32 2147483647, %v3479
    %vm3633 = vcmp.lt.f32.partialorder %v3632, 0.0004427343
    %v3634 = vsel %vm3633, %v3631, %v3628
    %v3635 = vadd.f32 %v3481, 1.0
    %v3636 = vlog2.pop %v3635
    %v3637 = vmul.f32 %v3636, 0.6931472
    %v3638 = vmul.f32 -0.5, %v3481
    %v3639 = vadd.f32 %v3638, 1.0
    %v3640 = vmul.f32 %v3639, %v3481
    %v3641 = vand.u32 2147483647, %v3481
    %vm3642 = vcmp.lt.f32.partialorder %v3641, 0.0004427343
    %v3643 = vsel %vm3642, %v3640, %v3637
    %v3644 = vadd.f32 %v3483, 1.0
    %v3645 = vlog2.pop %v3644
    %v3646 = vmul.f32 %v3645, 0.6931472
    %v3647 = vmul.f32 -0.5, %v3483
    %v3648 = vadd.f32 %v3647, 1.0
    %v3649 = vmul.f32 %v3648, %v3483
    %v3650 = vand.u32 2147483647, %v3483
    %vm3651 = vcmp.lt.f32.partialorder %v3650, 0.0004427343
    %v3652 = vsel %vm3651, %v3649, %v3646
    %v3653 = vadd.f32 %v3485, 1.0
    %v3654 = vlog2.pop %v3653
    %v3655 = vmul.f32 %v3654, 0.6931472
    %v3656 = vmul.f32 -0.5, %v3485
    %v3657 = vadd.f32 %v3656, 1.0
    %v3658 = vmul.f32 %v3657, %v3485
    %v3659 = vand.u32 2147483647, %v3485
    %vm3660 = vcmp.lt.f32.partialorder %v3659, 0.0004427343
    %v3661 = vsel %vm3660, %v3658, %v3655
    %v3662 = vadd.f32 %v3487, 1.0
    %v3663 = vlog2.pop %v3662
    %v3664 = vmul.f32 %v3663, 0.6931472
    %v3665 = vmul.f32 -0.5, %v3487
    %v3666 = vadd.f32 %v3665, 1.0
    %v3667 = vmul.f32 %v3666, %v3487
    %v3668 = vand.u32 2147483647, %v3487
    %vm3669 = vcmp.lt.f32.partialorder %v3668, 0.0004427343
    %v3670 = vsel %vm3669, %v3667, %v3664
    %v3671 = vadd.f32 %v3489, 1.0
    %v3672 = vlog2.pop %v3671
    %v3673 = vmul.f32 %v3672, 0.6931472
    %v3674 = vmul.f32 -0.5, %v3489
    %v3675 = vadd.f32 %v3674, 1.0
    %v3676 = vmul.f32 %v3675, %v3489
    %v3677 = vand.u32 2147483647, %v3489
    %vm3678 = vcmp.lt.f32.partialorder %v3677, 0.0004427343
    %v3679 = vsel %vm3678, %v3676, %v3673
    %v3680 = vadd.f32 %v3491, 1.0
    %v3681 = vlog2.pop %v3680
    %v3682 = vmul.f32 %v3681, 0.6931472
    %v3683 = vmul.f32 -0.5, %v3491
    %v3684 = vadd.f32 %v3683, 1.0
    %v3685 = vmul.f32 %v3684, %v3491
    %v3686 = vand.u32 2147483647, %v3491
    %vm3687 = vcmp.lt.f32.partialorder %v3686, 0.0004427343
    %v3688 = vsel %vm3687, %v3685, %v3682
    %v3689 = vadd.f32 %v3493, 1.0
    %v3690 = vlog2.pop %v3689
    %v3691 = vmul.f32 %v3690, 0.6931472
    %v3692 = vmul.f32 -0.5, %v3493
    %v3693 = vadd.f32 %v3692, 1.0
    %v3694 = vmul.f32 %v3693, %v3493
    %v3695 = vand.u32 2147483647, %v3493
    %vm3696 = vcmp.lt.f32.partialorder %v3695, 0.0004427343
    %v3697 = vsel %vm3696, %v3694, %v3691
    %v3698 = vadd.f32 %v3495, 1.0
    %v3699 = vlog2.pop %v3698
    %v3700 = vmul.f32 %v3699, 0.6931472
    %v3701 = vmul.f32 -0.5, %v3495
    %v3702 = vadd.f32 %v3701, 1.0
    %v3703 = vmul.f32 %v3702, %v3495
    %v3704 = vand.u32 2147483647, %v3495
    %vm3705 = vcmp.lt.f32.partialorder %v3704, 0.0004427343
    %v3706 = vsel %vm3705, %v3703, %v3700
    %v3707 = vadd.f32 %v3497, 1.0
    %v3708 = vlog2.pop %v3707
    %v3709 = vmul.f32 %v3708, 0.6931472
    %v3710 = vmul.f32 -0.5, %v3497
    %v3711 = vadd.f32 %v3710, 1.0
    %v3712 = vmul.f32 %v3711, %v3497
    %v3713 = vand.u32 2147483647, %v3497
    %vm3714 = vcmp.lt.f32.partialorder %v3713, 0.0004427343
    %v3715 = vsel %vm3714, %v3712, %v3709
    %v3716 = vadd.f32 %v3499, 1.0
    %v3717 = vlog2.pop %v3716
    %v3718 = vmul.f32 %v3717, 0.6931472
    %v3719 = vmul.f32 -0.5, %v3499
    %v3720 = vadd.f32 %v3719, 1.0
    %v3721 = vmul.f32 %v3720, %v3499
    %v3722 = vand.u32 2147483647, %v3499
    %vm3723 = vcmp.lt.f32.partialorder %v3722, 0.0004427343
    %v3724 = vsel %vm3723, %v3721, %v3718
    %v3725 = vadd.f32 %v3501, 1.0
    %v3726 = vlog2.pop %v3725
    %v3727 = vmul.f32 %v3726, 0.6931472
    %v3728 = vmul.f32 -0.5, %v3501
    %v3729 = vadd.f32 %v3728, 1.0
    %v3730 = vmul.f32 %v3729, %v3501
    %v3731 = vand.u32 2147483647, %v3501
    %vm3732 = vcmp.lt.f32.partialorder %v3731, 0.0004427343
    %v3733 = vsel %vm3732, %v3730, %v3727
    %v3734 = vadd.f32 %v3503, 1.0
    %v3735 = vlog2.pop %v3734
    %v3736 = vmul.f32 %v3735, 0.6931472
    %v3737 = vmul.f32 -0.5, %v3503
    %v3738 = vadd.f32 %v3737, 1.0
    %v3739 = vmul.f32 %v3738, %v3503
    %v3740 = vand.u32 2147483647, %v3503
    %vm3741 = vcmp.lt.f32.partialorder %v3740, 0.0004427343
    %v3742 = vsel %vm3741, %v3739, %v3736
    %v3743 = vadd.f32 %v3505, 1.0
    %v3744 = vlog2.pop %v3743
    %v3745 = vmul.f32 %v3744, 0.6931472
    %v3746 = vmul.f32 -0.5, %v3505
    %v3747 = vadd.f32 %v3746, 1.0
    %v3748 = vmul.f32 %v3747, %v3505
    %v3749 = vand.u32 2147483647, %v3505
    %vm3750 = vcmp.lt.f32.partialorder %v3749, 0.0004427343
    %v3751 = vsel %vm3750, %v3748, %v3745
    %v3752 = vadd.f32 %v3507, 1.0
    %v3753 = vlog2.pop %v3752
    %v3754 = vmul.f32 %v3753, 0.6931472
    %v3755 = vmul.f32 -0.5, %v3507
    %v3756 = vadd.f32 %v3755, 1.0
    %v3757 = vmul.f32 %v3756, %v3507
    %v3758 = vand.u32 2147483647, %v3507
    %vm3759 = vcmp.lt.f32.partialorder %v3758, 0.0004427343
    %v3760 = vsel %vm3759, %v3757, %v3754
    %v3761 = vadd.f32 %v3509, 1.0
    %v3762 = vlog2.pop %v3761
    %v3763 = vmul.f32 %v3762, 0.6931472
    %v3764 = vmul.f32 -0.5, %v3509
    %v3765 = vadd.f32 %v3764, 1.0
    %v3766 = vmul.f32 %v3765, %v3509
    %v3767 = vand.u32 2147483647, %v3509
    %vm3768 = vcmp.lt.f32.partialorder %v3767, 0.0004427343
    %v3769 = vsel %vm3768, %v3766, %v3763
    %v3770 = vadd.f32 %v3511, 1.0
    %v3771 = vlog2.pop %v3770
    %v3772 = vmul.f32 %v3771, 0.6931472
    %v3773 = vmul.f32 -0.5, %v3511
    %v3774 = vadd.f32 %v3773, 1.0
    %v3775 = vmul.f32 %v3774, %v3511
    %v3776 = vand.u32 2147483647, %v3511
    %vm3777 = vcmp.lt.f32.partialorder %v3776, 0.0004427343
    %v3778 = vsel %vm3777, %v3775, %v3772
    %v3779 = vadd.f32 %v3513, 1.0
    %v3780 = vlog2.pop %v3779
    %v3781 = vmul.f32 %v3780, 0.6931472
    %v3782 = vmul.f32 -0.5, %v3513
    %v3783 = vadd.f32 %v3782, 1.0
    %v3784 = vmul.f32 %v3783, %v3513
    %v3785 = vand.u32 2147483647, %v3513
    %vm3786 = vcmp.lt.f32.partialorder %v3785, 0.0004427343
    %v3787 = vsel %vm3786, %v3784, %v3781
    %v3788 = vadd.f32 %v3515, 1.0
    %v3789 = vlog2.pop %v3788
    %v3790 = vmul.f32 %v3789, 0.6931472
    %v3791 = vmul.f32 -0.5, %v3515
    %v3792 = vadd.f32 %v3791, 1.0
    %v3793 = vmul.f32 %v3792, %v3515
    %v3794 = vand.u32 2147483647, %v3515
    %vm3795 = vcmp.lt.f32.partialorder %v3794, 0.0004427343
    %v3796 = vsel %vm3795, %v3793, %v3790
    %v3797 = vadd.f32 %v3517, 1.0
    %v3798 = vlog2.pop %v3797
    %v3799 = vmul.f32 %v3798, 0.6931472
    %v3800 = vmul.f32 -0.5, %v3517
    %v3801 = vadd.f32 %v3800, 1.0
    %v3802 = vmul.f32 %v3801, %v3517
    %v3803 = vand.u32 2147483647, %v3517
    %vm3804 = vcmp.lt.f32.partialorder %v3803, 0.0004427343
    %v3805 = vsel %vm3804, %v3802, %v3799
    %v3806 = vmax.f32 %v3358, 0.0
    %v3807 = vmax.f32 %v3359, 0.0
    %v3808 = vmax.f32 %v3360, 0.0
    %v3809 = vmax.f32 %v3361, 0.0
    %v3810 = vmax.f32 %v3362, 0.0
    %v3811 = vmax.f32 %v3363, 0.0
    %v3812 = vmax.f32 %v3364, 0.0
    %v3813 = vmax.f32 %v3365, 0.0
    %v3814 = vmax.f32 %v3366, 0.0
    %v3815 = vmax.f32 %v3367, 0.0
    %v3816 = vmax.f32 %v3368, 0.0
    %v3817 = vmax.f32 %v3369, 0.0
    %v3818 = vmax.f32 %v3370, 0.0
    %v3819 = vmax.f32 %v3371, 0.0
    %v3820 = vmax.f32 %v3372, 0.0
    %v3821 = vmax.f32 %v3373, 0.0
    %v3822 = vmax.f32 %v3374, 0.0
    %v3823 = vmax.f32 %v3375, 0.0
    %v3824 = vmax.f32 %v3376, 0.0
    %v3825 = vmax.f32 %v3377, 0.0
    %v3826 = vmax.f32 %v3378, 0.0
    %v3827 = vmax.f32 %v3379, 0.0
    %v3828 = vmax.f32 %v3380, 0.0
    %v3829 = vmax.f32 %v3381, 0.0
    %v3830 = vmax.f32 %v3382, 0.0
    %v3831 = vmax.f32 %v3383, 0.0
    %v3832 = vmax.f32 %v3384, 0.0
    %v3833 = vmax.f32 %v3385, 0.0
    %v3834 = vmax.f32 %v3386, 0.0
    %v3835 = vmax.f32 %v3387, 0.0
    %v3836 = vmax.f32 %v3388, 0.0
    %v3837 = vmax.f32 %v3389, 0.0
    %v3838 = vadd.f32 %v3526, %v3806
    %v3839 = vadd.f32 %v3535, %v3807
    %v3840 = vadd.f32 %v3544, %v3808
    %v3841 = vadd.f32 %v3553, %v3809
    %v3842 = vadd.f32 %v3562, %v3810
    %v3843 = vadd.f32 %v3571, %v3811
    %v3844 = vadd.f32 %v3580, %v3812
    %v3845 = vadd.f32 %v3589, %v3813
    %v3846 = vadd.f32 %v3598, %v3814
    %v3847 = vadd.f32 %v3607, %v3815
    %v3848 = vadd.f32 %v3616, %v3816
    %v3849 = vadd.f32 %v3625, %v3817
    %v3850 = vadd.f32 %v3634, %v3818
    %v3851 = vadd.f32 %v3643, %v3819
    %v3852 = vadd.f32 %v3652, %v3820
    %v3853 = vadd.f32 %v3661, %v3821
    %v3854 = vadd.f32 %v3670, %v3822
    %v3855 = vadd.f32 %v3679, %v3823
    %v3856 = vadd.f32 %v3688, %v3824
    %v3857 = vadd.f32 %v3697, %v3825
    %v3858 = vadd.f32 %v3706, %v3826
    %v3859 = vadd.f32 %v3715, %v3827
    %v3860 = vadd.f32 %v3724, %v3828
    %v3861 = vadd.f32 %v3733, %v3829
    %v3862 = vadd.f32 %v3742, %v3830
    %v3863 = vadd.f32 %v3751, %v3831
    %v3864 = vadd.f32 %v3760, %v3832
    %v3865 = vadd.f32 %v3769, %v3833
    %v3866 = vadd.f32 %v3778, %v3834
    %v3867 = vadd.f32 %v3787, %v3835
    %v3868 = vadd.f32 %v3796, %v3836
    %v3869 = vadd.f32 %v3805, %v3837
    %v3870 = vlaneseq
    %v3871 = vand.u32 %v3870, 127
    %3872 = vset.pattern.permute.xlu0 0
    %3873 = vperm.xlu0 %3872, %v178
    %v3874 = vpop.permute.xlu0 %3873
    %3875 = vset.pattern.permute.xlu0 0
    %3876 = vperm.xlu0 %3875, %v179
    %v3877 = vpop.permute.xlu0 %3876
    %3878 = vset.pattern.permute.xlu0 0
    %3879 = vperm.xlu0 %3878, %v180
    %v3880 = vpop.permute.xlu0 %3879
    %3881 = vset.pattern.permute.xlu0 0
    %3882 = vperm.xlu0 %3881, %v181
    %v3883 = vpop.permute.xlu0 %3882
    %3884 = vset.pattern.permute.xlu0 0
    %3885 = vperm.xlu0 %3884, %v182
    %v3886 = vpop.permute.xlu0 %3885
    %3887 = vset.pattern.permute.xlu0 0
    %3888 = vperm.xlu0 %3887, %v183
    %v3889 = vpop.permute.xlu0 %3888
    %3890 = vset.pattern.permute.xlu0 0
    %3891 = vperm.xlu0 %3890, %v184
    %v3892 = vpop.permute.xlu0 %3891
    %3893 = vset.pattern.permute.xlu0 0
    %3894 = vperm.xlu0 %3893, %v185
    %v3895 = vpop.permute.xlu0 %3894
    %3896 = vset.pattern.permute.xlu0 0
    %3897 = vperm.xlu0 %3896, %v186
    %v3898 = vpop.permute.xlu0 %3897
    %3899 = vset.pattern.permute.xlu0 0
    %3900 = vperm.xlu0 %3899, %v187
    %v3901 = vpop.permute.xlu0 %3900
    %3902 = vset.pattern.permute.xlu0 0
    %3903 = vperm.xlu0 %3902, %v188
    %v3904 = vpop.permute.xlu0 %3903
    %3905 = vset.pattern.permute.xlu0 0
    %3906 = vperm.xlu0 %3905, %v189
    %v3907 = vpop.permute.xlu0 %3906
    %3908 = vset.pattern.permute.xlu0 0
    %3909 = vperm.xlu0 %3908, %v190
    %v3910 = vpop.permute.xlu0 %3909
    %3911 = vset.pattern.permute.xlu0 0
    %3912 = vperm.xlu0 %3911, %v191
    %v3913 = vpop.permute.xlu0 %3912
    %3914 = vset.pattern.permute.xlu0 0
    %3915 = vperm.xlu0 %3914, %v192
    %v3916 = vpop.permute.xlu0 %3915
    %3917 = vset.pattern.permute.xlu0 0
    %3918 = vperm.xlu0 %3917, %v193
    %v3919 = vpop.permute.xlu0 %3918
    %3920 = vset.pattern.permute.xlu0 0
    %3921 = vperm.xlu0 %3920, %v194
    %v3922 = vpop.permute.xlu0 %3921
    %3923 = vset.pattern.permute.xlu0 0
    %3924 = vperm.xlu0 %3923, %v195
    %v3925 = vpop.permute.xlu0 %3924
    %3926 = vset.pattern.permute.xlu0 0
    %3927 = vperm.xlu0 %3926, %v196
    %v3928 = vpop.permute.xlu0 %3927
    %3929 = vset.pattern.permute.xlu0 0
    %3930 = vperm.xlu0 %3929, %v197
    %v3931 = vpop.permute.xlu0 %3930
    %3932 = vset.pattern.permute.xlu0 0
    %3933 = vperm.xlu0 %3932, %v198
    %v3934 = vpop.permute.xlu0 %3933
    %3935 = vset.pattern.permute.xlu0 0
    %3936 = vperm.xlu0 %3935, %v199
    %v3937 = vpop.permute.xlu0 %3936
    %3938 = vset.pattern.permute.xlu0 0
    %3939 = vperm.xlu0 %3938, %v200
    %v3940 = vpop.permute.xlu0 %3939
    %3941 = vset.pattern.permute.xlu0 0
    %3942 = vperm.xlu0 %3941, %v201
    %v3943 = vpop.permute.xlu0 %3942
    %3944 = vset.pattern.permute.xlu0 0
    %3945 = vperm.xlu0 %3944, %v202
    %v3946 = vpop.permute.xlu0 %3945
    %3947 = vset.pattern.permute.xlu0 0
    %3948 = vperm.xlu0 %3947, %v203
    %v3949 = vpop.permute.xlu0 %3948
    %3950 = vset.pattern.permute.xlu0 0
    %3951 = vperm.xlu0 %3950, %v204
    %v3952 = vpop.permute.xlu0 %3951
    %3953 = vset.pattern.permute.xlu0 0
    %3954 = vperm.xlu0 %3953, %v205
    %v3955 = vpop.permute.xlu0 %3954
    %3956 = vset.pattern.permute.xlu0 0
    %3957 = vperm.xlu0 %3956, %v206
    %v3958 = vpop.permute.xlu0 %3957
    %3959 = vset.pattern.permute.xlu0 0
    %3960 = vperm.xlu0 %3959, %v207
    %v3961 = vpop.permute.xlu0 %3960
    %3962 = vset.pattern.permute.xlu0 0
    %3963 = vperm.xlu0 %3962, %v208
    %v3964 = vpop.permute.xlu0 %3963
    %3965 = vset.pattern.permute.xlu0 0
    %3966 = vperm.xlu0 %3965, %v209
    %v3967 = vpop.permute.xlu0 %3966
    %vm3968 = vcmp.eq.s32.totalorder %v3874, %v3871
    %vm3969 = vcmp.eq.s32.totalorder %v3877, %v3871
    %vm3970 = vcmp.eq.s32.totalorder %v3880, %v3871
    %vm3971 = vcmp.eq.s32.totalorder %v3883, %v3871
    %vm3972 = vcmp.eq.s32.totalorder %v3886, %v3871
    %vm3973 = vcmp.eq.s32.totalorder %v3889, %v3871
    %vm3974 = vcmp.eq.s32.totalorder %v3892, %v3871
    %vm3975 = vcmp.eq.s32.totalorder %v3895, %v3871
    %vm3976 = vcmp.eq.s32.totalorder %v3898, %v3871
    %vm3977 = vcmp.eq.s32.totalorder %v3901, %v3871
    %vm3978 = vcmp.eq.s32.totalorder %v3904, %v3871
    %vm3979 = vcmp.eq.s32.totalorder %v3907, %v3871
    %vm3980 = vcmp.eq.s32.totalorder %v3910, %v3871
    %vm3981 = vcmp.eq.s32.totalorder %v3913, %v3871
    %vm3982 = vcmp.eq.s32.totalorder %v3916, %v3871
    %vm3983 = vcmp.eq.s32.totalorder %v3919, %v3871
    %vm3984 = vcmp.eq.s32.totalorder %v3922, %v3871
    %vm3985 = vcmp.eq.s32.totalorder %v3925, %v3871
    %vm3986 = vcmp.eq.s32.totalorder %v3928, %v3871
    %vm3987 = vcmp.eq.s32.totalorder %v3931, %v3871
    %vm3988 = vcmp.eq.s32.totalorder %v3934, %v3871
    %vm3989 = vcmp.eq.s32.totalorder %v3937, %v3871
    %vm3990 = vcmp.eq.s32.totalorder %v3940, %v3871
    %vm3991 = vcmp.eq.s32.totalorder %v3943, %v3871
    %vm3992 = vcmp.eq.s32.totalorder %v3946, %v3871
    %vm3993 = vcmp.eq.s32.totalorder %v3949, %v3871
    %vm3994 = vcmp.eq.s32.totalorder %v3952, %v3871
    %vm3995 = vcmp.eq.s32.totalorder %v3955, %v3871
    %vm3996 = vcmp.eq.s32.totalorder %v3958, %v3871
    %vm3997 = vcmp.eq.s32.totalorder %v3961, %v3871
    %vm3998 = vcmp.eq.s32.totalorder %v3964, %v3871
    %vm3999 = vcmp.eq.s32.totalorder %v3967, %v3871
    %v4000 = vsel %vm3968, 1, 0
    %v4001 = vsel %vm3969, 1, 0
    %v4002 = vsel %vm3970, 1, 0
    %v4003 = vsel %vm3971, 1, 0
    %v4004 = vsel %vm3972, 1, 0
    %v4005 = vsel %vm3973, 1, 0
    %v4006 = vsel %vm3974, 1, 0
    %v4007 = vsel %vm3975, 1, 0
    %v4008 = vsel %vm3976, 1, 0
    %v4009 = vsel %vm3977, 1, 0
    %v4010 = vsel %vm3978, 1, 0
    %v4011 = vsel %vm3979, 1, 0
    %v4012 = vsel %vm3980, 1, 0
    %v4013 = vsel %vm3981, 1, 0
    %v4014 = vsel %vm3982, 1, 0
    %v4015 = vsel %vm3983, 1, 0
    %v4016 = vsel %vm3984, 1, 0
    %v4017 = vsel %vm3985, 1, 0
    %v4018 = vsel %vm3986, 1, 0
    %v4019 = vsel %vm3987, 1, 0
    %v4020 = vsel %vm3988, 1, 0
    %v4021 = vsel %vm3989, 1, 0
    %v4022 = vsel %vm3990, 1, 0
    %v4023 = vsel %vm3991, 1, 0
    %v4024 = vsel %vm3992, 1, 0
    %v4025 = vsel %vm3993, 1, 0
    %v4026 = vsel %vm3994, 1, 0
    %v4027 = vsel %vm3995, 1, 0
    %v4028 = vsel %vm3996, 1, 0
    %v4029 = vsel %vm3997, 1, 0
    %v4030 = vsel %vm3998, 1, 0
    %v4031 = vsel %vm3999, 1, 0
    %v4032 = vcvt.s32.f32 %v4000
    %v4033 = vcvt.s32.f32 %v4001
    %v4034 = vcvt.s32.f32 %v4002
    %v4035 = vcvt.s32.f32 %v4003
    %v4036 = vcvt.s32.f32 %v4004
    %v4037 = vcvt.s32.f32 %v4005
    %v4038 = vcvt.s32.f32 %v4006
    %v4039 = vcvt.s32.f32 %v4007
    %v4040 = vcvt.s32.f32 %v4008
    %v4041 = vcvt.s32.f32 %v4009
    %v4042 = vcvt.s32.f32 %v4010
    %v4043 = vcvt.s32.f32 %v4011
    %v4044 = vcvt.s32.f32 %v4012
    %v4045 = vcvt.s32.f32 %v4013
    %v4046 = vcvt.s32.f32 %v4014
    %v4047 = vcvt.s32.f32 %v4015
    %v4048 = vcvt.s32.f32 %v4016
    %v4049 = vcvt.s32.f32 %v4017
    %v4050 = vcvt.s32.f32 %v4018
    %v4051 = vcvt.s32.f32 %v4019
    %v4052 = vcvt.s32.f32 %v4020
    %v4053 = vcvt.s32.f32 %v4021
    %v4054 = vcvt.s32.f32 %v4022
    %v4055 = vcvt.s32.f32 %v4023
    %v4056 = vcvt.s32.f32 %v4024
    %v4057 = vcvt.s32.f32 %v4025
    %v4058 = vcvt.s32.f32 %v4026
    %v4059 = vcvt.s32.f32 %v4027
    %v4060 = vcvt.s32.f32 %v4028
    %v4061 = vcvt.s32.f32 %v4029
    %v4062 = vcvt.s32.f32 %v4030
    %v4063 = vcvt.s32.f32 %v4031
    %v4064 = vld [vmem:[#allocation2] sm:$0xff]
    %vm4065 = vcmask 64512
    %v4067 = vsel %vm4065, %v4032, 0
    %v4070 = vsel %vm4065, %v4033, 0
    %v4073 = vsel %vm4065, %v4034, 0
    %v4076 = vsel %vm4065, %v4035, 0
    %v4079 = vsel %vm4065, %v4036, 0
    %v4082 = vsel %vm4065, %v4037, 0
    %v4085 = vsel %vm4065, %v4038, 0
    %v4088 = vsel %vm4065, %v4039, 0
    %v4091 = vsel %vm4065, %v4040, 0
    %v4094 = vsel %vm4065, %v4041, 0
    %v4097 = vsel %vm4065, %v4042, 0
    %v4100 = vsel %vm4065, %v4043, 0
    %v4103 = vsel %vm4065, %v4044, 0
    %v4106 = vsel %vm4065, %v4045, 0
    %v4109 = vsel %vm4065, %v4046, 0
    %v4112 = vsel %vm4065, %v4047, 0
    %v4115 = vsel %vm4065, %v4048, 0
    %v4118 = vsel %vm4065, %v4049, 0
    %v4121 = vsel %vm4065, %v4050, 0
    %v4124 = vsel %vm4065, %v4051, 0
    %v4127 = vsel %vm4065, %v4052, 0
    %v4130 = vsel %vm4065, %v4053, 0
    %v4133 = vsel %vm4065, %v4054, 0
    %v4136 = vsel %vm4065, %v4055, 0
    %v4139 = vsel %vm4065, %v4056, 0
    %v4142 = vsel %vm4065, %v4057, 0
    %v4145 = vsel %vm4065, %v4058, 0
    %v4148 = vsel %vm4065, %v4059, 0
    %v4151 = vsel %vm4065, %v4060, 0
    %v4154 = vsel %vm4065, %v4061, 0
    %v4157 = vsel %vm4065, %v4062, 0
    %v4160 = vsel %vm4065, %v4063, 0
    %4162 = vmatpush.msra.mxu0 0.0
    %4163 = vmatpush.msra.mxu0 0.0
    %4164 = vmatpush.msra.mxu0 0.0
    %4165 = vmatpush.msra.mxu0 0.0
    %4166 = vmatpush.msra.mxu0 0.0
    %4167 = vmatpush.msra.mxu0 0.0
    %4168 = vmatpush.msra.mxu0 0.0
    %4169 = vmatpush.msra.mxu0 0.0
    %4170 = vmatpush.msra.mxu0 0.0
    %4171 = vmatpush.msra.mxu0 0.0
    %4172 = vmatpush.msra.mxu0 0.0
    %4173 = vmatpush.msra.mxu0 0.0
    %4174 = vmatpush.msra.mxu0 0.0
    %4175 = vmatpush.msra.mxu0 0.0
    %4176 = vmatpush.msra.mxu0 0.0
    %4177 = vmatpush.msra.mxu0 %v4064
    %4178 = vmatmul.f32.gmra.mxu0 %v4067
    %v4179 = vpop.f32.mrf.mxu0
    %v4180 = vadd.f32 0.0, %v4179
    %4181 = vmatmul.f32.gmra.mxu0 %v4070
    %v4182 = vpop.f32.mrf.mxu0
    %v4183 = vadd.f32 0.0, %v4182
    %4184 = vmatmul.f32.gmra.mxu0 %v4073
    %v4185 = vpop.f32.mrf.mxu0
    %v4186 = vadd.f32 0.0, %v4185
    %4187 = vmatmul.f32.gmra.mxu0 %v4076
    %v4188 = vpop.f32.mrf.mxu0
    %v4189 = vadd.f32 0.0, %v4188
    %4190 = vmatmul.f32.gmra.mxu0 %v4079
    %v4191 = vpop.f32.mrf.mxu0
    %v4192 = vadd.f32 0.0, %v4191
    %4193 = vmatmul.f32.gmra.mxu0 %v4082
    %v4194 = vpop.f32.mrf.mxu0
    %v4195 = vadd.f32 0.0, %v4194
    %4196 = vmatmul.f32.gmra.mxu0 %v4085
    %v4197 = vpop.f32.mrf.mxu0
    %v4198 = vadd.f32 0.0, %v4197
    %4199 = vmatmul.f32.gmra.mxu0 %v4088
    %v4200 = vpop.f32.mrf.mxu0
    %v4201 = vadd.f32 0.0, %v4200
    %4202 = vmatmul.f32.gmra.mxu0 %v4091
    %v4203 = vpop.f32.mrf.mxu0
    %v4204 = vadd.f32 0.0, %v4203
    %4205 = vmatmul.f32.gmra.mxu0 %v4094
    %v4206 = vpop.f32.mrf.mxu0
    %v4207 = vadd.f32 0.0, %v4206
    %4208 = vmatmul.f32.gmra.mxu0 %v4097
    %v4209 = vpop.f32.mrf.mxu0
    %v4210 = vadd.f32 0.0, %v4209
    %4211 = vmatmul.f32.gmra.mxu0 %v4100
    %v4212 = vpop.f32.mrf.mxu0
    %v4213 = vadd.f32 0.0, %v4212
    %4214 = vmatmul.f32.gmra.mxu0 %v4103
    %v4215 = vpop.f32.mrf.mxu0
    %v4216 = vadd.f32 0.0, %v4215
    %4217 = vmatmul.f32.gmra.mxu0 %v4106
    %v4218 = vpop.f32.mrf.mxu0
    %v4219 = vadd.f32 0.0, %v4218
    %4220 = vmatmul.f32.gmra.mxu0 %v4109
    %v4221 = vpop.f32.mrf.mxu0
    %v4222 = vadd.f32 0.0, %v4221
    %4223 = vmatmul.f32.gmra.mxu0 %v4112
    %v4224 = vpop.f32.mrf.mxu0
    %v4225 = vadd.f32 0.0, %v4224
    %4226 = vmatmul.f32.gmra.mxu0 %v4115
    %v4227 = vpop.f32.mrf.mxu0
    %v4228 = vadd.f32 0.0, %v4227
    %4229 = vmatmul.f32.gmra.mxu0 %v4118
    %v4230 = vpop.f32.mrf.mxu0
    %v4231 = vadd.f32 0.0, %v4230
    %4232 = vmatmul.f32.gmra.mxu0 %v4121
    %v4233 = vpop.f32.mrf.mxu0
    %v4234 = vadd.f32 0.0, %v4233
    %4235 = vmatmul.f32.gmra.mxu0 %v4124
    %v4236 = vpop.f32.mrf.mxu0
    %v4237 = vadd.f32 0.0, %v4236
    %4238 = vmatmul.f32.gmra.mxu0 %v4127
    %v4239 = vpop.f32.mrf.mxu0
    %v4240 = vadd.f32 0.0, %v4239
    %4241 = vmatmul.f32.gmra.mxu0 %v4130
    %v4242 = vpop.f32.mrf.mxu0
    %v4243 = vadd.f32 0.0, %v4242
    %4244 = vmatmul.f32.gmra.mxu0 %v4133
    %v4245 = vpop.f32.mrf.mxu0
    %v4246 = vadd.f32 0.0, %v4245
    %4247 = vmatmul.f32.gmra.mxu0 %v4136
    %v4248 = vpop.f32.mrf.mxu0
    %v4249 = vadd.f32 0.0, %v4248
    %4250 = vmatmul.f32.gmra.mxu0 %v4139
    %v4251 = vpop.f32.mrf.mxu0
    %v4252 = vadd.f32 0.0, %v4251
    %4253 = vmatmul.f32.gmra.mxu0 %v4142
    %v4254 = vpop.f32.mrf.mxu0
    %v4255 = vadd.f32 0.0, %v4254
    %4256 = vmatmul.f32.gmra.mxu0 %v4145
    %v4257 = vpop.f32.mrf.mxu0
    %v4258 = vadd.f32 0.0, %v4257
    %4259 = vmatmul.f32.gmra.mxu0 %v4148
    %v4260 = vpop.f32.mrf.mxu0
    %v4261 = vadd.f32 0.0, %v4260
    %4262 = vmatmul.f32.gmra.mxu0 %v4151
    %v4263 = vpop.f32.mrf.mxu0
    %v4264 = vadd.f32 0.0, %v4263
    %4265 = vmatmul.f32.gmra.mxu0 %v4154
    %v4266 = vpop.f32.mrf.mxu0
    %v4267 = vadd.f32 0.0, %v4266
    %4268 = vmatmul.f32.gmra.mxu0 %v4157
    %v4269 = vpop.f32.mrf.mxu0
    %v4270 = vadd.f32 0.0, %v4269
    %4271 = vmatmul.f32.gmra.mxu0 %v4160
    %v4272 = vpop.f32.mrf.mxu0
    %v4273 = vadd.f32 0.0, %v4272
    %4274 = vdwg.mxu0
    %v4275 = vmul.f32 %v4180, %v3838
    %v4276 = vmul.f32 %v4183, %v3839
    %v4277 = vmul.f32 %v4186, %v3840
    %v4278 = vmul.f32 %v4189, %v3841
    %v4279 = vmul.f32 %v4192, %v3842
    %v4280 = vmul.f32 %v4195, %v3843
    %v4281 = vmul.f32 %v4198, %v3844
    %v4282 = vmul.f32 %v4201, %v3845
    %v4283 = vmul.f32 %v4204, %v3846
    %v4284 = vmul.f32 %v4207, %v3847
    %v4285 = vmul.f32 %v4210, %v3848
    %v4286 = vmul.f32 %v4213, %v3849
    %v4287 = vmul.f32 %v4216, %v3850
    %v4288 = vmul.f32 %v4219, %v3851
    %v4289 = vmul.f32 %v4222, %v3852
    %v4290 = vmul.f32 %v4225, %v3853
    %v4291 = vmul.f32 %v4228, %v3854
    %v4292 = vmul.f32 %v4231, %v3855
    %v4293 = vmul.f32 %v4234, %v3856
    %v4294 = vmul.f32 %v4237, %v3857
    %v4295 = vmul.f32 %v4240, %v3858
    %v4296 = vmul.f32 %v4243, %v3859
    %v4297 = vmul.f32 %v4246, %v3860
    %v4298 = vmul.f32 %v4249, %v3861
    %v4299 = vmul.f32 %v4252, %v3862
    %v4300 = vmul.f32 %v4255, %v3863
    %v4301 = vmul.f32 %v4258, %v3864
    %v4302 = vmul.f32 %v4261, %v3865
    %v4303 = vmul.f32 %v4264, %v3866
    %v4304 = vmul.f32 %v4267, %v3867
    %v4305 = vmul.f32 %v4270, %v3868
    %v4306 = vmul.f32 %v4273, %v3869
    %v4307 = vlaneseq
    %v4308 = vshrl.u32 %v4307, 7
    %v4309 = vperm.slane %v213, 0
    %v4310 = vperm.slane %v213, 1
    %vm4311 = vcmp.eq.s32.totalorder %v4309, %v4308
    %vm4312 = vcmp.eq.s32.totalorder %v4310, %v4308
    %v4313 = vsel %vm4311, 1, 0
    %v4314 = vsel %vm4312, 1, 0
    %v4315 = vcvt.s32.f32 %v4313
    %v4316 = vcvt.s32.f32 %v4314
    %v4317 = vld [vmem:[#allocation11] sm:$0xff]
    %4318 = vmatpush.msra.mxu0 %v4290
    %4319 = vmatpush.msra.mxu0 %v4289
    %4320 = vmatpush.msra.mxu0 %v4288
    %4321 = vmatpush.msra.mxu0 %v4287
    %4322 = vmatpush.msra.mxu0 %v4286
    %4323 = vmatpush.msra.mxu0 %v4285
    %4324 = vmatpush.msra.mxu0 %v4284
    %4325 = vmatpush.msra.mxu0 %v4283
    %4326 = vmatpush.msra.mxu0 %v4282
    %4327 = vmatpush.msra.mxu0 %v4281
    %4328 = vmatpush.msra.mxu0 %v4280
    %4329 = vmatpush.msra.mxu0 %v4279
    %4330 = vmatpush.msra.mxu0 %v4278
    %4331 = vmatpush.msra.mxu0 %v4277
    %4332 = vmatpush.msra.mxu0 %v4276
    %4333 = vmatpush.msra.mxu0 %v4275
    %4334 = vmatmul.f32.gmra.mxu0 %v4315
    %v4335 = vpop.f32.mrf.mxu0
    %v4336 = vadd.f32 0.0, %v4335
    %4337 = vdwg.mxu0
    %4338 = vmatpush.msra.mxu0 %v4306
    %4339 = vmatpush.msra.mxu0 %v4305
    %4340 = vmatpush.msra.mxu0 %v4304
    %4341 = vmatpush.msra.mxu0 %v4303
    %4342 = vmatpush.msra.mxu0 %v4302
    %4343 = vmatpush.msra.mxu0 %v4301
    %4344 = vmatpush.msra.mxu0 %v4300
    %4345 = vmatpush.msra.mxu0 %v4299
    %4346 = vmatpush.msra.mxu0 %v4298
    %4347 = vmatpush.msra.mxu0 %v4297
    %4348 = vmatpush.msra.mxu0 %v4296
    %4349 = vmatpush.msra.mxu0 %v4295
    %4350 = vmatpush.msra.mxu0 %v4294
    %4351 = vmatpush.msra.mxu0 %v4293
    %4352 = vmatpush.msra.mxu0 %v4292
    %4353 = vmatpush.msra.mxu0 %v4291
    %4354 = vmatmul.f32.gmra.mxu0 %v4316
    %v4355 = vpop.f32.mrf.mxu0
    %v4356 = vadd.f32 %v4336, %v4355
    %4357 = vdwg.mxu0
    %v4358 = vadd.f32 %v4317, %v4356
    %4359 = vst [vmem:[#allocation11] sm:$0xff] %v4358
    // Predicated region
    $region66: #{tpu_custom_call.1} parent=1 // pred_check
      %p4360 = pneg %p100
    $region67: #{tpu_custom_call.1} parent=1 // pred_check_branch
      %4362 = sbr.rel (%p4360) target = $region69
    $region68: #{tpu_custom_call.1} parent=1 // pred_region
      %v4363 = vld [vmem:[#allocation11] sm:$0xff]
      %v4364 = vld [vmem:[%s8] sm:$0xff]
      %v4365 = vld [vmem:[%s8 + $0x8] sm:$0xff]
      %v4366 = vld [vmem:[%s8 + $0x10] sm:$0xff]
      %v4367 = vld [vmem:[%s8 + $0x18] sm:$0xff]
      %v4368 = vld [vmem:[%s8 + $0x20] sm:$0xff]
      %v4369 = vld [vmem:[%s8 + $0x28] sm:$0xff]
      %v4370 = vld [vmem:[%s8 + $0x30] sm:$0xff]
      %v4371 = vld [vmem:[%s8 + $0x38] sm:$0xff]
      %v4372 = vld [vmem:[%s8 + $0x40] sm:$0xff]
      %v4373 = vld [vmem:[%s8 + $0x48] sm:$0xff]
      %v4374 = vld [vmem:[%s8 + $0x50] sm:$0xff]
      %v4375 = vld [vmem:[%s8 + $0x58] sm:$0xff]
      %v4376 = vld [vmem:[%s8 + $0x60] sm:$0xff]
      %v4377 = vld [vmem:[%s8 + $0x68] sm:$0xff]
      %v4378 = vld [vmem:[%s8 + $0x70] sm:$0xff]
      %v4379 = vld [vmem:[%s8 + $0x78] sm:$0xff]
      %4380 = vmatpush.msra.mxu0 %v4379
      %4381 = vmatpush.msra.mxu0 %v4378
      %4382 = vmatpush.msra.mxu0 %v4377
      %4383 = vmatpush.msra.mxu0 %v4376
      %4384 = vmatpush.msra.mxu0 %v4375
      %4385 = vmatpush.msra.mxu0 %v4374
      %4386 = vmatpush.msra.mxu0 %v4373
      %4387 = vmatpush.msra.mxu0 %v4372
      %4388 = vmatpush.msra.mxu0 %v4371
      %4389 = vmatpush.msra.mxu0 %v4370
      %4390 = vmatpush.msra.mxu0 %v4369
      %4391 = vmatpush.msra.mxu0 %v4368
      %4392 = vmatpush.msra.mxu0 %v4367
      %4393 = vmatpush.msra.mxu0 %v4366
      %4394 = vmatpush.msra.mxu0 %v4365
      %4395 = vmatpush.msra.mxu0 %v4364
      %4396 = vmatmul.f32.gmra.mxu0 %v4363
      %v4397 = vpop.f32.mrf.mxu0
      %v4398 = vadd.f32 0.0, %v4397
      %4399 = vdwg.mxu0
      %v4400 = vmul.f32 %v4398, %v4398
      %4401 = vadd.xlane.f32.xlu0 %v4400
      %v4402 = vpop.xlane.xlu0 %4401
      %v4403 = vrsqrt.pop %v4402
      %v4404 = vmul.f32 %v4403, %v4402
      %v4405 = vmul.f32 %v4404, %v4403
      %v4406 = vmul.f32 0.5, %v4405
      %v4407 = vsub.f32 1.5, %v4406
      %v4408 = vmul.f32 %v4403, %v4407
      %v4409 = vmul.f32 %v4402, %v4408
      %vm4410 = vcmp.eq.f32.partialorder %v4402, inf
      %v4411 = vsel %vm4410, %v4402, %v4409
      %vm4412 = vcmp.eq.f32.partialorder %v4402, 0.0
      %v4413 = vand.u32 %v4402, 2147483648
      %v4414 = vsel %vm4412, %v4413, %v4411
      %v4415 = vmul.f32 %v4414, 0.17677669
      %v4416 = vadd.f32 %v4415, 1e-08
      %v4417 = vrcp.pop %v4416
      %v4418 = vmul.f32 %v4416, %v4417
      %v4419 = vsub.f32 1.0, %v4418
      %v4420 = vmul.f32 %v4417, %v4419
      %v4421 = vadd.f32 %v4417, %v4420
      %vm4422 = vweird.f32 %v4416
      %vm4423 = vweird.f32 %v4417
      %vm4424 = vmor %vm4422, %vm4423
      %v4425 = vsel %vm4424, %v4417, %v4421
      %v4426 = vand.u32 2147483647, %v4416
      %vm4427 = vcmp.eq.f32.partialorder %v4426, 8.507059e+37
      %v4428 = vand.u32 %v4416, 2147483648
      %v4429 = vor.u32 1.1754944e-38, %v4428
      %v4430 = vsel %vm4427, %v4429, %v4425
      %v4431 = vmul.f32 %v4398, %v4430
      %v4432 = vperm.slane %v98, 0
      %v4433 = vmul.f32 %v4432, %v4431
      %v4434 = vand.u32 2147483647, %v4433
      %v4435 = vsub.f32 0.0, %v4434
      %v4436 = vmul.f32 %v4435, 1.442695
      %v4437 = vpow.pop %v4436
      %v4438 = vadd.f32 %v4437, 1.0
      %v4439 = vlog2.pop %v4438
      %v4440 = vmul.f32 %v4439, 0.6931472
      %v4441 = vmul.f32 -0.5, %v4437
      %v4442 = vadd.f32 %v4441, 1.0
      %v4443 = vmul.f32 %v4442, %v4437
      %v4444 = vand.u32 2147483647, %v4437
      %vm4445 = vcmp.lt.f32.partialorder %v4444, 0.0004427343
      %v4446 = vsel %vm4445, %v4443, %v4440
      %v4447 = vmax.f32 %v4433, 0.0
      %v4448 = vadd.f32 %v4446, %v4447
      %v4449 = vld [vmem:[#allocation8] sm:$0xff]
      %v4450 = vld [vmem:[#allocation8 + $0x8] sm:$0xff]
      %v4451 = vld [vmem:[#allocation8 + $0x10] sm:$0xff]
      %v4452 = vld [vmem:[#allocation8 + $0x18] sm:$0xff]
      %v4453 = vld [vmem:[#allocation8 + $0x20] sm:$0xff]
      %v4454 = vld [vmem:[#allocation8 + $0x28] sm:$0xff]
      %v4455 = vld [vmem:[#allocation8 + $0x30] sm:$0xff]
      %v4456 = vld [vmem:[#allocation8 + $0x38] sm:$0xff]
      %v4457 = vld [vmem:[#allocation8 + $0x40] sm:$0xff]
      %v4458 = vld [vmem:[#allocation8 + $0x48] sm:$0xff]
      %v4459 = vld [vmem:[#allocation8 + $0x50] sm:$0xff]
      %v4460 = vld [vmem:[#allocation8 + $0x58] sm:$0xff]
      %v4461 = vld [vmem:[#allocation8 + $0x60] sm:$0xff]
      %v4462 = vld [vmem:[#allocation8 + $0x68] sm:$0xff]
      %v4463 = vld [vmem:[#allocation8 + $0x70] sm:$0xff]
      %v4464 = vld [vmem:[#allocation8 + $0x78] sm:$0xff]
      %v4465 = vperm.slane %v99, 0
      %4466 = vmatpush.msra.mxu0 %v4464
      %4467 = vmatpush.msra.mxu0 %v4463
      %4468 = vmatpush.msra.mxu0 %v4462
      %4469 = vmatpush.msra.mxu0 %v4461
      %4470 = vmatpush.msra.mxu0 %v4460
      %4471 = vmatpush.msra.mxu0 %v4459
      %4472 = vmatpush.msra.mxu0 %v4458
      %4473 = vmatpush.msra.mxu0 %v4457
      %4474 = vmatpush.msra.mxu0 %v4456
      %4475 = vmatpush.msra.mxu0 %v4455
      %4476 = vmatpush.msra.mxu0 %v4454
      %4477 = vmatpush.msra.mxu0 %v4453
      %4478 = vmatpush.msra.mxu0 %v4452
      %4479 = vmatpush.msra.mxu0 %v4451
      %4480 = vmatpush.msra.mxu0 %v4450
      %4481 = vmatpush.msra.mxu0 %v4449
      %4482 = vmatmul.f32.gmra.mxu0 %v4448
      %v4483 = vpop.f32.mrf.mxu0
      %v4484 = vadd.f32 %v4465, %v4483
      %4485 = vdwg.mxu0
      %v4486 = vld [vmem:[#allocation9] sm:$0xff]
      %v4487 = vadd.f32 %v4486, %v4484
      %4488 = vst [vmem:[#allocation11] sm:$0xff] %v4487
    $region69: #{tpu_custom_call.1} parent=1 // pred_fallthru
      _
    // Predicated region
    $region70: #{tpu_custom_call.1} parent=1 // pred_check
      _
    $region71: #{tpu_custom_call.1} parent=1 // pred_check_branch
      %4490 = sbr.rel (0) target = $region73
    $region72: #{tpu_custom_call.1} parent=1 // pred_region
      %4492 = vsyncadd [#allocation5], 0
      %s4494 = sshll.u32 [#allocation11], 4
      %s4495 = int_to_ptr.vmem [resolvable:$true] %s4494
      %s4496 = sshll.u32 %s11, 4
      %s4497 = int_to_ptr.hbm [resolvable:$true] %s4496
      %4499 = dma.vmem_to_hbm [thread:$0]  %s4495, 128, %s4497, [#allocation5]
    $region73: #{tpu_custom_call.1} parent=1 // pred_fallthru
      _
    // Predicated region
    $region74: #{tpu_custom_call.1} parent=1 // pred_check
      _
    $region75: #{tpu_custom_call.1} parent=1 // pred_check_branch
      %4501 = sbr.rel (0) target = $region77
    $region76: #{tpu_custom_call.1} parent=1 // pred_region
      %4503 = dma.done [#allocation5], 128
    $region77: #{tpu_custom_call.1} parent=1 // pred_fallthru
      _
    %4504 = vsyncpa [#allocation4], 1
    %4505 = vsyncpa [#allocation7], 1
    %4506 = vsyncpa [#allocation10], 1
    %4507 = vsyncpa [#allocation5], 1

</llo_original>
